<compile_context>
chip_gen: v5e
topology: v5e:2x2
jax: 0.10.0
libtpu: 0.0.40
codegen_flags: <defaults>
</compile_context>

<pallas_src>
import functools

import numpy as np

import jax
import jax.numpy as jnp
from jax.experimental import pallas as pl
from jax.experimental.pallas import tpu as pltpu


# ----------------------------------------------------------------------------
# Helpers
# ----------------------------------------------------------------------------
def _rup(x, m):
    return ((x + m - 1) // m) * m


def _pad_gate_cols(W, D, Dp):
    """Pad each of the 4 LSTM gate blocks (i, f, g, o) from D to Dp columns."""
    if Dp == D:
        return W
    lead = W.shape[0]
    Wg = W.reshape(lead, 4, D)
    Wg = jnp.pad(Wg, ((0, 0), (0, 0), (0, Dp - D)))
    return Wg.reshape(lead, 4 * Dp)


def _vmem_capacity_bytes():
    try:
        cap = getattr(pltpu.get_tpu_info(), "vmem_capacity_bytes", None)
        if cap:
            return int(cap)
    except Exception:  # noqa: BLE001 - query is best-effort
        pass
    return 64 * 1024 * 1024   # conservative (v7x per-TensorCore)


def _plan_vmem(prep):
    """Pick vmem_limit_bytes and enc/att1 buffer depth for this chip."""
    cap = _vmem_capacity_bytes()
    limit = min(int(cap * 0.85), 112 * 1024 * 1024)
    TB, P = prep["batch_tile"], prep["P"]
    Ap, Ep, Dp = prep["Ap"], prep["Ep"], prep["Dp"]
    G = Ap + Ep + 4 * Dp
    enc_tile = TB * P * Ep * 2 + TB * P * Ap * 2                 # enc + att1 (bf16)
    weights = (Dp * G + Ep * 4 * Dp) * 2 + G * 4 + Ap * 4
    streams = 2 * TB * 4 * Dp * 2 + 2 * TB * Dp * 2              # gates_pre + h_out (x2 bufs)
    scratch = TB * Dp * 6
    temps = TB * P * Ap * 6 + TB * 4 * Dp * 4 + TB * G * 4       # att/gates/hproj temporaries
    need_double = 2 * enc_tile + weights + streams + scratch + temps
    enc_buffers = 2 if need_double <= int(limit * 0.85) else 1
    return limit, enc_buffers


# ----------------------------------------------------------------------------
# Sequential Pallas kernel: one grid step = one (batch_tile, t) pair.
# ----------------------------------------------------------------------------
def decoder_step_kernel(enc_ref, att1_ref, h0_ref, c0_ref, gpre_ref,
                        W_hcat_ref, b_hcat_ref, w_fa_ref, W_ih_awe_ref,
                        h_out_ref,
                        h_s, c_s, *, A, E, D, use_mxu_scores):
    t = pl.program_id(1)

    @pl.when(t == 0)
    def _init():
        h_s[...] = h0_ref[...]          # bf16 carry
        c_s[...] = c0_ref[...]          # f32 carry

    h_bf = h_s[...]                     # (TB, D) bf16
    c = c_s[...]                        # (TB, D) f32
    enc = enc_ref[...]                  # (TB, P, E) bf16
    TB, P, _ = enc.shape

    # ---- single fused MXU launch for every h-dependent projection ----
    # [W_da | W_fb | W_hh] -> att2 | f_beta pre | hh gate pre
    hproj = (jnp.dot(h_bf, W_hcat_ref[...], preferred_element_type=jnp.float32)
             + b_hcat_ref[...])                                        # (TB, A+E+4D)
    att2 = hproj[:, :A]
    gate_pre = hproj[:, A:A + E]
    hh_pre = hproj[:, A + E:]

    # ---- attention scores (full_att bias is softmax-invariant -> dropped) ----
    if use_mxu_scores:
        att = jnp.maximum(att1_ref[...] + att2.astype(jnp.bfloat16)[:, None, :],
                          0)                                           # (TB,P,A) bf16
        scores = jnp.dot(att.reshape(TB * P, A), w_fa_ref[...],
                         preferred_element_type=jnp.float32).reshape(TB, P)
    else:
        att = jnp.maximum(att1_ref[...].astype(jnp.float32)
                          + att2[:, None, :], 0.0)
        scores = jnp.sum(att * w_fa_ref[...][None, :, :], axis=-1)     # (TB, P)

    scores = scores - jnp.max(scores, axis=-1, keepdims=True)
    e = jnp.exp(scores)
    alpha = e * pl.reciprocal(jnp.sum(e, axis=-1, keepdims=True), approx=True)

    # contraction over P on the MXU (batched matmul with M=1)
    awe = jnp.einsum("bqp,bpe->bqe",
                     alpha[:, None, :].astype(jnp.bfloat16), enc,
                     preferred_element_type=jnp.float32)[:, 0, :]      # (TB, E)

    # ---- f_beta gate ----
    gate = jax.nn.sigmoid(gate_pre)
    awe = gate * awe

    # ---- LSTM cell (emb @ W_ih_emb + b_ih + b_hh precomputed -> gates_pre) ----
    gates = (gpre_ref[0].astype(jnp.float32)
             + jnp.dot(awe.astype(jnp.bfloat16), W_ih_awe_ref[...],
                       preferred_element_type=jnp.float32)
             + hh_pre)                                                 # (TB, 4D)
    i_g = jax.nn.sigmoid(gates[:, 0 * D:1 * D])
    f_g = jax.nn.sigmoid(gates[:, 1 * D:2 * D])
    g_g = jnp.tanh(gates[:, 2 * D:3 * D])
    o_g = jax.nn.sigmoid(gates[:, 3 * D:4 * D])
    c_new = f_g * c + i_g * g_g
    h_new = o_g * jnp.tanh(c_new)
    h_new_bf = h_new.astype(jnp.bfloat16)

    c_s[...] = c_new
    h_s[...] = h_new_bf
    h_out_ref[0] = h_new_bf                                            # (TB, D) bf16


def run_decoder_kernel(prep, *, fast, vmem_limit, enc_buffers):
    """Runs the sequential recurrence; returns h_all of shape (T, Bp, Dp) bf16."""
    Bp, P, Ep = prep["enc_bf"].shape
    Ap, Dp, T, TB = prep["Ap"], prep["Dp"], prep["T"], prep["batch_tile"]
    nb = Bp // TB
    if nb == 1:
        enc_buffers = 1          # nothing to overlap across batch tiles
    kw = prep["kw"]
    w_fa = kw["w_fa_col"] if fast else kw["w_fa_row"]
    weights = [kw["W_hcat"], kw["b_hcat"], w_fa, kw["W_ih_awe"]]

    # Single-buffer small t-invariant operands; enc/att1 get the planned depth.
    inv = dict(pipeline_mode=pl.Buffered(1)) if fast else {}
    big = dict(pipeline_mode=pl.Buffered(enc_buffers)) if fast else {}

    in_specs = [
        pl.BlockSpec((TB, P, Ep), lambda b, t: (b, 0, 0), **big),   # enc (bf16)
        pl.BlockSpec((TB, P, Ap), lambda b, t: (b, 0, 0), **big),   # att1 (bf16)
        pl.BlockSpec((TB, Dp), lambda b, t: (b, 0), **inv),         # h0 (bf16)
        pl.BlockSpec((TB, Dp), lambda b, t: (b, 0), **inv),         # c0 (f32)
        pl.BlockSpec((1, TB, 4 * Dp), lambda b, t: (t, b, 0)),      # gates_pre[t] (bf16)
    ] + [pl.BlockSpec(w.shape, lambda b, t: (0, 0), **inv) for w in weights]

    grid_spec = pltpu.PrefetchScalarGridSpec(
        num_scalar_prefetch=0,
        grid=(nb, T),
        in_specs=in_specs,
        out_specs=pl.BlockSpec((1, TB, Dp), lambda b, t: (t, b, 0)),
        scratch_shapes=[pltpu.VMEM((TB, Dp), jnp.bfloat16),   # h carry
                        pltpu.VMEM((TB, Dp), jnp.float32)],   # c carry
    )

    return pl.pallas_call(
        functools.partial(decoder_step_kernel, A=Ap, E=Ep, D=Dp,
                          use_mxu_scores=fast),
        out_shape=jax.ShapeDtypeStruct((T, Bp, Dp), jnp.bfloat16),
        grid_spec=grid_spec,
        compiler_params=pltpu.CompilerParams(
            # For production batch sizes keep Bp/TB >= 2 so v7x's dual
            # TensorCores both get work on the "parallel" batch axis.
            dimension_semantics=("parallel", "arbitrary"),
            vmem_limit_bytes=vmem_limit),
    )(prep["enc_bf"], prep["att1_bf"], prep["h0"], prep["c0"],
      prep["gates_pre"], *weights)


# ----------------------------------------------------------------------------
# Glue (sort / pad / hoisted big matmuls) in plain JAX.
# ----------------------------------------------------------------------------
def _prepare(params, encoder_out, encoded_captions, caption_lengths,
             batch_tile):
    assert batch_tile % 8 == 0, "batch_tile must be a multiple of 8 sublanes"
    f32, bf16 = jnp.float32, jnp.bfloat16

    B = encoder_out.shape[0]
    E = encoder_out.shape[-1]
    enc = encoder_out.reshape(B, -1, E).astype(f32)                 # (B, P, E)
    P = enc.shape[1]
    D = params["W_init_h"].shape[1]
    A = params["W_ea"].shape[1]
    Ap, Ep, Dp = _rup(A, 128), _rup(E, 128), _rup(D, 128)

    cap_len = caption_lengths[:, 0].astype(jnp.int32)
    # Static grid extent (host sync, mirrors the PyTorch .tolist()/max()).
    T = int(np.max(np.asarray(cap_len))) - 1

    sort_ind = jnp.argsort(-cap_len)                                # descending
    cap_len_sorted = cap_len[sort_ind]
    enc_sorted = enc[sort_ind]
    caps_sorted = encoded_captions[sort_ind]
    decode_lengths = cap_len_sorted - 1

    # Pad batch to the batch tile and features/attention/decoder dims to 128.
    Bp = _rup(B, batch_tile)
    pad_b = Bp - B
    enc_p = jnp.pad(enc_sorted, ((0, pad_b), (0, 0), (0, Ep - E)))  # (Bp,P,Ep)
    caps_p = jnp.pad(caps_sorted, ((0, pad_b), (0, 0)))
    dlen_p = jnp.pad(decode_lengths, (0, pad_b))

    # ---- zero-padded weights (padded lanes stay exactly zero end-to-end) ----
    W_ea = jnp.pad(params["W_ea"], ((0, Ep - E), (0, Ap - A)))
    b_ea = jnp.pad(params["b_ea"], ((0, 0), (0, Ap - A)))
    W_da = jnp.pad(params["W_da"], ((0, Dp - D), (0, Ap - A)))
    b_da = jnp.pad(params["b_da"], ((0, 0), (0, Ap - A)))
    w_fa = jnp.pad(params["w_fa"], ((0, Ap - A), (0, 0)))           # (Ap, 1)
    W_fb = jnp.pad(params["W_fb"], ((0, Dp - D), (0, Ep - E)))
    b_fb = jnp.pad(params["b_fb"], ((0, 0), (0, Ep - E)))
    W_hh = jnp.pad(_pad_gate_cols(params["W_hh"], D, Dp),
                   ((0, Dp - D), (0, 0)))                           # (Dp, 4Dp)
    W_ih_awe = jnp.pad(_pad_gate_cols(params["W_ih_awe"], D, Dp),
                       ((0, Ep - E), (0, 0)))                       # (Ep, 4Dp)
    W_ih_emb = _pad_gate_cols(params["W_ih_emb"], D, Dp)            # (M, 4Dp)
    b_gates = _pad_gate_cols(params["b_ih"] + params["b_hh"], D, Dp)

    # fused h-projection weight [W_da | W_fb | W_hh] and its bias
    W_hcat = jnp.concatenate([W_da, W_fb, W_hh], axis=1).astype(bf16)
    b_hcat = jnp.concatenate([b_da, b_fb, jnp.zeros((1, 4 * Dp), f32)], axis=1)

    # ---- hoisted big matmuls (bf16 MXU, f32 accumulation, run once in XLA) ----
    emb = params["embedding"][caps_p[:, :T]]                        # (Bp, T, M)
    gates_pre = (jnp.einsum("btm,mg->btg", emb.astype(bf16),
                            W_ih_emb.astype(bf16),
                            preferred_element_type=f32) + b_gates)
    gates_pre = jnp.transpose(gates_pre, (1, 0, 2)).astype(bf16)    # (T,Bp,4Dp)

    att1 = (jnp.einsum("bpe,ea->bpa", enc_p.astype(bf16), W_ea.astype(bf16),
                       preferred_element_type=f32) + b_ea)          # (Bp,P,Ap)

    mean_enc = enc_p[:, :, :E].mean(axis=1)                         # (Bp, E)
    h0 = mean_enc @ params["W_init_h"] + params["b_init_h"]
    c0 = mean_enc @ params["W_init_c"] + params["b_init_c"]
    h0 = jnp.pad(h0, ((0, 0), (0, Dp - D))).astype(bf16)
    c0 = jnp.pad(c0, ((0, 0), (0, Dp - D)))

    kw = dict(
        W_hcat=W_hcat, b_hcat=b_hcat,
        # full_att bias is a scalar added to every score -> softmax-invariant.
        w_fa_col=w_fa.astype(bf16),                                 # (Ap, 1)
        w_fa_row=w_fa.T.astype(f32),                                # (1, Ap)
        W_ih_awe=W_ih_awe.astype(bf16),
    )
    return dict(B=B, Bp=Bp, P=P, E=E, A=A, D=D, Ap=Ap, Ep=Ep, Dp=Dp, T=T,
                batch_tile=batch_tile, sort_ind=sort_ind,
                caps_sorted=caps_sorted, decode_lengths=decode_lengths,
                dlen_p=dlen_p, enc_bf=enc_p.astype(bf16),
                att1_bf=att1.astype(bf16), h0=h0, c0=c0,
                gates_pre=gates_pre, kw=kw,
                W_fc_bf=jnp.pad(params["W_fc"],
                                ((0, Dp - D), (0, 0))).astype(bf16))


def _finish(prep, params, h_all):
    """Hoisted output fc (one bf16 (T*Bp, Dp)@(Dp, V) matmul) + length masking."""
    T, Bp, Dp = h_all.shape
    V = params["W_fc"].shape[1]
    # TODO(synk): nn.Dropout(p=0.5) on h before fc is stochastic in training
    # mode; implemented as identity (eval-mode semantics).
    preds = (jnp.dot(h_all.reshape(T * Bp, Dp), prep["W_fc_bf"],
                     preferred_element_type=jnp.float32)
             + params["b_fc"]).reshape(T, Bp, V)
    active = prep["dlen_p"][None, :, None] > jnp.arange(T)[:, None, None]
    preds = jnp.where(active, preds, 0.0)                 # batch_size_t mask
    return jnp.transpose(preds, (1, 0, 2))[:prep["B"]]    # (B, T, V)


def decoder_with_attention_forward(params, encoder_out, encoded_captions,
                                   caption_lengths, *, batch_tile=32):
    """Mirrors DecoderWithAttention.forward (eval-mode dropout)."""
    prep = _prepare(params, encoder_out, encoded_captions, caption_lengths,
                    batch_tile)
    vmem_limit, enc_buffers = _plan_vmem(prep)

    h_all, last_err = None, None
    # Fast path: MXU scores + explicit buffering.  Fallback: default buffering
    # + f32 VPU weighted-sum scores (still hoisted / tiled / bf16 streams).
    for fast in (True, False):
        try:
            h_all = run_decoder_kernel(prep, fast=fast, vmem_limit=vmem_limit,
                                       enc_buffers=enc_buffers)
            jax.block_until_ready(h_all)
            break
        except Exception as e:  # noqa: BLE001 - conservative retry path
            last_err = e
            h_all = None
    if h_all is None:
        raise last_err

    predictions = _finish(prep, params, h_all)
    # The reference PyTorch forward allocates `alphas` but never writes it,
    # so it is returned all-zero; we mirror that exactly.
    alphas = jnp.zeros((prep["B"], prep["T"], prep["P"]), jnp.float32)
    decode_lengths_list = [int(x) for x in np.asarray(prep["decode_lengths"])]
    return (predictions, prep["caps_sorted"], decode_lengths_list, alphas,
            prep["sort_ind"])


# ----------------------------------------------------------------------------
# Pure-JAX reference of the same (mixed-precision) recurrence, for checking.
# ----------------------------------------------------------------------------
def reference_h_all(prep):
    f32, bf16 = jnp.float32, jnp.bfloat16
    kw = prep["kw"]
    Ap, Ep, Dp, T = prep["Ap"], prep["Ep"], prep["Dp"], prep["T"]
    enc, att1 = prep["enc_bf"], prep["att1_bf"]
    gates_pre = prep["gates_pre"]
    W_hcat, b_hcat = kw["W_hcat"], kw["b_hcat"]
    w_fa = kw["w_fa_col"].astype(f32)
    W_ih_awe = kw["W_ih_awe"]
    h, c = prep["h0"], prep["c0"]
    hs = []
    for t in range(T):
        hproj = jnp.dot(h, W_hcat, preferred_element_type=f32) + b_hcat
        att2 = hproj[:, :Ap]
        gate_pre = hproj[:, Ap:Ap + Ep]
        hh_pre = hproj[:, Ap + Ep:]
        att = jnp.maximum(att1.astype(f32) + att2[:, None, :], 0.0)
        scores = jnp.einsum("bpa,ak->bpk", att, w_fa)[:, :, 0]
        scores = scores - scores.max(axis=-1, keepdims=True)
        e = jnp.exp(scores)
        alpha = e / e.sum(axis=-1, keepdims=True)
        awe = jnp.einsum("bqp,bpe->bqe", alpha[:, None, :].astype(bf16), enc,
                         preferred_element_type=f32)[:, 0, :]
        gate = jax.nn.sigmoid(gate_pre)
        awe = gate * awe
        gates = (gates_pre[t].astype(f32)
                 + jnp.dot(awe.astype(bf16), W_ih_awe,
                           preferred_element_type=f32)
                 + hh_pre)
        i_g = jax.nn.sigmoid(gates[:, :Dp])
        f_g = jax.nn.sigmoid(gates[:, Dp:2 * Dp])
        g_g = jnp.tanh(gates[:, 2 * Dp:3 * Dp])
        o_g = jax.nn.sigmoid(gates[:, 3 * Dp:])
        c = f_g * c + i_g * g_g
        h = (o_g * jnp.tanh(c)).astype(bf16)
        hs.append(h)
    return jnp.stack(hs, axis=0)          # (T, Bp, Dp) bf16


# ----------------------------------------------------------------------------
# Parameter init (matches the PyTorch module's layer shapes; weights stored as
# (in_features, out_features); LSTMCell gate order i, f, g, o).
# ----------------------------------------------------------------------------
def init_params(key, attention_dim, embed_dim, decoder_dim, vocab_size,
                encoder_dim):
    ks = jax.random.split(key, 16)
    u = lambda k, shape, s=0.1: jax.random.uniform(k, shape, jnp.float32, -s, s)
    z = lambda shape: jnp.zeros(shape, jnp.float32)
    return dict(
        embedding=u(ks[0], (vocab_size, embed_dim)),
        W_ea=u(ks[1], (encoder_dim, attention_dim)), b_ea=z((1, attention_dim)),
        W_da=u(ks[2], (decoder_dim, attention_dim)), b_da=z((1, attention_dim)),
        w_fa=u(ks[3], (attention_dim, 1)), b_fa=z((1, 1)),
        W_init_h=u(ks[4], (encoder_dim, decoder_dim)),
        b_init_h=u(ks[5], (1, decoder_dim)),
        W_init_c=u(ks[6], (encoder_dim, decoder_dim)),
        b_init_c=u(ks[7], (1, decoder_dim)),
        W_fb=u(ks[8], (decoder_dim, encoder_dim)),
        b_fb=u(ks[9], (1, encoder_dim)),
        W_ih_emb=u(ks[10], (embed_dim, 4 * decoder_dim)),
        W_ih_awe=u(ks[11], (encoder_dim, 4 * decoder_dim)),
        b_ih=u(ks[12], (1, 4 * decoder_dim)),
        W_hh=u(ks[13], (decoder_dim, 4 * decoder_dim)),
        b_hh=u(ks[14], (1, 4 * decoder_dim)),
        W_fc=u(ks[15], (decoder_dim, vocab_size)), b_fc=z((1, vocab_size)),
    )


if __name__ == "__main__":
    attention_dim, embed_dim, decoder_dim = 32, 16, 32
    vocab_size, encoder_dim = 64, 32
    B, enc_size, max_len = 10, 4, 8

    key = jax.random.PRNGKey(0)
    k1, k2, k3, kp = jax.random.split(key, 4)
    encoder_out = jax.random.normal(
        k1, (B, enc_size, enc_size, encoder_dim), jnp.float32)
    encoded_captions = jax.random.randint(
        k2, (B, max_len), 0, vocab_size, dtype=jnp.int32)
    caption_lengths = jax.random.randint(
        k3, (B, 1), 3, max_len + 1, dtype=jnp.int32)

    params = init_params(kp, attention_dim, embed_dim, decoder_dim,
                         vocab_size, encoder_dim)

    # Validate the kernel against a pure-JAX reference of the identical
    # mixed-precision recurrence, at two tilings (two batch tiles / one tile).
    for bt in (8, 32):
        prep_ref = _prepare(params, encoder_out, encoded_captions,
                            caption_lengths, batch_tile=bt)
        ref_pred = _finish(prep_ref, params, reference_h_all(prep_ref))
        T = prep_ref["T"]

        out = decoder_with_attention_forward(
            params, encoder_out, encoded_captions, caption_lengths,
            batch_tile=bt)
        predictions = out[0]
        jax.block_until_ready(predictions)
        assert predictions.shape == (B, T, vocab_size)
        assert jnp.allclose(predictions, ref_pred, atol=2e-2, rtol=2e-2), (
            f"kernel/reference mismatch at batch_tile={bt}")

    print("KERNEL_OK")
</pallas_src>

<mosaic_0001>
module attributes {stable_mosaic.version = 11 : i64} {
  func.func @decoder_step_kernel(%arg0: i32, %arg1: i32, %arg2: memref<8x16x128xbf16, #tpu.memory_space<vmem>>, %arg3: memref<8x16x128xbf16, #tpu.memory_space<vmem>>, %arg4: memref<8x128xbf16, #tpu.memory_space<vmem>>, %arg5: memref<8x128xf32, #tpu.memory_space<vmem>>, %arg6: memref<1x8x512xbf16, #tpu.memory_space<vmem>>, %arg7: memref<128x768xbf16, #tpu.memory_space<vmem>>, %arg8: memref<1x768xf32, #tpu.memory_space<vmem>>, %arg9: memref<128x1xbf16, #tpu.memory_space<vmem>>, %arg10: memref<128x512xbf16, #tpu.memory_space<vmem>>, %arg11: memref<1x8x128xbf16, #tpu.memory_space<vmem>>, %arg12: memref<8x128xbf16, #tpu.memory_space<vmem>>, %arg13: memref<8x128xf32, #tpu.memory_space<vmem>>) attributes {dimension_semantics = [#tpu.dimension_semantics<parallel>, #tpu.dimension_semantics<arbitrary>], iteration_bounds = array<i64: 2, 7>, scalar_prefetch = 0 : i64, scratch_operands = 2 : i64, tpu.core_type = #tpu.core_type<tc>, window_params = [{pipeline_mode = #tpu.pipeline_mode<double_buffered>, transform_indices = @transform_0, window_bounds = array<i64: 8, 16, 128>}, {pipeline_mode = #tpu.pipeline_mode<double_buffered>, transform_indices = @transform_1, window_bounds = array<i64: 8, 16, 128>}, {pipeline_mode = #tpu.pipeline_mode<synchronous>, transform_indices = @transform_2, window_bounds = array<i64: 8, 128>}, {pipeline_mode = #tpu.pipeline_mode<synchronous>, transform_indices = @transform_3, window_bounds = array<i64: 8, 128>}, {transform_indices = @transform_4, window_bounds = array<i64: 1, 8, 512>}, {pipeline_mode = #tpu.pipeline_mode<synchronous>, transform_indices = @transform_5, window_bounds = array<i64: 128, 768>}, {pipeline_mode = #tpu.pipeline_mode<synchronous>, transform_indices = @transform_6, window_bounds = array<i64: 1, 768>}, {pipeline_mode = #tpu.pipeline_mode<synchronous>, transform_indices = @transform_7, window_bounds = array<i64: 128, 1>}, {pipeline_mode = #tpu.pipeline_mode<synchronous>, transform_indices = @transform_8, window_bounds = array<i64: 128, 512>}, {transform_indices = @transform_9, window_bounds = array<i64: 1, 8, 128>}]} {
    %c0_i32 = arith.constant 0 : i32
    %0 = arith.cmpi eq, %arg1, %c0_i32 : i32
    %1 = arith.extui %0 : i1 to i32
    %c0_i32_0 = arith.constant 0 : i32
    %2 = arith.cmpi ne, %1, %c0_i32_0 : i32
    scf.if %2 {
      %c0_38 = arith.constant 0 : index
      %c0_39 = arith.constant 0 : index
      %84 = vector.load %arg4[%c0_38, %c0_39] : memref<8x128xbf16, #tpu.memory_space<vmem>>, vector<8x128xbf16>
      %c0_40 = arith.constant 0 : index
      %c0_41 = arith.constant 0 : index
      %85 = vector.load %arg12[%c0_40, %c0_41] : memref<8x128xbf16, #tpu.memory_space<vmem>>, vector<8x128xbf16>
      tpu.vector_store %arg12[%c0_40, %c0_41], %84 {strides = array<i32>} : memref<8x128xbf16, #tpu.memory_space<vmem>>, vector<8x128xbf16>,
      %c0_42 = arith.constant 0 : index
      %c0_43 = arith.constant 0 : index
      %86 = vector.load %arg5[%c0_42, %c0_43] : memref<8x128xf32, #tpu.memory_space<vmem>>, vector<8x128xf32>
      %c0_44 = arith.constant 0 : index
      %c0_45 = arith.constant 0 : index
      %87 = vector.load %arg13[%c0_44, %c0_45] : memref<8x128xf32, #tpu.memory_space<vmem>>, vector<8x128xf32>
      tpu.vector_store %arg13[%c0_44, %c0_45], %86 {strides = array<i32>} : memref<8x128xf32, #tpu.memory_space<vmem>>, vector<8x128xf32>,
    } else {
    }
    %c0 = arith.constant 0 : index
    %c0_1 = arith.constant 0 : index
    %3 = vector.load %arg12[%c0, %c0_1] : memref<8x128xbf16, #tpu.memory_space<vmem>>, vector<8x128xbf16>
    %c0_2 = arith.constant 0 : index
    %c0_3 = arith.constant 0 : index
    %4 = vector.load %arg13[%c0_2, %c0_3] : memref<8x128xf32, #tpu.memory_space<vmem>>, vector<8x128xf32>
    %c0_4 = arith.constant 0 : index
    %c0_5 = arith.constant 0 : index
    %c0_6 = arith.constant 0 : index
    %5 = vector.load %arg2[%c0_4, %c0_5, %c0_6] : memref<8x16x128xbf16, #tpu.memory_space<vmem>>, vector<8x16x128xbf16>
    %c0_7 = arith.constant 0 : index
    %c0_8 = arith.constant 0 : index
    %6 = vector.load %arg7[%c0_7, %c0_8] : memref<128x768xbf16, #tpu.memory_space<vmem>>, vector<128x768xbf16>
    %cst = arith.constant dense<0.000000e+00> : vector<8x768xf32>
    %7 = tpu.matmul %3, %6, %cst {dimension_numbers = #tpu.dot_dimension_numbers<[1], [0], [0], [1], [0, 0, 1, 1], [], []>} : vector<8x128xbf16>, vector<128x768xbf16>, vector<8x768xf32> -> vector<8x768xf32>
    %c0_9 = arith.constant 0 : index
    %c0_10 = arith.constant 0 : index
    %8 = vector.load %arg8[%c0_9, %c0_10] : memref<1x768xf32, #tpu.memory_space<vmem>>, vector<1x768xf32>
    %9 = vector.broadcast %8 : vector<1x768xf32> to vector<8x768xf32>
    %10 = arith.addf %7, %9 : vector<8x768xf32>
    %11 = vector.extract_strided_slice %10 {offsets = [0, 0], sizes = [8, 128], strides = [1, 1]} : vector<8x768xf32> to vector<8x128xf32>
    %12 = vector.extract_strided_slice %10 {offsets = [0, 128], sizes = [8, 128], strides = [1, 1]} : vector<8x768xf32> to vector<8x128xf32>
    %13 = vector.extract_strided_slice %10 {offsets = [0, 256], sizes = [8, 512], strides = [1, 1]} : vector<8x768xf32> to vector<8x512xf32>
    %c0_11 = arith.constant 0 : index
    %c0_12 = arith.constant 0 : index
    %c0_13 = arith.constant 0 : index
    %14 = vector.load %arg3[%c0_11, %c0_12, %c0_13] : memref<8x16x128xbf16, #tpu.memory_space<vmem>>, vector<8x16x128xbf16>
    %15 = arith.truncf %11 : vector<8x128xf32> to vector<8x128xbf16>
    %16 = vector.shape_cast %15 : vector<8x128xbf16> to vector<8x1x128xbf16>
    %17 = vector.broadcast %16 : vector<8x1x128xbf16> to vector<8x16x128xbf16>
    %18 = arith.addf %14, %17 : vector<8x16x128xbf16>
    %cst_14 = arith.constant 0.000000e+00 : bf16
    %19 = vector.broadcast %cst_14 : bf16 to vector<8x16x128xbf16>
    %20 = arith.maximumf %18, %19 : vector<8x16x128xbf16>
    %21 = vector.shape_cast %20 : vector<8x16x128xbf16> to vector<128x128xbf16>
    %c0_15 = arith.constant 0 : index
    %c0_16 = arith.constant 0 : index
    %22 = vector.load %arg9[%c0_15, %c0_16] : memref<128x1xbf16, #tpu.memory_space<vmem>>, vector<128x1xbf16>
    %cst_17 = arith.constant dense<0.000000e+00> : vector<128x1xf32>
    %23 = tpu.matmul %21, %22, %cst_17 {dimension_numbers = #tpu.dot_dimension_numbers<[1], [0], [0], [1], [0, 0, 1, 1], [], []>} : vector<128x128xbf16>, vector<128x1xbf16>, vector<128x1xf32> -> vector<128x1xf32>
    %24 = vector.shape_cast %23 : vector<128x1xf32> to vector<8x16xf32>
    %cst_18 = arith.constant dense<0xFF800000> : vector<8xf32>
    %25 = vector.multi_reduction <maximumf>, %24, %cst_18 [1] : vector<8x16xf32> to vector<8xf32>
    %26 = vector.shape_cast %25 : vector<8xf32> to vector<8x1xf32>
    %27 = vector.broadcast %26 : vector<8x1xf32> to vector<8x16xf32>
    %28 = arith.subf %24, %27 : vector<8x16xf32>
    %29 = math.exp %28 : vector<8x16xf32>
    %cst_19 = arith.constant dense<0.000000e+00> : vector<8xf32>
    %30 = vector.multi_reduction <add>, %29, %cst_19 [1] : vector<8x16xf32> to vector<8xf32>
    %31 = vector.shape_cast %30 : vector<8xf32> to vector<8x1xf32>
    %32 = tpu.reciprocal %31 {approx = true} : vector<8x1xf32> -> vector<8x1xf32>
    %33 = vector.broadcast %32 : vector<8x1xf32> to vector<8x16xf32>
    %34 = arith.mulf %29, %33 : vector<8x16xf32>
    %35 = vector.shape_cast %34 : vector<8x16xf32> to vector<8x1x16xf32>
    %36 = arith.truncf %35 : vector<8x1x16xf32> to vector<8x1x16xbf16>
    "tpu.trace_start"() <{level = 10 : i32, message = "bqp,bpe->bqe"}> : () -> ()
    %cst_20 = arith.constant dense<0.000000e+00> : vector<8x1x128xf32>
    %37 = tpu.matmul %36, %5, %cst_20 {dimension_numbers = #tpu.dot_dimension_numbers<[2], [1], [1], [2], [0, 0, 0, 1, 1, 2], [0], [0]>} : vector<8x1x16xbf16>, vector<8x16x128xbf16>, vector<8x1x128xf32> -> vector<8x1x128xf32>
    "tpu.trace_stop"() : () -> ()
    %38 = vector.shape_cast %37 : vector<8x1x128xf32> to vector<8x128xf32>
    %39 = arith.negf %12 : vector<8x128xf32>
    %40 = math.exp %39 : vector<8x128xf32>
    %cst_21 = arith.constant 1.000000e+00 : f32
    %41 = vector.broadcast %cst_21 : f32 to vector<8x128xf32>
    %42 = arith.addf %41, %40 : vector<8x128xf32>
    %43 = arith.divf %41, %42 : vector<8x128xf32>
    %44 = arith.mulf %43, %38 : vector<8x128xf32>
    %c0_22 = arith.constant 0 : index
    %c0_23 = arith.constant 0 : index
    %c0_24 = arith.constant 0 : index
    %45 = vector.load %arg6[%c0_22, %c0_23, %c0_24] : memref<1x8x512xbf16, #tpu.memory_space<vmem>>, vector<1x8x512xbf16>
    %46 = vector.shape_cast %45 : vector<1x8x512xbf16> to vector<8x512xbf16>
    %47 = arith.extf %46 : vector<8x512xbf16> to vector<8x512xf32>
    %48 = arith.truncf %44 : vector<8x128xf32> to vector<8x128xbf16>
    %c0_25 = arith.constant 0 : index
    %c0_26 = arith.constant 0 : index
    %49 = vector.load %arg10[%c0_25, %c0_26] : memref<128x512xbf16, #tpu.memory_space<vmem>>, vector<128x512xbf16>
    %cst_27 = arith.constant dense<0.000000e+00> : vector<8x512xf32>
    %50 = tpu.matmul %48, %49, %cst_27 {dimension_numbers = #tpu.dot_dimension_numbers<[1], [0], [0], [1], [0, 0, 1, 1], [], []>} : vector<8x128xbf16>, vector<128x512xbf16>, vector<8x512xf32> -> vector<8x512xf32>
    %51 = arith.addf %47, %50 : vector<8x512xf32>
    %52 = arith.addf %51, %13 : vector<8x512xf32>
    %53 = vector.extract_strided_slice %52 {offsets = [0, 0], sizes = [8, 128], strides = [1, 1]} : vector<8x512xf32> to vector<8x128xf32>
    %54 = arith.negf %53 : vector<8x128xf32>
    %55 = math.exp %54 : vector<8x128xf32>
    %cst_28 = arith.constant 1.000000e+00 : f32
    %56 = vector.broadcast %cst_28 : f32 to vector<8x128xf32>
    %57 = arith.addf %56, %55 : vector<8x128xf32>
    %58 = arith.divf %56, %57 : vector<8x128xf32>
    %59 = vector.extract_strided_slice %52 {offsets = [0, 128], sizes = [8, 128], strides = [1, 1]} : vector<8x512xf32> to vector<8x128xf32>
    %60 = arith.negf %59 : vector<8x128xf32>
    %61 = math.exp %60 : vector<8x128xf32>
    %cst_29 = arith.constant 1.000000e+00 : f32
    %62 = vector.broadcast %cst_29 : f32 to vector<8x128xf32>
    %63 = arith.addf %62, %61 : vector<8x128xf32>
    %64 = arith.divf %62, %63 : vector<8x128xf32>
    %65 = vector.extract_strided_slice %52 {offsets = [0, 256], sizes = [8, 128], strides = [1, 1]} : vector<8x512xf32> to vector<8x128xf32>
    %66 = math.tanh %65 : vector<8x128xf32>
    %67 = vector.extract_strided_slice %52 {offsets = [0, 384], sizes = [8, 128], strides = [1, 1]} : vector<8x512xf32> to vector<8x128xf32>
    %68 = arith.negf %67 : vector<8x128xf32>
    %69 = math.exp %68 : vector<8x128xf32>
    %cst_30 = arith.constant 1.000000e+00 : f32
    %70 = vector.broadcast %cst_30 : f32 to vector<8x128xf32>
    %71 = arith.addf %70, %69 : vector<8x128xf32>
    %72 = arith.divf %70, %71 : vector<8x128xf32>
    %73 = arith.mulf %64, %4 : vector<8x128xf32>
    %74 = arith.mulf %58, %66 : vector<8x128xf32>
    %75 = arith.addf %73, %74 : vector<8x128xf32>
    %76 = math.tanh %75 : vector<8x128xf32>
    %77 = arith.mulf %72, %76 : vector<8x128xf32>
    %78 = arith.truncf %77 : vector<8x128xf32> to vector<8x128xbf16>
    %c0_31 = arith.constant 0 : index
    %c0_32 = arith.constant 0 : index
    %79 = vector.load %arg13[%c0_31, %c0_32] : memref<8x128xf32, #tpu.memory_space<vmem>>, vector<8x128xf32>
    tpu.vector_store %arg13[%c0_31, %c0_32], %75 {strides = array<i32>} : memref<8x128xf32, #tpu.memory_space<vmem>>, vector<8x128xf32>,
    %c0_33 = arith.constant 0 : index
    %c0_34 = arith.constant 0 : index
    %80 = vector.load %arg12[%c0_33, %c0_34] : memref<8x128xbf16, #tpu.memory_space<vmem>>, vector<8x128xbf16>
    tpu.vector_store %arg12[%c0_33, %c0_34], %78 {strides = array<i32>} : memref<8x128xbf16, #tpu.memory_space<vmem>>, vector<8x128xbf16>,
    %c0_35 = arith.constant 0 : index
    %c0_36 = arith.constant 0 : index
    %c0_37 = arith.constant 0 : index
    %81 = vector.load %arg11[%c0_35, %c0_36, %c0_37] : memref<1x8x128xbf16, #tpu.memory_space<vmem>>, vector<1x8x128xbf16>
    %82 = vector.shape_cast %81 : vector<1x8x128xbf16> to vector<8x128xbf16>
    %83 = vector.shape_cast %78 : vector<8x128xbf16> to vector<1x8x128xbf16>
    tpu.vector_store %arg11[%c0_35, %c0_36, %c0_37], %83 {strides = array<i32>} : memref<1x8x128xbf16, #tpu.memory_space<vmem>>, vector<1x8x128xbf16>,
    return
  }
  func.func @transform_0(%arg0: i32, %arg1: i32) -> (i32, i32, i32) {
    %c0_i32 = arith.constant 0 : i32
    %c0_i32_0 = arith.constant 0 : i32
    %c0_i32_1 = arith.constant 0 : i32
    return %arg0, %c0_i32, %c0_i32_0 : i32, i32, i32
  }
  func.func @transform_1(%arg0: i32, %arg1: i32) -> (i32, i32, i32) {
    %c0_i32 = arith.constant 0 : i32
    %c0_i32_0 = arith.constant 0 : i32
    %c0_i32_1 = arith.constant 0 : i32
    return %arg0, %c0_i32, %c0_i32_0 : i32, i32, i32
  }
  func.func @transform_2(%arg0: i32, %arg1: i32) -> (i32, i32) {
    %c0_i32 = arith.constant 0 : i32
    %c0_i32_0 = arith.constant 0 : i32
    return %arg0, %c0_i32 : i32, i32
  }
  func.func @transform_3(%arg0: i32, %arg1: i32) -> (i32, i32) {
    %c0_i32 = arith.constant 0 : i32
    %c0_i32_0 = arith.constant 0 : i32
    return %arg0, %c0_i32 : i32, i32
  }
  func.func @transform_4(%arg0: i32, %arg1: i32) -> (i32, i32, i32) {
    %c0_i32 = arith.constant 0 : i32
    %c0_i32_0 = arith.constant 0 : i32
    return %arg1, %arg0, %c0_i32 : i32, i32, i32
  }
  func.func @transform_5(%arg0: i32, %arg1: i32) -> (i32, i32) {
    %c0_i32 = arith.constant 0 : i32
    %c0_i32_0 = arith.constant 0 : i32
    %c0_i32_1 = arith.constant 0 : i32
    return %c0_i32, %c0_i32_0 : i32, i32
  }
  func.func @transform_6(%arg0: i32, %arg1: i32) -> (i32, i32) {
    %c0_i32 = arith.constant 0 : i32
    %c0_i32_0 = arith.constant 0 : i32
    %c0_i32_1 = arith.constant 0 : i32
    return %c0_i32, %c0_i32_0 : i32, i32
  }
  func.func @transform_7(%arg0: i32, %arg1: i32) -> (i32, i32) {
    %c0_i32 = arith.constant 0 : i32
    %c0_i32_0 = arith.constant 0 : i32
    %c0_i32_1 = arith.constant 0 : i32
    return %c0_i32, %c0_i32_0 : i32, i32
  }
  func.func @transform_8(%arg0: i32, %arg1: i32) -> (i32, i32) {
    %c0_i32 = arith.constant 0 : i32
    %c0_i32_0 = arith.constant 0 : i32
    %c0_i32_1 = arith.constant 0 : i32
    return %c0_i32, %c0_i32_0 : i32, i32
  }
  func.func @transform_9(%arg0: i32, %arg1: i32) -> (i32, i32, i32) {
    %c0_i32 = arith.constant 0 : i32
    %c0_i32_0 = arith.constant 0 : i32
    return %arg1, %arg0, %c0_i32 : i32, i32, i32
  }
}

module attributes {stable_mosaic.version = 11 : i64} {
  func.func @decoder_step_kernel(%arg0: i32, %arg1: i32, %arg2: memref<8x16x128xbf16, #tpu.memory_space<vmem>>, %arg3: memref<8x16x128xbf16, #tpu.memory_space<vmem>>, %arg4: memref<8x128xbf16, #tpu.memory_space<vmem>>, %arg5: memref<8x128xf32, #tpu.memory_space<vmem>>, %arg6: memref<1x8x512xbf16, #tpu.memory_space<vmem>>, %arg7: memref<128x768xbf16, #tpu.memory_space<vmem>>, %arg8: memref<1x768xf32, #tpu.memory_space<vmem>>, %arg9: memref<1x128xf32, #tpu.memory_space<vmem>>, %arg10: memref<128x512xbf16, #tpu.memory_space<vmem>>, %arg11: memref<1x8x128xbf16, #tpu.memory_space<vmem>>, %arg12: memref<8x128xbf16, #tpu.memory_space<vmem>>, %arg13: memref<8x128xf32, #tpu.memory_space<vmem>>) attributes {dimension_semantics = [#tpu.dimension_semantics<parallel>, #tpu.dimension_semantics<arbitrary>], iteration_bounds = array<i64: 2, 7>, scalar_prefetch = 0 : i64, scratch_operands = 2 : i64, tpu.core_type = #tpu.core_type<tc>, window_params = [{transform_indices = @transform_0, window_bounds = array<i64: 8, 16, 128>}, {transform_indices = @transform_1, window_bounds = array<i64: 8, 16, 128>}, {transform_indices = @transform_2, window_bounds = array<i64: 8, 128>}, {transform_indices = @transform_3, window_bounds = array<i64: 8, 128>}, {transform_indices = @transform_4, window_bounds = array<i64: 1, 8, 512>}, {pipeline_mode = #tpu.pipeline_mode<synchronous>, transform_indices = @transform_5, window_bounds = array<i64: 128, 768>}, {pipeline_mode = #tpu.pipeline_mode<synchronous>, transform_indices = @transform_6, window_bounds = array<i64: 1, 768>}, {pipeline_mode = #tpu.pipeline_mode<synchronous>, transform_indices = @transform_7, window_bounds = array<i64: 1, 128>}, {pipeline_mode = #tpu.pipeline_mode<synchronous>, transform_indices = @transform_8, window_bounds = array<i64: 128, 512>}, {transform_indices = @transform_9, window_bounds = array<i64: 1, 8, 128>}]} {
    %c0_i32 = arith.constant 0 : i32
    %0 = arith.cmpi eq, %arg1, %c0_i32 : i32
    %1 = arith.extui %0 : i1 to i32
    %c0_i32_0 = arith.constant 0 : i32
    %2 = arith.cmpi ne, %1, %c0_i32_0 : i32
    scf.if %2 {
      %c0_38 = arith.constant 0 : index
      %c0_39 = arith.constant 0 : index
      %85 = vector.load %arg4[%c0_38, %c0_39] : memref<8x128xbf16, #tpu.memory_space<vmem>>, vector<8x128xbf16>
      %c0_40 = arith.constant 0 : index
      %c0_41 = arith.constant 0 : index
      %86 = vector.load %arg12[%c0_40, %c0_41] : memref<8x128xbf16, #tpu.memory_space<vmem>>, vector<8x128xbf16>
      tpu.vector_store %arg12[%c0_40, %c0_41], %85 {strides = array<i32>} : memref<8x128xbf16, #tpu.memory_space<vmem>>, vector<8x128xbf16>,
      %c0_42 = arith.constant 0 : index
      %c0_43 = arith.constant 0 : index
      %87 = vector.load %arg5[%c0_42, %c0_43] : memref<8x128xf32, #tpu.memory_space<vmem>>, vector<8x128xf32>
      %c0_44 = arith.constant 0 : index
      %c0_45 = arith.constant 0 : index
      %88 = vector.load %arg13[%c0_44, %c0_45] : memref<8x128xf32, #tpu.memory_space<vmem>>, vector<8x128xf32>
      tpu.vector_store %arg13[%c0_44, %c0_45], %87 {strides = array<i32>} : memref<8x128xf32, #tpu.memory_space<vmem>>, vector<8x128xf32>,
    } else {
    }
    %c0 = arith.constant 0 : index
    %c0_1 = arith.constant 0 : index
    %3 = vector.load %arg12[%c0, %c0_1] : memref<8x128xbf16, #tpu.memory_space<vmem>>, vector<8x128xbf16>
    %c0_2 = arith.constant 0 : index
    %c0_3 = arith.constant 0 : index
    %4 = vector.load %arg13[%c0_2, %c0_3] : memref<8x128xf32, #tpu.memory_space<vmem>>, vector<8x128xf32>
    %c0_4 = arith.constant 0 : index
    %c0_5 = arith.constant 0 : index
    %c0_6 = arith.constant 0 : index
    %5 = vector.load %arg2[%c0_4, %c0_5, %c0_6] : memref<8x16x128xbf16, #tpu.memory_space<vmem>>, vector<8x16x128xbf16>
    %c0_7 = arith.constant 0 : index
    %c0_8 = arith.constant 0 : index
    %6 = vector.load %arg7[%c0_7, %c0_8] : memref<128x768xbf16, #tpu.memory_space<vmem>>, vector<128x768xbf16>
    %cst = arith.constant dense<0.000000e+00> : vector<8x768xf32>
    %7 = tpu.matmul %3, %6, %cst {dimension_numbers = #tpu.dot_dimension_numbers<[1], [0], [0], [1], [0, 0, 1, 1], [], []>} : vector<8x128xbf16>, vector<128x768xbf16>, vector<8x768xf32> -> vector<8x768xf32>
    %c0_9 = arith.constant 0 : index
    %c0_10 = arith.constant 0 : index
    %8 = vector.load %arg8[%c0_9, %c0_10] : memref<1x768xf32, #tpu.memory_space<vmem>>, vector<1x768xf32>
    %9 = vector.broadcast %8 : vector<1x768xf32> to vector<8x768xf32>
    %10 = arith.addf %7, %9 : vector<8x768xf32>
    %11 = vector.extract_strided_slice %10 {offsets = [0, 0], sizes = [8, 128], strides = [1, 1]} : vector<8x768xf32> to vector<8x128xf32>
    %12 = vector.extract_strided_slice %10 {offsets = [0, 128], sizes = [8, 128], strides = [1, 1]} : vector<8x768xf32> to vector<8x128xf32>
    %13 = vector.extract_strided_slice %10 {offsets = [0, 256], sizes = [8, 512], strides = [1, 1]} : vector<8x768xf32> to vector<8x512xf32>
    %c0_11 = arith.constant 0 : index
    %c0_12 = arith.constant 0 : index
    %c0_13 = arith.constant 0 : index
    %14 = vector.load %arg3[%c0_11, %c0_12, %c0_13] : memref<8x16x128xbf16, #tpu.memory_space<vmem>>, vector<8x16x128xbf16>
    %15 = arith.extf %14 : vector<8x16x128xbf16> to vector<8x16x128xf32>
    %16 = vector.shape_cast %11 : vector<8x128xf32> to vector<8x1x128xf32>
    %17 = vector.broadcast %16 : vector<8x1x128xf32> to vector<8x16x128xf32>
    %18 = arith.addf %15, %17 : vector<8x16x128xf32>
    %cst_14 = arith.constant 0.000000e+00 : f32
    %19 = vector.broadcast %cst_14 : f32 to vector<8x16x128xf32>
    %20 = arith.maximumf %18, %19 : vector<8x16x128xf32>
    %c0_15 = arith.constant 0 : index
    %c0_16 = arith.constant 0 : index
    %21 = vector.load %arg9[%c0_15, %c0_16] : memref<1x128xf32, #tpu.memory_space<vmem>>, vector<1x128xf32>
    %22 = vector.shape_cast %21 : vector<1x128xf32> to vector<1x1x128xf32>
    %23 = vector.broadcast %22 : vector<1x1x128xf32> to vector<8x16x128xf32>
    %24 = arith.mulf %20, %23 : vector<8x16x128xf32>
    %cst_17 = arith.constant dense<0.000000e+00> : vector<8x16xf32>
    %25 = vector.multi_reduction <add>, %24, %cst_17 [2] : vector<8x16x128xf32> to vector<8x16xf32>
    %cst_18 = arith.constant dense<0xFF800000> : vector<8xf32>
    %26 = vector.multi_reduction <maximumf>, %25, %cst_18 [1] : vector<8x16xf32> to vector<8xf32>
    %27 = vector.shape_cast %26 : vector<8xf32> to vector<8x1xf32>
    %28 = vector.broadcast %27 : vector<8x1xf32> to vector<8x16xf32>
    %29 = arith.subf %25, %28 : vector<8x16xf32>
    %30 = math.exp %29 : vector<8x16xf32>
    %cst_19 = arith.constant dense<0.000000e+00> : vector<8xf32>
    %31 = vector.multi_reduction <add>, %30, %cst_19 [1] : vector<8x16xf32> to vector<8xf32>
    %32 = vector.shape_cast %31 : vector<8xf32> to vector<8x1xf32>
    %33 = tpu.reciprocal %32 {approx = true} : vector<8x1xf32> -> vector<8x1xf32>
    %34 = vector.broadcast %33 : vector<8x1xf32> to vector<8x16xf32>
    %35 = arith.mulf %30, %34 : vector<8x16xf32>
    %36 = vector.shape_cast %35 : vector<8x16xf32> to vector<8x1x16xf32>
    %37 = arith.truncf %36 : vector<8x1x16xf32> to vector<8x1x16xbf16>
    "tpu.trace_start"() <{level = 10 : i32, message = "bqp,bpe->bqe"}> : () -> ()
    %cst_20 = arith.constant dense<0.000000e+00> : vector<8x1x128xf32>
    %38 = tpu.matmul %37, %5, %cst_20 {dimension_numbers = #tpu.dot_dimension_numbers<[2], [1], [1], [2], [0, 0, 0, 1, 1, 2], [0], [0]>} : vector<8x1x16xbf16>, vector<8x16x128xbf16>, vector<8x1x128xf32> -> vector<8x1x128xf32>
    "tpu.trace_stop"() : () -> ()
    %39 = vector.shape_cast %38 : vector<8x1x128xf32> to vector<8x128xf32>
    %40 = arith.negf %12 : vector<8x128xf32>
    %41 = math.exp %40 : vector<8x128xf32>
    %cst_21 = arith.constant 1.000000e+00 : f32
    %42 = vector.broadcast %cst_21 : f32 to vector<8x128xf32>
    %43 = arith.addf %42, %41 : vector<8x128xf32>
    %44 = arith.divf %42, %43 : vector<8x128xf32>
    %45 = arith.mulf %44, %39 : vector<8x128xf32>
    %c0_22 = arith.constant 0 : index
    %c0_23 = arith.constant 0 : index
    %c0_24 = arith.constant 0 : index
    %46 = vector.load %arg6[%c0_22, %c0_23, %c0_24] : memref<1x8x512xbf16, #tpu.memory_space<vmem>>, vector<1x8x512xbf16>
    %47 = vector.shape_cast %46 : vector<1x8x512xbf16> to vector<8x512xbf16>
    %48 = arith.extf %47 : vector<8x512xbf16> to vector<8x512xf32>
    %49 = arith.truncf %45 : vector<8x128xf32> to vector<8x128xbf16>
    %c0_25 = arith.constant 0 : index
    %c0_26 = arith.constant 0 : index
    %50 = vector.load %arg10[%c0_25, %c0_26] : memref<128x512xbf16, #tpu.memory_space<vmem>>, vector<128x512xbf16>
    %cst_27 = arith.constant dense<0.000000e+00> : vector<8x512xf32>
    %51 = tpu.matmul %49, %50, %cst_27 {dimension_numbers = #tpu.dot_dimension_numbers<[1], [0], [0], [1], [0, 0, 1, 1], [], []>} : vector<8x128xbf16>, vector<128x512xbf16>, vector<8x512xf32> -> vector<8x512xf32>
    %52 = arith.addf %48, %51 : vector<8x512xf32>
    %53 = arith.addf %52, %13 : vector<8x512xf32>
    %54 = vector.extract_strided_slice %53 {offsets = [0, 0], sizes = [8, 128], strides = [1, 1]} : vector<8x512xf32> to vector<8x128xf32>
    %55 = arith.negf %54 : vector<8x128xf32>
    %56 = math.exp %55 : vector<8x128xf32>
    %cst_28 = arith.constant 1.000000e+00 : f32
    %57 = vector.broadcast %cst_28 : f32 to vector<8x128xf32>
    %58 = arith.addf %57, %56 : vector<8x128xf32>
    %59 = arith.divf %57, %58 : vector<8x128xf32>
    %60 = vector.extract_strided_slice %53 {offsets = [0, 128], sizes = [8, 128], strides = [1, 1]} : vector<8x512xf32> to vector<8x128xf32>
    %61 = arith.negf %60 : vector<8x128xf32>
    %62 = math.exp %61 : vector<8x128xf32>
    %cst_29 = arith.constant 1.000000e+00 : f32
    %63 = vector.broadcast %cst_29 : f32 to vector<8x128xf32>
    %64 = arith.addf %63, %62 : vector<8x128xf32>
    %65 = arith.divf %63, %64 : vector<8x128xf32>
    %66 = vector.extract_strided_slice %53 {offsets = [0, 256], sizes = [8, 128], strides = [1, 1]} : vector<8x512xf32> to vector<8x128xf32>
    %67 = math.tanh %66 : vector<8x128xf32>
    %68 = vector.extract_strided_slice %53 {offsets = [0, 384], sizes = [8, 128], strides = [1, 1]} : vector<8x512xf32> to vector<8x128xf32>
    %69 = arith.negf %68 : vector<8x128xf32>
    %70 = math.exp %69 : vector<8x128xf32>
    %cst_30 = arith.constant 1.000000e+00 : f32
    %71 = vector.broadcast %cst_30 : f32 to vector<8x128xf32>
    %72 = arith.addf %71, %70 : vector<8x128xf32>
    %73 = arith.divf %71, %72 : vector<8x128xf32>
    %74 = arith.mulf %65, %4 : vector<8x128xf32>
    %75 = arith.mulf %59, %67 : vector<8x128xf32>
    %76 = arith.addf %74, %75 : vector<8x128xf32>
    %77 = math.tanh %76 : vector<8x128xf32>
    %78 = arith.mulf %73, %77 : vector<8x128xf32>
    %79 = arith.truncf %78 : vector<8x128xf32> to vector<8x128xbf16>
    %c0_31 = arith.constant 0 : index
    %c0_32 = arith.constant 0 : index
    %80 = vector.load %arg13[%c0_31, %c0_32] : memref<8x128xf32, #tpu.memory_space<vmem>>, vector<8x128xf32>
    tpu.vector_store %arg13[%c0_31, %c0_32], %76 {strides = array<i32>} : memref<8x128xf32, #tpu.memory_space<vmem>>, vector<8x128xf32>,
    %c0_33 = arith.constant 0 : index
    %c0_34 = arith.constant 0 : index
    %81 = vector.load %arg12[%c0_33, %c0_34] : memref<8x128xbf16, #tpu.memory_space<vmem>>, vector<8x128xbf16>
    tpu.vector_store %arg12[%c0_33, %c0_34], %79 {strides = array<i32>} : memref<8x128xbf16, #tpu.memory_space<vmem>>, vector<8x128xbf16>,
    %c0_35 = arith.constant 0 : index
    %c0_36 = arith.constant 0 : index
    %c0_37 = arith.constant 0 : index
    %82 = vector.load %arg11[%c0_35, %c0_36, %c0_37] : memref<1x8x128xbf16, #tpu.memory_space<vmem>>, vector<1x8x128xbf16>
    %83 = vector.shape_cast %82 : vector<1x8x128xbf16> to vector<8x128xbf16>
    %84 = vector.shape_cast %79 : vector<8x128xbf16> to vector<1x8x128xbf16>
    tpu.vector_store %arg11[%c0_35, %c0_36, %c0_37], %84 {strides = array<i32>} : memref<1x8x128xbf16, #tpu.memory_space<vmem>>, vector<1x8x128xbf16>,
    return
  }
  func.func @transform_0(%arg0: i32, %arg1: i32) -> (i32, i32, i32) {
    %c0_i32 = arith.constant 0 : i32
    %c0_i32_0 = arith.constant 0 : i32
    %c0_i32_1 = arith.constant 0 : i32
    return %arg0, %c0_i32, %c0_i32_0 : i32, i32, i32
  }
  func.func @transform_1(%arg0: i32, %arg1: i32) -> (i32, i32, i32) {
    %c0_i32 = arith.constant 0 : i32
    %c0_i32_0 = arith.constant 0 : i32
    %c0_i32_1 = arith.constant 0 : i32
    return %arg0, %c0_i32, %c0_i32_0 : i32, i32, i32
  }
  func.func @transform_2(%arg0: i32, %arg1: i32) -> (i32, i32) {
    %c0_i32 = arith.constant 0 : i32
    %c0_i32_0 = arith.constant 0 : i32
    return %arg0, %c0_i32 : i32, i32
  }
  func.func @transform_3(%arg0: i32, %arg1: i32) -> (i32, i32) {
    %c0_i32 = arith.constant 0 : i32
    %c0_i32_0 = arith.constant 0 : i32
    return %arg0, %c0_i32 : i32, i32
  }
  func.func @transform_4(%arg0: i32, %arg1: i32) -> (i32, i32, i32) {
    %c0_i32 = arith.constant 0 : i32
    %c0_i32_0 = arith.constant 0 : i32
    return %arg1, %arg0, %c0_i32 : i32, i32, i32
  }
  func.func @transform_5(%arg0: i32, %arg1: i32) -> (i32, i32) {
    %c0_i32 = arith.constant 0 : i32
    %c0_i32_0 = arith.constant 0 : i32
    %c0_i32_1 = arith.constant 0 : i32
    return %c0_i32, %c0_i32_0 : i32, i32
  }
  func.func @transform_6(%arg0: i32, %arg1: i32) -> (i32, i32) {
    %c0_i32 = arith.constant 0 : i32
    %c0_i32_0 = arith.constant 0 : i32
    %c0_i32_1 = arith.constant 0 : i32
    return %c0_i32, %c0_i32_0 : i32, i32
  }
  func.func @transform_7(%arg0: i32, %arg1: i32) -> (i32, i32) {
    %c0_i32 = arith.constant 0 : i32
    %c0_i32_0 = arith.constant 0 : i32
    %c0_i32_1 = arith.constant 0 : i32
    return %c0_i32, %c0_i32_0 : i32, i32
  }
  func.func @transform_8(%arg0: i32, %arg1: i32) -> (i32, i32) {
    %c0_i32 = arith.constant 0 : i32
    %c0_i32_0 = arith.constant 0 : i32
    %c0_i32_1 = arith.constant 0 : i32
    return %c0_i32, %c0_i32_0 : i32, i32
  }
  func.func @transform_9(%arg0: i32, %arg1: i32) -> (i32, i32, i32) {
    %c0_i32 = arith.constant 0 : i32
    %c0_i32_0 = arith.constant 0 : i32
    return %arg1, %arg0, %c0_i32 : i32, i32, i32
  }
}

</mosaic_0001>

<llo_original>
// kernel: tpu_custom_call.1
$region0: #{tpu_custom_call.1}
  #allocation0 [shape = 'u32[]', space=smem, size = 0x4, offset = 0x4, fixed_abs, tag = 'smem constant byte address 0x4 - core index']
  #allocation1 [shape = 'u32[72,128]{1,0:T(1,128)}', space=vmem, size = 0x9000, scoped, tag = 'internal scratch']
  #allocation2 [shape = 'bf16[8,128]{1,0:T(8,128)(2,1)}', space=vmem, size = 0x800, scoped, tag = 'scratch operand']
  #allocation3 [shape = 'f32[8,128]{1,0:T(8,128)}', space=vmem, size = 0x1000, scoped, tag = 'scratch operand']
  %s0 = inlined_call_operand.hbm [shape: bf16[16,16,128], index: 0, kind: input, shape index: {}]
  %s1 = inlined_call_operand.hbm [shape: bf16[16,16,128], index: 1, kind: input, shape index: {}]
  %s2 = inlined_call_operand.vmem [shape: bf16[16,128], index: 2, kind: input, shape index: {}]
  %s3 = inlined_call_operand.vmem [shape: f32[16,128], index: 3, kind: input, shape index: {}]
  %s4 = inlined_call_operand.hbm [shape: bf16[7,16,512], index: 4, kind: input, shape index: {}]
  %s5 = inlined_call_operand.hbm [shape: bf16[128,768], index: 5, kind: input, shape index: {}]
  %s6 = inlined_call_operand.vmem [shape: f32[1,768], index: 6, kind: input, shape index: {}]
  %s7 = inlined_call_operand.vmem [shape: bf16[128,1], index: 7, kind: input, shape index: {}]
  %s8 = inlined_call_operand.hbm [shape: bf16[128,512], index: 8, kind: input, shape index: {}]
  %s9 = inlined_call_operand.hbm [shape: bf16[7,16,128], index: 9, kind: output, shape index: {}]
  %s10 = sld [smem:[#allocation0]]
  $region93: #{tpu_custom_call.1} parent=0
    _
  %s12 = ssub.s32 1, %s10
  %s13 = scalar_select 0, %s12, %s10
  $region1: #{tpu_custom_call.1} parent=0
    #allocation4 [shape = 'u8[65536]{0}', space=vmem, size = 0x10000, scoped, tag = 'input window, operand 0']
    #allocation5 [shape = 's32[2]{0}', space=sflag, size = 0x8, scoped, tag = 'scoped memory for tpu_custom_call.1']
    #allocation6 [shape = 's32[2]{0}', space=sflag, size = 0x8, scoped, tag = 'scoped memory for tpu_custom_call.1']
    #allocation7 [shape = 'u8[65536]{0}', space=vmem, size = 0x10000, scoped, tag = 'input window, operand 1']
    #allocation8 [shape = 's32[2]{0}', space=sflag, size = 0x8, scoped, tag = 'scoped memory for tpu_custom_call.1']
    #allocation9 [shape = 'u8[16384]{0}', space=vmem, size = 0x4000, scoped, tag = 'input window, operand 4']
    #allocation10 [shape = 'u8[196608]{0}', space=vmem, size = 0x30000, scoped, tag = 'input window, operand 5, single buffered']
    #allocation11 [shape = 's32[1]{0}', space=sflag, size = 0x4, scoped, tag = 'scoped memory for tpu_custom_call.1']
    #allocation12 [shape = 'u8[131072]{0}', space=vmem, size = 0x20000, scoped, tag = 'input window, operand 8, single buffered']
    #allocation13 [shape = 'u8[4096]{0}', space=vmem, size = 0x1000, scoped, tag = 'output window, operand 0']
    %14 = vsyncpa [#allocation5], 0
    %s15 = scalar_lea.sflag [#allocation5], 1
    %16 = vsyncpa %s15, 0
    %17 = vsyncpa [#allocation8], 0
    %s18 = scalar_lea.sflag [#allocation8], 1
    %19 = vsyncpa %s18, 0
    %20 = vsyncpa [#allocation11], 0
    %21 = vsyncpa [#allocation6], 0
    %s22 = scalar_lea.sflag [#allocation6], 1
    %23 = vsyncpa %s22, 0
    loop: start=0, step=1, limit=16
    $region2: #{tpu_custom_call.1} parent=1 // loop_pre_header
      _
    $region3: #{tpu_custom_call.1} parent=1 // loop_header
      %s25 = sphi 0, %s29
      %p26 = scmp.ge.s32.totalorder %s25, 16
      %s32 = sphi 0, %s44
      %s33 = sphi 0, %s40
      %s34 = sphi 0, %s32
      %s35 = sphi 0, %s33
      %s36 = sphi 0, %s34
      %s37 = sphi 0, %s35
      %s47 = sphi 0, %s49
      %s50 = sphi 0, %s47
      %s51 = sphi 0, %s50
      %s67 = sphi 0, %s51
      %s73 = sphi 0, %s75
      %s76 = sphi 0, %s73
      %s77 = sphi 0, %s76
      %s93 = sphi 0, %s77
      %s99 = sphi 0, %s101
      %s102 = sphi 0, %s99
      %s103 = sphi 0, %s102
      %s119 = sphi 0, %s103
      %s125 = sphi 0, %s127
      %s128 = sphi 0, %s125
      %s129 = sphi 0, %s128
      %s145 = sphi 0, %s129
      %s153 = sphi 0, %s155
      %s156 = sphi 0, %s153
      %s157 = sphi 0, %s156
      %s173 = sphi 0, %s157
      %s177 = sphi 0, %s177
      %s179 = sphi 0, %s177
      %s180 = sphi 0, %s179
      %s194 = sphi 0, %s180
      %s198 = sphi 0, %s198
      %s200 = sphi 0, %s198
      %s201 = sphi 0, %s200
      %s215 = sphi 0, %s201
      %s219 = sphi 0, %s219
      %s221 = sphi 0, %s219
      %s222 = sphi 0, %s221
      %s236 = sphi 0, %s222
      %s240 = sphi 0, %s240
      %s242 = sphi 0, %s240
      %s243 = sphi 0, %s242
      %s257 = sphi 0, %s243
      %s265 = sphi 0, %s267
      %s268 = sphi 0, %s265
      %s269 = sphi 0, %s268
      %s285 = sphi 0, %s269
    $region4: #{tpu_custom_call.1} parent=1 // loop_header_branch
      %28 = sbr.rel (%p26) target = $region8
    $region5: #{tpu_custom_call.1} parent=1 // loop_body
      %s30 = ssub.s32 %s25, 1
      %s31 = ssub.s32 %s25, 2
      %s38 = sadd.s32 1, %s33
      %p39 = scmp.ge.s32.totalorder %s38, 7
      %s40 = scalar_select %p39, 0, %s38
      %s41 = sadd.s32 1, %s32
      %s42 = scalar_select %p39, %s41, %s32
      %p43 = scmp.ge.s32.totalorder %s42, 2
      %s44 = scalar_select %p43, 0, %s42
      %s45 = ssub.s32 %s32, %s44
      %p46 = scmp.eq.s32.totalorder %s45, 0
      %s48 = sadd.s32 %s47, 1
      %s49 = scalar_select %p46, %s47, %s48
      %p52 = pneg %p46
      %p53 = scmp.eq.s32.totalorder %s25, 13
      %p54 = por %p52, %p53
      %p55 = scmp.ne.s32.totalorder %s47, %s50
      %p56 = scmp.eq.s32.totalorder %s25, 0
      %p57 = por %p55, %p56
      %p58 = scmp.ne.s32.totalorder %s47, %s50
      %p59 = scmp.eq.s32.totalorder %s30, 13
      %p60 = por %p58, %p59
      %p61 = scmp.ne.s32.totalorder %s50, %s51
      %p62 = scmp.eq.s32.totalorder %s30, 0
      %p63 = por %p61, %p62
      %p64 = scmp.ne.s32.totalorder %s50, %s51
      %p65 = scmp.eq.s32.totalorder %s31, 13
      %p66 = por %p64, %p65
      %p68 = scmp.ne.s32.totalorder %s51, %s67
      %p69 = scmp.eq.s32.totalorder %s31, 0
      %p70 = por %p68, %p69
      %s71 = ssub.s32 %s32, %s44
      %p72 = scmp.eq.s32.totalorder %s71, 0
      %s74 = sadd.s32 %s73, 1
      %s75 = scalar_select %p72, %s73, %s74
      %p78 = pneg %p72
      %p79 = scmp.eq.s32.totalorder %s25, 13
      %p80 = por %p78, %p79
      %p81 = scmp.ne.s32.totalorder %s73, %s76
      %p82 = scmp.eq.s32.totalorder %s25, 0
      %p83 = por %p81, %p82
      %p84 = scmp.ne.s32.totalorder %s73, %s76
      %p85 = scmp.eq.s32.totalorder %s30, 13
      %p86 = por %p84, %p85
      %p87 = scmp.ne.s32.totalorder %s76, %s77
      %p88 = scmp.eq.s32.totalorder %s30, 0
      %p89 = por %p87, %p88
      %p90 = scmp.ne.s32.totalorder %s76, %s77
      %p91 = scmp.eq.s32.totalorder %s31, 13
      %p92 = por %p90, %p91
      %p94 = scmp.ne.s32.totalorder %s77, %s93
      %p95 = scmp.eq.s32.totalorder %s31, 0
      %p96 = por %p94, %p95
      %s97 = ssub.s32 %s32, %s44
      %p98 = scmp.eq.s32.totalorder %s97, 0
      %s100 = sadd.s32 %s99, 1
      %s101 = scalar_select %p98, %s99, %s100
      %p104 = pneg %p98
      %p105 = scmp.eq.s32.totalorder %s25, 13
      %p106 = por %p104, %p105
      %p107 = scmp.ne.s32.totalorder %s99, %s102
      %p108 = scmp.eq.s32.totalorder %s25, 0
      %p109 = por %p107, %p108
      %p110 = scmp.ne.s32.totalorder %s99, %s102
      %p111 = scmp.eq.s32.totalorder %s30, 13
      %p112 = por %p110, %p111
      %p113 = scmp.ne.s32.totalorder %s102, %s103
      %p114 = scmp.eq.s32.totalorder %s30, 0
      %p115 = por %p113, %p114
      %p116 = scmp.ne.s32.totalorder %s102, %s103
      %p117 = scmp.eq.s32.totalorder %s31, 13
      %p118 = por %p116, %p117
      %p120 = scmp.ne.s32.totalorder %s103, %s119
      %p121 = scmp.eq.s32.totalorder %s31, 0
      %p122 = por %p120, %p121
      %s123 = ssub.s32 %s32, %s44
      %p124 = scmp.eq.s32.totalorder %s123, 0
      %s126 = sadd.s32 %s125, 1
      %s127 = scalar_select %p124, %s125, %s126
      %p130 = pneg %p124
      %p131 = scmp.eq.s32.totalorder %s25, 13
      %p132 = por %p130, %p131
      %p133 = scmp.ne.s32.totalorder %s125, %s128
      %p134 = scmp.eq.s32.totalorder %s25, 0
      %p135 = por %p133, %p134
      %p136 = scmp.ne.s32.totalorder %s125, %s128
      %p137 = scmp.eq.s32.totalorder %s30, 13
      %p138 = por %p136, %p137
      %p139 = scmp.ne.s32.totalorder %s128, %s129
      %p140 = scmp.eq.s32.totalorder %s30, 0
      %p141 = por %p139, %p140
      %p142 = scmp.ne.s32.totalorder %s128, %s129
      %p143 = scmp.eq.s32.totalorder %s31, 13
      %p144 = por %p142, %p143
      %p146 = scmp.ne.s32.totalorder %s129, %s145
      %p147 = scmp.eq.s32.totalorder %s31, 0
      %p148 = por %p146, %p147
      %s149 = ssub.s32 %s33, %s40
      %s150 = ssub.s32 %s32, %s44
      %s151 = sor.u32 %s149, %s150
      %p152 = scmp.eq.s32.totalorder %s151, 0
      %s154 = sadd.s32 %s153, 1
      %s155 = scalar_select %p152, %s153, %s154
      %p158 = pneg %p152
      %p159 = scmp.eq.s32.totalorder %s25, 13
      %p160 = por %p158, %p159
      %p161 = scmp.ne.s32.totalorder %s153, %s156
      %p162 = scmp.eq.s32.totalorder %s25, 0
      %p163 = por %p161, %p162
      %p164 = scmp.ne.s32.totalorder %s153, %s156
      %p165 = scmp.eq.s32.totalorder %s30, 13
      %p166 = por %p164, %p165
      %p167 = scmp.ne.s32.totalorder %s156, %s157
      %p168 = scmp.eq.s32.totalorder %s30, 0
      %p169 = por %p167, %p168
      %p170 = scmp.ne.s32.totalorder %s156, %s157
      %p171 = scmp.eq.s32.totalorder %s31, 13
      %p172 = por %p170, %p171
      %p174 = scmp.ne.s32.totalorder %s157, %s173
      %p175 = scmp.eq.s32.totalorder %s31, 0
      %p176 = por %p174, %p175
      %s178 = sadd.s32 %s177, 1
      %p181 = scmp.eq.s32.totalorder %s25, 13
      %p182 = scmp.ne.s32.totalorder %s177, %s179
      %p183 = scmp.eq.s32.totalorder %s25, 0
      %p184 = por %p182, %p183
      %p185 = scmp.ne.s32.totalorder %s177, %s179
      %p186 = scmp.eq.s32.totalorder %s30, 13
      %p187 = por %p185, %p186
      %p188 = scmp.ne.s32.totalorder %s179, %s180
      %p189 = scmp.eq.s32.totalorder %s30, 0
      %p190 = por %p188, %p189
      %p191 = scmp.ne.s32.totalorder %s179, %s180
      %p192 = scmp.eq.s32.totalorder %s31, 13
      %p193 = por %p191, %p192
      %p195 = scmp.ne.s32.totalorder %s180, %s194
      %p196 = scmp.eq.s32.totalorder %s31, 0
      %p197 = por %p195, %p196
      %s199 = sadd.s32 %s198, 1
      %p202 = scmp.eq.s32.totalorder %s25, 13
      %p203 = scmp.ne.s32.totalorder %s198, %s200
      %p204 = scmp.eq.s32.totalorder %s25, 0
      %p205 = por %p203, %p204
      %p206 = scmp.ne.s32.totalorder %s198, %s200
      %p207 = scmp.eq.s32.totalorder %s30, 13
      %p208 = por %p206, %p207
      %p209 = scmp.ne.s32.totalorder %s200, %s201
      %p210 = scmp.eq.s32.totalorder %s30, 0
      %p211 = por %p209, %p210
      %p212 = scmp.ne.s32.totalorder %s200, %s201
      %p213 = scmp.eq.s32.totalorder %s31, 13
      %p214 = por %p212, %p213
      %p216 = scmp.ne.s32.totalorder %s201, %s215
      %p217 = scmp.eq.s32.totalorder %s31, 0
      %p218 = por %p216, %p217
      %s220 = sadd.s32 %s219, 1
      %p223 = scmp.eq.s32.totalorder %s25, 13
      %p224 = scmp.ne.s32.totalorder %s219, %s221
      %p225 = scmp.eq.s32.totalorder %s25, 0
      %p226 = por %p224, %p225
      %p227 = scmp.ne.s32.totalorder %s219, %s221
      %p228 = scmp.eq.s32.totalorder %s30, 13
      %p229 = por %p227, %p228
      %p230 = scmp.ne.s32.totalorder %s221, %s222
      %p231 = scmp.eq.s32.totalorder %s30, 0
      %p232 = por %p230, %p231
      %p233 = scmp.ne.s32.totalorder %s221, %s222
      %p234 = scmp.eq.s32.totalorder %s31, 13
      %p235 = por %p233, %p234
      %p237 = scmp.ne.s32.totalorder %s222, %s236
      %p238 = scmp.eq.s32.totalorder %s31, 0
      %p239 = por %p237, %p238
      %s241 = sadd.s32 %s240, 1
      %p244 = scmp.eq.s32.totalorder %s25, 13
      %p245 = scmp.ne.s32.totalorder %s240, %s242
      %p246 = scmp.eq.s32.totalorder %s25, 0
      %p247 = por %p245, %p246
      %p248 = scmp.ne.s32.totalorder %s240, %s242
      %p249 = scmp.eq.s32.totalorder %s30, 13
      %p250 = por %p248, %p249
      %p251 = scmp.ne.s32.totalorder %s242, %s243
      %p252 = scmp.eq.s32.totalorder %s30, 0
      %p253 = por %p251, %p252
      %p254 = scmp.ne.s32.totalorder %s242, %s243
      %p255 = scmp.eq.s32.totalorder %s31, 13
      %p256 = por %p254, %p255
      %p258 = scmp.ne.s32.totalorder %s243, %s257
      %p259 = scmp.eq.s32.totalorder %s31, 0
      %p260 = por %p258, %p259
      %s261 = ssub.s32 %s33, %s40
      %s262 = ssub.s32 %s32, %s44
      %s263 = sor.u32 %s261, %s262
      %p264 = scmp.eq.s32.totalorder %s263, 0
      %s266 = sadd.s32 %s265, 1
      %s267 = scalar_select %p264, %s265, %s266
      %p270 = pneg %p264
      %p271 = scmp.eq.s32.totalorder %s25, 13
      %p272 = por %p270, %p271
      %p273 = scmp.ne.s32.totalorder %s265, %s268
      %p274 = scmp.eq.s32.totalorder %s25, 0
      %p275 = por %p273, %p274
      %p276 = scmp.ne.s32.totalorder %s265, %s268
      %p277 = scmp.eq.s32.totalorder %s30, 13
      %p278 = por %p276, %p277
      %p279 = scmp.ne.s32.totalorder %s268, %s269
      %p280 = scmp.eq.s32.totalorder %s30, 0
      %p281 = por %p279, %p280
      %p282 = scmp.ne.s32.totalorder %s268, %s269
      %p283 = scmp.eq.s32.totalorder %s31, 13
      %p284 = por %p282, %p283
      %p286 = scmp.ne.s32.totalorder %s269, %s285
      %p287 = scmp.eq.s32.totalorder %s31, 0
      %p288 = por %p286, %p287
      %p289 = scmp.le.s32.totalorder 1, %s25
      %p290 = scmp.lt.s32.totalorder %s25, 15
      %p291 = pnand %p289, %p290
      %p292 = pneg %p291
      // Predicated region
      $region9: #{tpu_custom_call.1} parent=5 // pred_check
        _
      $region10: #{tpu_custom_call.1} parent=5 // pred_check_branch
        %294 = sbr.rel (%p291) target = $region12
      $region11: #{tpu_custom_call.1} parent=5 // pred_region
        %s295 = ssub.s32 %s25, 1
        // Predicated region
        $region13: #{tpu_custom_call.1} parent=11 // pred_check
          %p296 = pneg %p115
        $region14: #{tpu_custom_call.1} parent=11 // pred_check_branch
          %298 = sbr.rel (%p296) target = $region16
        $region15: #{tpu_custom_call.1} parent=11 // pred_region
          %p299 = scmp.lt.s32.totalorder %s34, 1
          %s300 = scalar_select %p299, %s34, 1
          %s301 = smul.addr %s300, 4
          %s302 = scalar_lea.vmem %s2, %s301
        $region16: #{tpu_custom_call.1} parent=11 // pred_fallthru
          _
        // Predicated region
        $region17: #{tpu_custom_call.1} parent=11 // pred_check
          %p303 = pneg %p141
        $region18: #{tpu_custom_call.1} parent=11 // pred_check_branch
          %305 = sbr.rel (%p303) target = $region20
        $region19: #{tpu_custom_call.1} parent=11 // pred_region
          %p306 = scmp.lt.s32.totalorder %s34, 1
          %s307 = scalar_select %p306, %s34, 1
          %s308 = smul.addr %s307, 8
          %s309 = scalar_lea.vmem %s3, %s308
        $region20: #{tpu_custom_call.1} parent=11 // pred_fallthru
          _
        // Predicated region
        $region21: #{tpu_custom_call.1} parent=11 // pred_check
          %p310 = pneg %p190
        $region22: #{tpu_custom_call.1} parent=11 // pred_check_branch
          %312 = sbr.rel (%p310) target = $region24
        $region23: #{tpu_custom_call.1} parent=11 // pred_region
          %314 = vsyncadd [#allocation11], 0
          %s315 = sshll.u32 %s5, 4
          %s316 = int_to_ptr.hbm [resolvable:$true] %s315
          %s317 = sshll.u32 [#allocation10], 4
          %s318 = int_to_ptr.vmem [resolvable:$true] %s317
          %323 = dma.hbm_to_vmem [thread:$0]  %s316, 6144, %s318, [#allocation11], 384, 384, 24
        $region24: #{tpu_custom_call.1} parent=11 // pred_fallthru
          _
        // Predicated region
        $region25: #{tpu_custom_call.1} parent=11 // pred_check
          %p324 = pneg %p211
        $region26: #{tpu_custom_call.1} parent=11 // pred_check_branch
          %326 = sbr.rel (%p324) target = $region28
        $region27: #{tpu_custom_call.1} parent=11 // pred_region
          _
        $region28: #{tpu_custom_call.1} parent=11 // pred_fallthru
          _
        // Predicated region
        $region29: #{tpu_custom_call.1} parent=11 // pred_check
          %p327 = pneg %p232
        $region30: #{tpu_custom_call.1} parent=11 // pred_check_branch
          %329 = sbr.rel (%p327) target = $region32
        $region31: #{tpu_custom_call.1} parent=11 // pred_region
          _
        $region32: #{tpu_custom_call.1} parent=11 // pred_fallthru
          _
        // Predicated region
        $region33: #{tpu_custom_call.1} parent=11 // pred_check
          %p330 = pneg %p253
        $region34: #{tpu_custom_call.1} parent=11 // pred_check_branch
          %332 = sbr.rel (%p330) target = $region36
        $region35: #{tpu_custom_call.1} parent=11 // pred_region
          %334 = vsyncadd [#allocation11], 0
          %s335 = sshll.u32 %s8, 4
          %s336 = int_to_ptr.hbm [resolvable:$true] %s335
          %s337 = sshll.u32 [#allocation12], 4
          %s338 = int_to_ptr.vmem [resolvable:$true] %s337
          %343 = dma.hbm_to_vmem [thread:$0]  %s336, 4096, %s338, [#allocation11], 256, 256, 16
        $region36: #{tpu_custom_call.1} parent=11 // pred_fallthru
          _
      $region12: #{tpu_custom_call.1} parent=5 // pred_fallthru
        _
      %p344 = scmp.lt.s32.totalorder %s25, 14
      // Predicated region
      $region37: #{tpu_custom_call.1} parent=5 // pred_check
        %p345 = pneg %p344
      $region38: #{tpu_custom_call.1} parent=5 // pred_check_branch
        %347 = sbr.rel (%p345) target = $region40
      $region39: #{tpu_custom_call.1} parent=5 // pred_region
        // Predicated region
        $region41: #{tpu_custom_call.1} parent=39 // pred_check
          %p348 = pneg %p57
        $region42: #{tpu_custom_call.1} parent=39 // pred_check_branch
          %350 = sbr.rel (%p348) target = $region44
        $region43: #{tpu_custom_call.1} parent=39 // pred_region
          %s351 = sand.u32 %s47, 1
          %s352 = scalar_lea.sflag [#allocation5], %s351
          %s353 = sand.u32 %s47, 1
          %s354 = smul.addr %s353, 64
          %s355 = scalar_lea.vmem [#allocation4], %s354
          %s356 = smul.u32 8, %s32
          %358 = vsyncadd %s352, 0
          %s359 = smul.addr %s356, 2
          %s360 = smul.addr %s359, 4
          %s361 = scalar_lea.hbm %s0, %s360
          %s362 = sshll.u32 %s361, 4
          %s363 = int_to_ptr.hbm [resolvable:$true] %s362
          %s364 = sshll.u32 %s355, 4
          %s365 = int_to_ptr.vmem [resolvable:$true] %s364
          %370 = dma.hbm_to_vmem [thread:$0]  %s363, 1024, %s365, %s352, 64, 64, 4
        $region44: #{tpu_custom_call.1} parent=39 // pred_fallthru
          _
        // Predicated region
        $region45: #{tpu_custom_call.1} parent=39 // pred_check
          %p371 = pneg %p83
        $region46: #{tpu_custom_call.1} parent=39 // pred_check_branch
          %373 = sbr.rel (%p371) target = $region48
        $region47: #{tpu_custom_call.1} parent=39 // pred_region
          %s374 = sand.u32 %s25, 1
          %s375 = scalar_lea.sflag [#allocation8], %s374
          %s376 = sand.u32 %s73, 1
          %s377 = smul.addr %s376, 64
          %s378 = scalar_lea.vmem [#allocation7], %s377
          %s379 = smul.u32 8, %s32
          %381 = vsyncadd %s375, 0
          %s382 = smul.addr %s379, 2
          %s383 = smul.addr %s382, 4
          %s384 = scalar_lea.hbm %s1, %s383
          %s385 = sshll.u32 %s384, 4
          %s386 = int_to_ptr.hbm [resolvable:$true] %s385
          %s387 = sshll.u32 %s378, 4
          %s388 = int_to_ptr.vmem [resolvable:$true] %s387
          %393 = dma.hbm_to_vmem [thread:$0]  %s386, 1024, %s388, %s375, 64, 64, 4
        $region48: #{tpu_custom_call.1} parent=39 // pred_fallthru
          _
        // Predicated region
        $region49: #{tpu_custom_call.1} parent=39 // pred_check
          %p394 = pneg %p163
        $region50: #{tpu_custom_call.1} parent=39 // pred_check_branch
          %396 = sbr.rel (%p394) target = $region52
        $region51: #{tpu_custom_call.1} parent=39 // pred_region
          %s397 = sand.u32 %s25, 1
          %s398 = scalar_lea.sflag [#allocation8], %s397
          %s399 = sand.u32 %s153, 1
          %s400 = smul.addr %s399, 16
          %s401 = scalar_lea.vmem [#allocation9], %s400
          %403 = vsyncadd %s398, 0
          %s404 = smul.addr %s32, 4
          %s405 = smul.addr %s33, 8
          %s406 = sadd.s32 %s404, %s405
          %s407 = smul.addr %s406, 4
          %s408 = scalar_lea.hbm %s4, %s407
          %s410 = sshll.u32 %s408, 4
          %s411 = int_to_ptr.hbm [resolvable:$true] %s410
          %s412 = sshll.u32 %s401, 4
          %s413 = int_to_ptr.vmem [resolvable:$true] %s412
          %415 = dma.hbm_to_vmem [thread:$0]  %s411, 256, %s413, %s398
        $region52: #{tpu_custom_call.1} parent=39 // pred_fallthru
          _
      $region40: #{tpu_custom_call.1} parent=5 // pred_fallthru
        _
      %p416 = scmp.le.s32.totalorder 1, %s25
      %p417 = scmp.lt.s32.totalorder %s25, 15
      %p418 = pnand %p416, %p417
      %p419 = pneg %p418
      // Predicated region
      $region53: #{tpu_custom_call.1} parent=5 // pred_check
        _
      $region54: #{tpu_custom_call.1} parent=5 // pred_check_branch
        %421 = sbr.rel (%p418) target = $region56
      $region55: #{tpu_custom_call.1} parent=5 // pred_region
        %s422 = ssub.s32 %s25, 1
        %s423 = sand.u32 %s50, 1
        %s424 = scalar_lea.sflag [#allocation5], %s423
        %s425 = sand.u32 %s50, 1
        %s426 = smul.addr %s425, 64
        %s427 = scalar_lea.vmem [#allocation4], %s426
        // Predicated region
        $region57: #{tpu_custom_call.1} parent=55 // pred_check
          %p428 = pneg %p63
        $region58: #{tpu_custom_call.1} parent=55 // pred_check_branch
          %430 = sbr.rel (%p428) target = $region60
        $region59: #{tpu_custom_call.1} parent=55 // pred_region
          %432 = dma.done %s424, 1024
        $region60: #{tpu_custom_call.1} parent=55 // pred_fallthru
          _
        %s433 = sand.u32 %s30, 1
        %s434 = scalar_lea.sflag [#allocation8], %s433
        %s435 = sand.u32 %s76, 1
        %s436 = smul.addr %s435, 64
        %s437 = scalar_lea.vmem [#allocation7], %s436
        // Predicated region
        $region61: #{tpu_custom_call.1} parent=55 // pred_check
          %p438 = pneg %p89
        $region62: #{tpu_custom_call.1} parent=55 // pred_check_branch
          %440 = sbr.rel (%p438) target = $region64
        $region63: #{tpu_custom_call.1} parent=55 // pred_region
          %442 = dma.done %s434, 1024
        $region64: #{tpu_custom_call.1} parent=55 // pred_fallthru
          _
        %s443 = sand.u32 %s30, 1
        %s444 = scalar_lea.sflag [#allocation8], %s443
        %s445 = sand.u32 %s156, 1
        %s446 = smul.addr %s445, 16
        %s447 = scalar_lea.vmem [#allocation9], %s446
        // Predicated region
        $region65: #{tpu_custom_call.1} parent=55 // pred_check
          %p448 = pneg %p169
        $region66: #{tpu_custom_call.1} parent=55 // pred_check_branch
          %450 = sbr.rel (%p448) target = $region68
        $region67: #{tpu_custom_call.1} parent=55 // pred_region
          %452 = dma.done %s444, 256
        $region68: #{tpu_custom_call.1} parent=55 // pred_fallthru
          _
        // Predicated region
        $region69: #{tpu_custom_call.1} parent=55 // pred_check
          %p453 = pneg %p190
        $region70: #{tpu_custom_call.1} parent=55 // pred_check_branch
          %455 = sbr.rel (%p453) target = $region72
        $region71: #{tpu_custom_call.1} parent=55 // pred_region
          %457 = dma.done [#allocation11], 6144
        $region72: #{tpu_custom_call.1} parent=55 // pred_fallthru
          _
        // Predicated region
        $region73: #{tpu_custom_call.1} parent=55 // pred_check
          %p458 = pneg %p253
        $region74: #{tpu_custom_call.1} parent=55 // pred_check_branch
          %460 = sbr.rel (%p458) target = $region76
        $region75: #{tpu_custom_call.1} parent=55 // pred_region
          %462 = dma.done [#allocation11], 4096
        $region76: #{tpu_custom_call.1} parent=55 // pred_fallthru
          _
        %s463 = sand.u32 %s50, 1
        %s464 = scalar_lea.sflag [#allocation5], %s463
        %s465 = sand.u32 %s50, 1
        %s466 = smul.addr %s465, 64
        %s467 = scalar_lea.vmem [#allocation4], %s466
        %p468 = pneg %p63
        %p469 = pneg %p60
        %s470 = sand.u32 %s30, 1
        %s471 = scalar_lea.sflag [#allocation8], %s470
        %s472 = sand.u32 %s76, 1
        %s473 = smul.addr %s472, 64
        %s474 = scalar_lea.vmem [#allocation7], %s473
        %p475 = pneg %p89
        %p476 = pneg %p86
        %p477 = scmp.lt.s32.totalorder %s34, 1
        %s478 = scalar_select %p477, %s34, 1
        %s479 = smul.addr %s478, 4
        %s480 = scalar_lea.vmem %s2, %s479
        %p481 = pneg %p115
        %p482 = pneg %p112
        %p483 = scmp.lt.s32.totalorder %s34, 1
        %s484 = scalar_select %p483, %s34, 1
        %s485 = smul.addr %s484, 8
        %s486 = scalar_lea.vmem %s3, %s485
        %p487 = pneg %p141
        %p488 = pneg %p138
        %s489 = sand.u32 %s30, 1
        %s490 = scalar_lea.sflag [#allocation8], %s489
        %s491 = sand.u32 %s156, 1
        %s492 = smul.addr %s491, 16
        %s493 = scalar_lea.vmem [#allocation9], %s492
        %p494 = pneg %p169
        %p495 = pneg %p166
        %p496 = pneg %p190
        %p497 = pneg %p187
        %p498 = pneg %p211
        %p499 = pneg %p208
        %p500 = pneg %p232
        %p501 = pneg %p229
        %p502 = pneg %p253
        %p503 = pneg %p250
        %p504 = pneg %p281
        %p505 = pneg %p278
        %s506 = sand.u32 %s268, 1
        %s507 = scalar_lea.sflag [#allocation6], %s506
        %s508 = sand.u32 %s268, 1
        %s509 = smul.addr %s508, 4
        %s510 = scalar_lea.vmem [#allocation13], %s509
        %s511 = smul.u32 8, %s34
        %s512 = smul.u32 8, %s34
        %p513 = scmp.lt.s32.totalorder %s34, 1
        %s514 = scalar_select %p513, %s34, 1
        %s515 = smul.addr %s514, 4
        %s516 = scalar_lea.vmem %s2, %s515
        %p517 = scmp.lt.s32.totalorder %s34, 1
        %s518 = scalar_select %p517, %s34, 1
        %s519 = smul.addr %s518, 8
        %s520 = scalar_lea.vmem %s3, %s519
        %p522 = scmp.eq.s32.totalorder %s35, 0
        // Predicated region
        $region77: #{tpu_custom_call.1} parent=55 // pred_check
          %p523 = pneg %p522
        $region78: #{tpu_custom_call.1} parent=55 // pred_check_branch
          %525 = sbr.rel (%p523) target = $region80
        $region79: #{tpu_custom_call.1} parent=55 // pred_region
          %v526 = vld [vmem:[%s516] sm:$0xf]
          %527 = vst [vmem:[#allocation2] sm:$0xf] %v526
          %v528 = vld [vmem:[%s520] sm:$0xff]
          %529 = vst [vmem:[#allocation3] sm:$0xff] %v528
        $region80: #{tpu_custom_call.1} parent=55 // pred_fallthru
          _
        %v530 = vld [vmem:[#allocation2] sm:$0xf]
        %v531 = vld [vmem:[#allocation3] sm:$0xff]
        %v532 = vld [vmem:[%s427] sm:$0xf]
        %v533 = vld [vmem:[%s427 + $0x4] sm:$0xf]
        %v534 = vld [vmem:[%s427 + $0x8] sm:$0xf]
        %v535 = vld [vmem:[%s427 + $0xc] sm:$0xf]
        %v536 = vld [vmem:[%s427 + $0x10] sm:$0xf]
        %v537 = vld [vmem:[%s427 + $0x14] sm:$0xf]
        %v538 = vld [vmem:[%s427 + $0x18] sm:$0xf]
        %v539 = vld [vmem:[%s427 + $0x1c] sm:$0xf]
        %v540 = vld [vmem:[%s427 + $0x20] sm:$0xf]
        %v541 = vld [vmem:[%s427 + $0x24] sm:$0xf]
        %v542 = vld [vmem:[%s427 + $0x28] sm:$0xf]
        %v543 = vld [vmem:[%s427 + $0x2c] sm:$0xf]
        %v544 = vld [vmem:[%s427 + $0x30] sm:$0xf]
        %v545 = vld [vmem:[%s427 + $0x34] sm:$0xf]
        %v546 = vld [vmem:[%s427 + $0x38] sm:$0xf]
        %v547 = vld [vmem:[%s427 + $0x3c] sm:$0xf]
        %v548 = vld [vmem:[#allocation10] sm:$0xff]
        %v549 = vld [vmem:[#allocation10 + $0x8] sm:$0xff]
        %v550 = vld [vmem:[#allocation10 + $0x10] sm:$0xff]
        %v551 = vld [vmem:[#allocation10 + $0x18] sm:$0xff]
        %v552 = vld [vmem:[#allocation10 + $0x20] sm:$0xff]
        %v553 = vld [vmem:[#allocation10 + $0x28] sm:$0xff]
        %v554 = vld [vmem:[#allocation10 + $0x30] sm:$0xff]
        %v555 = vld [vmem:[#allocation10 + $0x38] sm:$0xff]
        %v556 = vld [vmem:[#allocation10 + $0x40] sm:$0xff]
        %v557 = vld [vmem:[#allocation10 + $0x48] sm:$0xff]
        %v558 = vld [vmem:[#allocation10 + $0x50] sm:$0xff]
        %v559 = vld [vmem:[#allocation10 + $0x58] sm:$0xff]
        %v560 = vld [vmem:[#allocation10 + $0x60] sm:$0xff]
        %v561 = vld [vmem:[#allocation10 + $0x68] sm:$0xff]
        %v562 = vld [vmem:[#allocation10 + $0x70] sm:$0xff]
        %v563 = vld [vmem:[#allocation10 + $0x78] sm:$0xff]
        %v564 = vld [vmem:[#allocation10 + $0x80] sm:$0xff]
        %v565 = vld [vmem:[#allocation10 + $0x88] sm:$0xff]
        %v566 = vld [vmem:[#allocation10 + $0x90] sm:$0xff]
        %v567 = vld [vmem:[#allocation10 + $0x98] sm:$0xff]
        %v568 = vld [vmem:[#allocation10 + $0xa0] sm:$0xff]
        %v569 = vld [vmem:[#allocation10 + $0xa8] sm:$0xff]
        %v570 = vld [vmem:[#allocation10 + $0xb0] sm:$0xff]
        %v571 = vld [vmem:[#allocation10 + $0xb8] sm:$0xff]
        %v572 = vld [vmem:[#allocation10 + $0xc0] sm:$0xff]
        %v573 = vld [vmem:[#allocation10 + $0xc8] sm:$0xff]
        %v574 = vld [vmem:[#allocation10 + $0xd0] sm:$0xff]
        %v575 = vld [vmem:[#allocation10 + $0xd8] sm:$0xff]
        %v576 = vld [vmem:[#allocation10 + $0xe0] sm:$0xff]
        %v577 = vld [vmem:[#allocation10 + $0xe8] sm:$0xff]
        %v578 = vld [vmem:[#allocation10 + $0xf0] sm:$0xff]
        %v579 = vld [vmem:[#allocation10 + $0xf8] sm:$0xff]
        %v580 = vld [vmem:[#allocation10 + $0x100] sm:$0xff]
        %v581 = vld [vmem:[#allocation10 + $0x108] sm:$0xff]
        %v582 = vld [vmem:[#allocation10 + $0x110] sm:$0xff]
        %v583 = vld [vmem:[#allocation10 + $0x118] sm:$0xff]
        %v584 = vld [vmem:[#allocation10 + $0x120] sm:$0xff]
        %v585 = vld [vmem:[#allocation10 + $0x128] sm:$0xff]
        %v586 = vld [vmem:[#allocation10 + $0x130] sm:$0xff]
        %v587 = vld [vmem:[#allocation10 + $0x138] sm:$0xff]
        %v588 = vld [vmem:[#allocation10 + $0x140] sm:$0xff]
        %v589 = vld [vmem:[#allocation10 + $0x148] sm:$0xff]
        %v590 = vld [vmem:[#allocation10 + $0x150] sm:$0xff]
        %v591 = vld [vmem:[#allocation10 + $0x158] sm:$0xff]
        %v592 = vld [vmem:[#allocation10 + $0x160] sm:$0xff]
        %v593 = vld [vmem:[#allocation10 + $0x168] sm:$0xff]
        %v594 = vld [vmem:[#allocation10 + $0x170] sm:$0xff]
        %v595 = vld [vmem:[#allocation10 + $0x178] sm:$0xff]
        %v596 = vld [vmem:[%s6] sm:$0x3f]
        %v598 = vperm.slane %v596, 0
        %v599 = vperm.slane %v596, 1
        %v600 = vperm.slane %v596, 2
        %v601 = vperm.slane %v596, 3
        %v602 = vperm.slane %v596, 4
        %v603 = vperm.slane %v596, 5
        %v658 = vunpack.c.l.b16 %v548
        %v659 = vunpack.c.h.b16 %v548
        %v660 = vunpack.c.l.b16 %v549
        %v661 = vunpack.c.h.b16 %v549
        %v662 = vunpack.c.l.b16 %v550
        %v663 = vunpack.c.h.b16 %v550
        %v664 = vunpack.c.l.b16 %v551
        %v665 = vunpack.c.h.b16 %v551
        %v666 = vunpack.c.l.b16 %v552
        %v667 = vunpack.c.h.b16 %v552
        %v668 = vunpack.c.l.b16 %v553
        %v669 = vunpack.c.h.b16 %v553
        %v670 = vunpack.c.l.b16 %v554
        %v671 = vunpack.c.h.b16 %v554
        %v672 = vunpack.c.l.b16 %v555
        %v673 = vunpack.c.h.b16 %v555
        %v674 = vunpack.c.l.b16 %v556
        %v675 = vunpack.c.h.b16 %v556
        %v676 = vunpack.c.l.b16 %v557
        %v677 = vunpack.c.h.b16 %v557
        %v678 = vunpack.c.l.b16 %v558
        %v679 = vunpack.c.h.b16 %v558
        %v680 = vunpack.c.l.b16 %v559
        %v681 = vunpack.c.h.b16 %v559
        %v682 = vunpack.c.l.b16 %v560
        %v683 = vunpack.c.h.b16 %v560
        %v684 = vunpack.c.l.b16 %v561
        %v685 = vunpack.c.h.b16 %v561
        %v686 = vunpack.c.l.b16 %v562
        %v687 = vunpack.c.h.b16 %v562
        %v688 = vunpack.c.l.b16 %v563
        %v689 = vunpack.c.h.b16 %v563
        %v690 = vunpack.c.l.b16 %v564
        %v691 = vunpack.c.h.b16 %v564
        %v692 = vunpack.c.l.b16 %v565
        %v693 = vunpack.c.h.b16 %v565
        %v694 = vunpack.c.l.b16 %v566
        %v695 = vunpack.c.h.b16 %v566
        %v696 = vunpack.c.l.b16 %v567
        %v697 = vunpack.c.h.b16 %v567
        %v698 = vunpack.c.l.b16 %v568
        %v699 = vunpack.c.h.b16 %v568
        %v700 = vunpack.c.l.b16 %v569
        %v701 = vunpack.c.h.b16 %v569
        %v702 = vunpack.c.l.b16 %v570
        %v703 = vunpack.c.h.b16 %v570
        %v704 = vunpack.c.l.b16 %v571
        %v705 = vunpack.c.h.b16 %v571
        %v706 = vunpack.c.l.b16 %v572
        %v707 = vunpack.c.h.b16 %v572
        %v708 = vunpack.c.l.b16 %v573
        %v709 = vunpack.c.h.b16 %v573
        %v710 = vunpack.c.l.b16 %v574
        %v711 = vunpack.c.h.b16 %v574
        %v712 = vunpack.c.l.b16 %v575
        %v713 = vunpack.c.h.b16 %v575
        %v714 = vunpack.c.l.b16 %v576
        %v715 = vunpack.c.h.b16 %v576
        %v716 = vunpack.c.l.b16 %v577
        %v717 = vunpack.c.h.b16 %v577
        %v718 = vunpack.c.l.b16 %v578
        %v719 = vunpack.c.h.b16 %v578
        %v720 = vunpack.c.l.b16 %v579
        %v721 = vunpack.c.h.b16 %v579
        %v722 = vunpack.c.l.b16 %v580
        %v723 = vunpack.c.h.b16 %v580
        %v724 = vunpack.c.l.b16 %v581
        %v725 = vunpack.c.h.b16 %v581
        %v726 = vunpack.c.l.b16 %v582
        %v727 = vunpack.c.h.b16 %v582
        %v728 = vunpack.c.l.b16 %v583
        %v729 = vunpack.c.h.b16 %v583
        %v730 = vunpack.c.l.b16 %v584
        %v731 = vunpack.c.h.b16 %v584
        %v732 = vunpack.c.l.b16 %v585
        %v733 = vunpack.c.h.b16 %v585
        %v734 = vunpack.c.l.b16 %v586
        %v735 = vunpack.c.h.b16 %v586
        %v736 = vunpack.c.l.b16 %v587
        %v737 = vunpack.c.h.b16 %v587
        %v738 = vunpack.c.l.b16 %v588
        %v739 = vunpack.c.h.b16 %v588
        %v740 = vunpack.c.l.b16 %v589
        %v741 = vunpack.c.h.b16 %v589
        %v742 = vunpack.c.l.b16 %v590
        %v743 = vunpack.c.h.b16 %v590
        %v744 = vunpack.c.l.b16 %v591
        %v745 = vunpack.c.h.b16 %v591
        %v746 = vunpack.c.l.b16 %v592
        %v747 = vunpack.c.h.b16 %v592
        %v748 = vunpack.c.l.b16 %v593
        %v749 = vunpack.c.h.b16 %v593
        %v750 = vunpack.c.l.b16 %v594
        %v751 = vunpack.c.h.b16 %v594
        %v752 = vunpack.c.l.b16 %v595
        %v753 = vunpack.c.h.b16 %v595
        %v754 = vpack.c.b16 %v664, %v658
        %v755 = vpack.c.b16 %v665, %v659
        %v756 = vpack.c.b16 %v666, %v660
        %v757 = vpack.c.b16 %v667, %v661
        %v758 = vpack.c.b16 %v668, %v662
        %v759 = vpack.c.b16 %v669, %v663
        %v760 = vpack.c.b16 %v676, %v670
        %v761 = vpack.c.b16 %v677, %v671
        %v762 = vpack.c.b16 %v678, %v672
        %v763 = vpack.c.b16 %v679, %v673
        %v764 = vpack.c.b16 %v680, %v674
        %v765 = vpack.c.b16 %v681, %v675
        %v766 = vpack.c.b16 %v688, %v682
        %v767 = vpack.c.b16 %v689, %v683
        %v768 = vpack.c.b16 %v690, %v684
        %v769 = vpack.c.b16 %v691, %v685
        %v770 = vpack.c.b16 %v692, %v686
        %v771 = vpack.c.b16 %v693, %v687
        %v772 = vpack.c.b16 %v700, %v694
        %v773 = vpack.c.b16 %v701, %v695
        %v774 = vpack.c.b16 %v702, %v696
        %v775 = vpack.c.b16 %v703, %v697
        %v776 = vpack.c.b16 %v704, %v698
        %v777 = vpack.c.b16 %v705, %v699
        %v778 = vpack.c.b16 %v712, %v706
        %v779 = vpack.c.b16 %v713, %v707
        %v780 = vpack.c.b16 %v714, %v708
        %v781 = vpack.c.b16 %v715, %v709
        %v782 = vpack.c.b16 %v716, %v710
        %v783 = vpack.c.b16 %v717, %v711
        %v784 = vpack.c.b16 %v724, %v718
        %v785 = vpack.c.b16 %v725, %v719
        %v786 = vpack.c.b16 %v726, %v720
        %v787 = vpack.c.b16 %v727, %v721
        %v788 = vpack.c.b16 %v728, %v722
        %v789 = vpack.c.b16 %v729, %v723
        %v790 = vpack.c.b16 %v736, %v730
        %v791 = vpack.c.b16 %v737, %v731
        %v792 = vpack.c.b16 %v738, %v732
        %v793 = vpack.c.b16 %v739, %v733
        %v794 = vpack.c.b16 %v740, %v734
        %v795 = vpack.c.b16 %v741, %v735
        %v796 = vpack.c.b16 %v748, %v742
        %v797 = vpack.c.b16 %v749, %v743
        %v798 = vpack.c.b16 %v750, %v744
        %v799 = vpack.c.b16 %v751, %v745
        %v800 = vpack.c.b16 %v752, %v746
        %v801 = vpack.c.b16 %v753, %v747
        %850 = vmatpush.bf16.msra.mxu0 %v796
        %851 = vmatpush.bf16.msra.mxu0 %v790
        %852 = vmatpush.bf16.msra.mxu0 %v784
        %853 = vmatpush.bf16.msra.mxu0 %v778
        %854 = vmatpush.bf16.msra.mxu0 %v772
        %855 = vmatpush.bf16.msra.mxu0 %v766
        %856 = vmatpush.bf16.msra.mxu0 %v760
        %857 = vmatpush.bf16.msra.mxu0 %v754
        %858 = vmatmul.bf16.gmra.mxu0 %v530
        %v859 = vpop.f32.mrf.mxu0
        %v860 = vadd.f32 %v598, %v859
        %v861 = vpop.f32.mrf.mxu0
        %862 = vdwg.mxu0
        %863 = vmatpush.bf16.msra.mxu0 %v797
        %864 = vmatpush.bf16.msra.mxu0 %v791
        %865 = vmatpush.bf16.msra.mxu0 %v785
        %866 = vmatpush.bf16.msra.mxu0 %v779
        %867 = vmatpush.bf16.msra.mxu0 %v773
        %868 = vmatpush.bf16.msra.mxu0 %v767
        %869 = vmatpush.bf16.msra.mxu0 %v761
        %870 = vmatpush.bf16.msra.mxu0 %v755
        %871 = vmatmul.bf16.gmra.mxu0 %v530
        %v872 = vpop.f32.mrf.mxu0
        %v873 = vadd.f32 %v599, %v872
        %v874 = vpop.f32.mrf.mxu0
        %875 = vdwg.mxu0
        %876 = vmatpush.bf16.msra.mxu0 %v798
        %877 = vmatpush.bf16.msra.mxu0 %v792
        %878 = vmatpush.bf16.msra.mxu0 %v786
        %879 = vmatpush.bf16.msra.mxu0 %v780
        %880 = vmatpush.bf16.msra.mxu0 %v774
        %881 = vmatpush.bf16.msra.mxu0 %v768
        %882 = vmatpush.bf16.msra.mxu0 %v762
        %883 = vmatpush.bf16.msra.mxu0 %v756
        %884 = vmatmul.bf16.gmra.mxu0 %v530
        %v885 = vpop.f32.mrf.mxu0
        %v886 = vadd.f32 %v600, %v885
        %v887 = vpop.f32.mrf.mxu0
        %888 = vdwg.mxu0
        %889 = vmatpush.bf16.msra.mxu0 %v799
        %890 = vmatpush.bf16.msra.mxu0 %v793
        %891 = vmatpush.bf16.msra.mxu0 %v787
        %892 = vmatpush.bf16.msra.mxu0 %v781
        %893 = vmatpush.bf16.msra.mxu0 %v775
        %894 = vmatpush.bf16.msra.mxu0 %v769
        %895 = vmatpush.bf16.msra.mxu0 %v763
        %896 = vmatpush.bf16.msra.mxu0 %v757
        %897 = vmatmul.bf16.gmra.mxu0 %v530
        %v898 = vpop.f32.mrf.mxu0
        %v899 = vadd.f32 %v601, %v898
        %v900 = vpop.f32.mrf.mxu0
        %901 = vdwg.mxu0
        %902 = vmatpush.bf16.msra.mxu0 %v800
        %903 = vmatpush.bf16.msra.mxu0 %v794
        %904 = vmatpush.bf16.msra.mxu0 %v788
        %905 = vmatpush.bf16.msra.mxu0 %v782
        %906 = vmatpush.bf16.msra.mxu0 %v776
        %907 = vmatpush.bf16.msra.mxu0 %v770
        %908 = vmatpush.bf16.msra.mxu0 %v764
        %909 = vmatpush.bf16.msra.mxu0 %v758
        %910 = vmatmul.bf16.gmra.mxu0 %v530
        %v911 = vpop.f32.mrf.mxu0
        %v912 = vadd.f32 %v602, %v911
        %v913 = vpop.f32.mrf.mxu0
        %914 = vdwg.mxu0
        %915 = vmatpush.bf16.msra.mxu0 %v801
        %916 = vmatpush.bf16.msra.mxu0 %v795
        %917 = vmatpush.bf16.msra.mxu0 %v789
        %918 = vmatpush.bf16.msra.mxu0 %v783
        %919 = vmatpush.bf16.msra.mxu0 %v777
        %920 = vmatpush.bf16.msra.mxu0 %v771
        %921 = vmatpush.bf16.msra.mxu0 %v765
        %922 = vmatpush.bf16.msra.mxu0 %v759
        %923 = vmatmul.bf16.gmra.mxu0 %v530
        %v924 = vpop.f32.mrf.mxu0
        %v925 = vadd.f32 %v603, %v924
        %v926 = vpop.f32.mrf.mxu0
        %927 = vdwg.mxu0
        %v928 = vld [vmem:[%s437] sm:$0xf]
        %v929 = vld [vmem:[%s437 + $0x4] sm:$0xf]
        %v930 = vld [vmem:[%s437 + $0x8] sm:$0xf]
        %v931 = vld [vmem:[%s437 + $0xc] sm:$0xf]
        %v932 = vld [vmem:[%s437 + $0x10] sm:$0xf]
        %v933 = vld [vmem:[%s437 + $0x14] sm:$0xf]
        %v934 = vld [vmem:[%s437 + $0x18] sm:$0xf]
        %v935 = vld [vmem:[%s437 + $0x1c] sm:$0xf]
        %v936 = vld [vmem:[%s437 + $0x20] sm:$0xf]
        %v937 = vld [vmem:[%s437 + $0x24] sm:$0xf]
        %v938 = vld [vmem:[%s437 + $0x28] sm:$0xf]
        %v939 = vld [vmem:[%s437 + $0x2c] sm:$0xf]
        %v940 = vld [vmem:[%s437 + $0x30] sm:$0xf]
        %v941 = vld [vmem:[%s437 + $0x34] sm:$0xf]
        %v942 = vld [vmem:[%s437 + $0x38] sm:$0xf]
        %v943 = vld [vmem:[%s437 + $0x3c] sm:$0xf]
        %v944 = vpack.c.bf16 %v860, %v860
        %v946 = vrot.slane %v944, 3
        %vm947 = vcmask 1040384
        %v950 = vsel %vm947, %v944, %v946
        %vm952 = vcmask 1041409
        %v953 = vsel %vm952, %v944, %v946
        %v955 = vrot.slane %v953, 1
        %vm956 = vcmask 1042434
        %v957 = vsel %vm956, %v944, %v946
        %v959 = vrot.slane %v957, 2
        %vm960 = vcmask 1043459
        %v961 = vsel %vm960, %v944, %v946
        %v963 = vrot.slane %v961, 3
        %v964 = vunpack.i.l.s16 %v950
        %v965 = vunpack.i.h.s16 %v950
        %v966 = vunpack.i.l.s16 %v955
        %v967 = vunpack.i.h.s16 %v955
        %v968 = vunpack.i.l.s16 %v959
        %v969 = vunpack.i.h.s16 %v959
        %v970 = vunpack.i.l.s16 %v963
        %v971 = vunpack.i.h.s16 %v963
        %v972 = vpack.i.b16 %v964, %v964
        %v973 = vpack.i.b16 %v965, %v965
        %v974 = vpack.i.b16 %v966, %v966
        %v975 = vpack.i.b16 %v967, %v967
        %v976 = vpack.i.b16 %v968, %v968
        %v977 = vpack.i.b16 %v969, %v969
        %v978 = vpack.i.b16 %v970, %v970
        %v979 = vpack.i.b16 %v971, %v971
        %v980 = vperm.slane %v972, 0
        %v981 = vperm.slane %v973, 0
        %v982 = vperm.slane %v974, 0
        %v983 = vperm.slane %v975, 0
        %v984 = vperm.slane %v976, 0
        %v985 = vperm.slane %v977, 0
        %v986 = vperm.slane %v978, 0
        %v987 = vperm.slane %v979, 0
        %v989 = vpack.i.b16 %v980, %v980
        %v991 = vperm.slane %v989, 0
        %v993 = vpack.i.b16 %v981, %v981
        %v995 = vperm.slane %v993, 0
        %v997 = vpack.i.b16 %v982, %v982
        %v999 = vperm.slane %v997, 0
        %v1001 = vpack.i.b16 %v983, %v983
        %v1003 = vperm.slane %v1001, 0
        %v1005 = vpack.i.b16 %v984, %v984
        %v1007 = vperm.slane %v1005, 0
        %v1009 = vpack.i.b16 %v985, %v985
        %v1011 = vperm.slane %v1009, 0
        %v1013 = vpack.i.b16 %v986, %v986
        %v1015 = vperm.slane %v1013, 0
        %v1017 = vpack.i.b16 %v987, %v987
        %v1019 = vperm.slane %v1017, 0
        %v1020 = vunpack.c.l.bf16 %v928
        %v1021 = vunpack.c.l.bf16 %v929
        %v1022 = vunpack.c.l.bf16 %v930
        %v1023 = vunpack.c.l.bf16 %v931
        %v1024 = vunpack.c.l.bf16 %v932
        %v1025 = vunpack.c.l.bf16 %v933
        %v1026 = vunpack.c.l.bf16 %v934
        %v1027 = vunpack.c.l.bf16 %v935
        %v1028 = vunpack.c.l.bf16 %v936
        %v1029 = vunpack.c.l.bf16 %v937
        %v1030 = vunpack.c.l.bf16 %v938
        %v1031 = vunpack.c.l.bf16 %v939
        %v1032 = vunpack.c.l.bf16 %v940
        %v1033 = vunpack.c.l.bf16 %v941
        %v1034 = vunpack.c.l.bf16 %v942
        %v1035 = vunpack.c.l.bf16 %v943
        %v1036 = vunpack.c.l.bf16 %v991
        %v1037 = vunpack.c.l.bf16 %v995
        %v1038 = vunpack.c.l.bf16 %v999
        %v1039 = vunpack.c.l.bf16 %v1003
        %v1040 = vunpack.c.l.bf16 %v1007
        %v1041 = vunpack.c.l.bf16 %v1011
        %v1042 = vunpack.c.l.bf16 %v1015
        %v1043 = vunpack.c.l.bf16 %v1019
        %v1044 = vadd.f32 %v1020, %v1036
        %v1045 = vadd.f32 %v1021, %v1036
        %v1046 = vadd.f32 %v1022, %v1037
        %v1047 = vadd.f32 %v1023, %v1037
        %v1048 = vadd.f32 %v1024, %v1038
        %v1049 = vadd.f32 %v1025, %v1038
        %v1050 = vadd.f32 %v1026, %v1039
        %v1051 = vadd.f32 %v1027, %v1039
        %v1052 = vadd.f32 %v1028, %v1040
        %v1053 = vadd.f32 %v1029, %v1040
        %v1054 = vadd.f32 %v1030, %v1041
        %v1055 = vadd.f32 %v1031, %v1041
        %v1056 = vadd.f32 %v1032, %v1042
        %v1057 = vadd.f32 %v1033, %v1042
        %v1058 = vadd.f32 %v1034, %v1043
        %v1059 = vadd.f32 %v1035, %v1043
        %v1060 = vpack.c.bf16 %v1044, %v1044
        %v1061 = vpack.c.bf16 %v1045, %v1045
        %v1062 = vpack.c.bf16 %v1046, %v1046
        %v1063 = vpack.c.bf16 %v1047, %v1047
        %v1064 = vpack.c.bf16 %v1048, %v1048
        %v1065 = vpack.c.bf16 %v1049, %v1049
        %v1066 = vpack.c.bf16 %v1050, %v1050
        %v1067 = vpack.c.bf16 %v1051, %v1051
        %v1068 = vpack.c.bf16 %v1052, %v1052
        %v1069 = vpack.c.bf16 %v1053, %v1053
        %v1070 = vpack.c.bf16 %v1054, %v1054
        %v1071 = vpack.c.bf16 %v1055, %v1055
        %v1072 = vpack.c.bf16 %v1056, %v1056
        %v1073 = vpack.c.bf16 %v1057, %v1057
        %v1074 = vpack.c.bf16 %v1058, %v1058
        %v1075 = vpack.c.bf16 %v1059, %v1059
        %v1076 = vunpack.c.l.bf16 %v1060
        %v1077 = vunpack.c.l.bf16 %v1061
        %v1078 = vunpack.c.l.bf16 %v1062
        %v1079 = vunpack.c.l.bf16 %v1063
        %v1080 = vunpack.c.l.bf16 %v1064
        %v1081 = vunpack.c.l.bf16 %v1065
        %v1082 = vunpack.c.l.bf16 %v1066
        %v1083 = vunpack.c.l.bf16 %v1067
        %v1084 = vunpack.c.l.bf16 %v1068
        %v1085 = vunpack.c.l.bf16 %v1069
        %v1086 = vunpack.c.l.bf16 %v1070
        %v1087 = vunpack.c.l.bf16 %v1071
        %v1088 = vunpack.c.l.bf16 %v1072
        %v1089 = vunpack.c.l.bf16 %v1073
        %v1090 = vunpack.c.l.bf16 %v1074
        %v1091 = vunpack.c.l.bf16 %v1075
        %v1092 = vmax.f32 %v1076, 0.0
        %v1093 = vmax.f32 %v1077, 0.0
        %v1094 = vmax.f32 %v1078, 0.0
        %v1095 = vmax.f32 %v1079, 0.0
        %v1096 = vmax.f32 %v1080, 0.0
        %v1097 = vmax.f32 %v1081, 0.0
        %v1098 = vmax.f32 %v1082, 0.0
        %v1099 = vmax.f32 %v1083, 0.0
        %v1100 = vmax.f32 %v1084, 0.0
        %v1101 = vmax.f32 %v1085, 0.0
        %v1102 = vmax.f32 %v1086, 0.0
        %v1103 = vmax.f32 %v1087, 0.0
        %v1104 = vmax.f32 %v1088, 0.0
        %v1105 = vmax.f32 %v1089, 0.0
        %v1106 = vmax.f32 %v1090, 0.0
        %v1107 = vmax.f32 %v1091, 0.0
        %v1108 = vpack.c.bf16 %v1092, %v1092
        %v1109 = vpack.c.bf16 %v1093, %v1093
        %v1110 = vpack.c.bf16 %v1094, %v1094
        %v1111 = vpack.c.bf16 %v1095, %v1095
        %v1112 = vpack.c.bf16 %v1096, %v1096
        %v1113 = vpack.c.bf16 %v1097, %v1097
        %v1114 = vpack.c.bf16 %v1098, %v1098
        %v1115 = vpack.c.bf16 %v1099, %v1099
        %v1116 = vpack.c.bf16 %v1100, %v1100
        %v1117 = vpack.c.bf16 %v1101, %v1101
        %v1118 = vpack.c.bf16 %v1102, %v1102
        %v1119 = vpack.c.bf16 %v1103, %v1103
        %v1120 = vpack.c.bf16 %v1104, %v1104
        %v1121 = vpack.c.bf16 %v1105, %v1105
        %v1122 = vpack.c.bf16 %v1106, %v1106
        %v1123 = vpack.c.bf16 %v1107, %v1107
        %v1124 = vld [vmem:[%s7] sm:$0xf]
        %v1125 = vld [vmem:[%s7 + $0x4] sm:$0xf]
        %v1126 = vld [vmem:[%s7 + $0x8] sm:$0xf]
        %v1127 = vld [vmem:[%s7 + $0xc] sm:$0xf]
        %v1128 = vld [vmem:[%s7 + $0x10] sm:$0xf]
        %v1129 = vld [vmem:[%s7 + $0x14] sm:$0xf]
        %v1130 = vld [vmem:[%s7 + $0x18] sm:$0xf]
        %v1131 = vld [vmem:[%s7 + $0x1c] sm:$0xf]
        %v1132 = vld [vmem:[%s7 + $0x20] sm:$0xf]
        %v1133 = vld [vmem:[%s7 + $0x24] sm:$0xf]
        %v1134 = vld [vmem:[%s7 + $0x28] sm:$0xf]
        %v1135 = vld [vmem:[%s7 + $0x2c] sm:$0xf]
        %v1136 = vld [vmem:[%s7 + $0x30] sm:$0xf]
        %v1137 = vld [vmem:[%s7 + $0x34] sm:$0xf]
        %v1138 = vld [vmem:[%s7 + $0x38] sm:$0xf]
        %v1139 = vld [vmem:[%s7 + $0x3c] sm:$0xf]
        %v1156 = vunpack.c.l.b16 %v1108
        %v1157 = vunpack.c.l.b16 %v1109
        %v1158 = vunpack.c.l.b16 %v1110
        %v1159 = vunpack.c.l.b16 %v1111
        %v1160 = vunpack.c.l.b16 %v1112
        %v1161 = vunpack.c.l.b16 %v1113
        %v1162 = vunpack.c.l.b16 %v1114
        %v1163 = vunpack.c.l.b16 %v1115
        %v1164 = vunpack.c.l.b16 %v1116
        %v1165 = vunpack.c.l.b16 %v1117
        %v1166 = vunpack.c.l.b16 %v1118
        %v1167 = vunpack.c.l.b16 %v1119
        %v1168 = vunpack.c.l.b16 %v1120
        %v1169 = vunpack.c.l.b16 %v1121
        %v1170 = vunpack.c.l.b16 %v1122
        %v1171 = vunpack.c.l.b16 %v1123
        %v1172 = vpack.c.b16 %v1157, %v1156
        %v1173 = vpack.c.b16 %v1159, %v1158
        %v1174 = vpack.c.b16 %v1161, %v1160
        %v1175 = vpack.c.b16 %v1163, %v1162
        %v1176 = vpack.c.b16 %v1165, %v1164
        %v1177 = vpack.c.b16 %v1167, %v1166
        %v1178 = vpack.c.b16 %v1169, %v1168
        %v1179 = vpack.c.b16 %v1171, %v1170
        %v1204 = vunpack.c.l.b16 %v1124
        %v1205 = vunpack.c.l.b16 %v1125
        %v1206 = vunpack.c.l.b16 %v1126
        %v1207 = vunpack.c.l.b16 %v1127
        %v1208 = vunpack.c.l.b16 %v1128
        %v1209 = vunpack.c.l.b16 %v1129
        %v1210 = vunpack.c.l.b16 %v1130
        %v1211 = vunpack.c.l.b16 %v1131
        %v1212 = vunpack.c.l.b16 %v1132
        %v1213 = vunpack.c.l.b16 %v1133
        %v1214 = vunpack.c.l.b16 %v1134
        %v1215 = vunpack.c.l.b16 %v1135
        %v1216 = vunpack.c.l.b16 %v1136
        %v1217 = vunpack.c.l.b16 %v1137
        %v1218 = vunpack.c.l.b16 %v1138
        %v1219 = vunpack.c.l.b16 %v1139
        %v1220 = vpack.c.b16 %v1205, %v1204
        %v1221 = vpack.c.b16 %v1207, %v1206
        %v1222 = vpack.c.b16 %v1209, %v1208
        %v1223 = vpack.c.b16 %v1211, %v1210
        %v1224 = vpack.c.b16 %v1213, %v1212
        %v1225 = vpack.c.b16 %v1215, %v1214
        %v1226 = vpack.c.b16 %v1217, %v1216
        %v1227 = vpack.c.b16 %v1219, %v1218
        %1236 = vmatpush.bf16.msra.mxu0 %v1227
        %1237 = vmatpush.bf16.msra.mxu0 %v1226
        %1238 = vmatpush.bf16.msra.mxu0 %v1225
        %1239 = vmatpush.bf16.msra.mxu0 %v1224
        %1240 = vmatpush.bf16.msra.mxu0 %v1223
        %1241 = vmatpush.bf16.msra.mxu0 %v1222
        %1242 = vmatpush.bf16.msra.mxu0 %v1221
        %1243 = vmatpush.bf16.msra.mxu0 %v1220
        %1244 = vmatmul.bf16.gmra.mxu0 %v1172
        %v1245 = vpop.f32.mrf.mxu0
        %v1246 = vadd.f32 0.0, %v1245
        %v1247 = vpop.f32.mrf.mxu0
        %v1248 = vadd.f32 0.0, %v1247
        %1249 = vmatmul.bf16.gmra.mxu0 %v1173
        %v1250 = vpop.f32.mrf.mxu0
        %v1251 = vadd.f32 0.0, %v1250
        %v1252 = vpop.f32.mrf.mxu0
        %v1253 = vadd.f32 0.0, %v1252
        %1254 = vmatmul.bf16.gmra.mxu0 %v1174
        %v1255 = vpop.f32.mrf.mxu0
        %v1256 = vadd.f32 0.0, %v1255
        %v1257 = vpop.f32.mrf.mxu0
        %v1258 = vadd.f32 0.0, %v1257
        %1259 = vmatmul.bf16.gmra.mxu0 %v1175
        %v1260 = vpop.f32.mrf.mxu0
        %v1261 = vadd.f32 0.0, %v1260
        %v1262 = vpop.f32.mrf.mxu0
        %v1263 = vadd.f32 0.0, %v1262
        %1264 = vmatmul.bf16.gmra.mxu0 %v1176
        %v1265 = vpop.f32.mrf.mxu0
        %v1266 = vadd.f32 0.0, %v1265
        %v1267 = vpop.f32.mrf.mxu0
        %v1268 = vadd.f32 0.0, %v1267
        %1269 = vmatmul.bf16.gmra.mxu0 %v1177
        %v1270 = vpop.f32.mrf.mxu0
        %v1271 = vadd.f32 0.0, %v1270
        %v1272 = vpop.f32.mrf.mxu0
        %v1273 = vadd.f32 0.0, %v1272
        %1274 = vmatmul.bf16.gmra.mxu0 %v1178
        %v1275 = vpop.f32.mrf.mxu0
        %v1276 = vadd.f32 0.0, %v1275
        %v1277 = vpop.f32.mrf.mxu0
        %v1278 = vadd.f32 0.0, %v1277
        %1279 = vmatmul.bf16.gmra.mxu0 %v1179
        %v1280 = vpop.f32.mrf.mxu0
        %v1281 = vadd.f32 0.0, %v1280
        %v1282 = vpop.f32.mrf.mxu0
        %v1283 = vadd.f32 0.0, %v1282
        %1284 = vdwg.mxu0
        %1301 = vset.pattern.permute.xlu0 0
        %1302 = vperm.xlu0 %1301, %v1246
        %v1303 = vpop.permute.xlu0 %1302
        %1304 = vset.pattern.permute.xlu0 0
        %1305 = vperm.xlu0 %1304, %v1248
        %v1306 = vpop.permute.xlu0 %1305
        %1307 = vset.pattern.permute.xlu0 0
        %1308 = vperm.xlu0 %1307, %v1251
        %v1309 = vpop.permute.xlu0 %1308
        %1310 = vset.pattern.permute.xlu0 0
        %1311 = vperm.xlu0 %1310, %v1253
        %v1312 = vpop.permute.xlu0 %1311
        %1313 = vset.pattern.permute.xlu0 0
        %1314 = vperm.xlu0 %1313, %v1256
        %v1315 = vpop.permute.xlu0 %1314
        %1316 = vset.pattern.permute.xlu0 0
        %1317 = vperm.xlu0 %1316, %v1258
        %v1318 = vpop.permute.xlu0 %1317
        %1319 = vset.pattern.permute.xlu0 0
        %1320 = vperm.xlu0 %1319, %v1261
        %v1321 = vpop.permute.xlu0 %1320
        %1322 = vset.pattern.permute.xlu0 0
        %1323 = vperm.xlu0 %1322, %v1263
        %v1324 = vpop.permute.xlu0 %1323
        %1325 = vset.pattern.permute.xlu0 0
        %1326 = vperm.xlu0 %1325, %v1266
        %v1327 = vpop.permute.xlu0 %1326
        %1328 = vset.pattern.permute.xlu0 0
        %1329 = vperm.xlu0 %1328, %v1268
        %v1330 = vpop.permute.xlu0 %1329
        %1331 = vset.pattern.permute.xlu0 0
        %1332 = vperm.xlu0 %1331, %v1271
        %v1333 = vpop.permute.xlu0 %1332
        %1334 = vset.pattern.permute.xlu0 0
        %1335 = vperm.xlu0 %1334, %v1273
        %v1336 = vpop.permute.xlu0 %1335
        %1337 = vset.pattern.permute.xlu0 0
        %1338 = vperm.xlu0 %1337, %v1276
        %v1339 = vpop.permute.xlu0 %1338
        %1340 = vset.pattern.permute.xlu0 0
        %1341 = vperm.xlu0 %1340, %v1278
        %v1342 = vpop.permute.xlu0 %1341
        %1343 = vset.pattern.permute.xlu0 0
        %1344 = vperm.xlu0 %1343, %v1281
        %v1345 = vpop.permute.xlu0 %1344
        %1346 = vset.pattern.permute.xlu0 0
        %1347 = vperm.xlu0 %1346, %v1283
        %v1348 = vpop.permute.xlu0 %1347
        %v1349 = vlaneseq
        %v1350 = vand.u32 %v1349, 127
        %v1351 = vperm.slane %v1303, %v1350
        %v1352 = vadd.s32 %v1350, 4294967288
        %v1353 = vperm.slane %v1306, %v1352
        %vm1354 = vcmask 130112
        %v1355 = vsel %vm1354, %v1353, %v1351
        %v1356 = vperm.slane %v1309, %v1350
        %v1357 = vperm.slane %v1312, %v1352
        %v1358 = vsel %vm1354, %v1357, %v1356
        %v1359 = vperm.slane %v1315, %v1350
        %v1360 = vperm.slane %v1318, %v1352
        %v1361 = vsel %vm1354, %v1360, %v1359
        %v1362 = vperm.slane %v1321, %v1350
        %v1363 = vperm.slane %v1324, %v1352
        %v1364 = vsel %vm1354, %v1363, %v1362
        %v1365 = vperm.slane %v1327, %v1350
        %v1366 = vperm.slane %v1330, %v1352
        %v1367 = vsel %vm1354, %v1366, %v1365
        %v1368 = vperm.slane %v1333, %v1350
        %v1369 = vperm.slane %v1336, %v1352
        %v1370 = vsel %vm1354, %v1369, %v1368
        %v1371 = vperm.slane %v1339, %v1350
        %v1372 = vperm.slane %v1342, %v1352
        %v1373 = vsel %vm1354, %v1372, %v1371
        %v1374 = vperm.slane %v1345, %v1350
        %v1375 = vperm.slane %v1348, %v1352
        %v1376 = vsel %vm1354, %v1375, %v1374
        %v1377 = vsel %vm952, %v1358, %v1355
        %v1378 = vsel %vm956, %v1361, %v1377
        %v1379 = vsel %vm960, %v1364, %v1378
        %vm1380 = vcmask 1044484
        %v1381 = vsel %vm1380, %v1367, %v1379
        %vm1382 = vcmask 1045509
        %v1383 = vsel %vm1382, %v1370, %v1381
        %vm1384 = vcmask 1046534
        %v1385 = vsel %vm1384, %v1373, %v1383
        %vm1386 = vcmask 1047559
        %v1387 = vsel %vm1386, %v1376, %v1385
        %vm1389 = vcmask 130048
        %v1390 = vsel %vm1389, %v1387, -inf
        %1391 = vmax.xlane.f32.xlu0 %v1390
        %v1392 = vpop.xlane.xlu0 %1391
        %v1394 = vperm.slane %v1392, 0
        %v1395 = vperm.slane %v1392, 1
        %v1396 = vperm.slane %v1392, 2
        %v1397 = vperm.slane %v1392, 3
        %v1398 = vperm.slane %v1392, 4
        %v1399 = vperm.slane %v1392, 5
        %v1400 = vperm.slane %v1392, 6
        %v1401 = vperm.slane %v1392, 7
        %v1410 = vsub.f32 %v1246, %v1394
        %v1411 = vsub.f32 %v1248, %v1394
        %v1412 = vsub.f32 %v1251, %v1395
        %v1413 = vsub.f32 %v1253, %v1395
        %v1414 = vsub.f32 %v1256, %v1396
        %v1415 = vsub.f32 %v1258, %v1396
        %v1416 = vsub.f32 %v1261, %v1397
        %v1417 = vsub.f32 %v1263, %v1397
        %v1418 = vsub.f32 %v1266, %v1398
        %v1419 = vsub.f32 %v1268, %v1398
        %v1420 = vsub.f32 %v1271, %v1399
        %v1421 = vsub.f32 %v1273, %v1399
        %v1422 = vsub.f32 %v1276, %v1400
        %v1423 = vsub.f32 %v1278, %v1400
        %v1424 = vsub.f32 %v1281, %v1401
        %v1425 = vsub.f32 %v1283, %v1401
        %v1426 = vmul.f32 %v1410, 1.442695
        %v1427 = vpow.pop %v1426
        %v1428 = vmul.f32 %v1411, 1.442695
        %v1429 = vpow.pop %v1428
        %v1430 = vmul.f32 %v1412, 1.442695
        %v1431 = vpow.pop %v1430
        %v1432 = vmul.f32 %v1413, 1.442695
        %v1433 = vpow.pop %v1432
        %v1434 = vmul.f32 %v1414, 1.442695
        %v1435 = vpow.pop %v1434
        %v1436 = vmul.f32 %v1415, 1.442695
        %v1437 = vpow.pop %v1436
        %v1438 = vmul.f32 %v1416, 1.442695
        %v1439 = vpow.pop %v1438
        %v1440 = vmul.f32 %v1417, 1.442695
        %v1441 = vpow.pop %v1440
        %v1442 = vmul.f32 %v1418, 1.442695
        %v1443 = vpow.pop %v1442
        %v1444 = vmul.f32 %v1419, 1.442695
        %v1445 = vpow.pop %v1444
        %v1446 = vmul.f32 %v1420, 1.442695
        %v1447 = vpow.pop %v1446
        %v1448 = vmul.f32 %v1421, 1.442695
        %v1449 = vpow.pop %v1448
        %v1450 = vmul.f32 %v1422, 1.442695
        %v1451 = vpow.pop %v1450
        %v1452 = vmul.f32 %v1423, 1.442695
        %v1453 = vpow.pop %v1452
        %v1454 = vmul.f32 %v1424, 1.442695
        %v1455 = vpow.pop %v1454
        %v1456 = vmul.f32 %v1425, 1.442695
        %v1457 = vpow.pop %v1456
        %1474 = vset.pattern.permute.xlu0 0
        %1475 = vperm.xlu0 %1474, %v1427
        %v1476 = vpop.permute.xlu0 %1475
        %1477 = vset.pattern.permute.xlu0 0
        %1478 = vperm.xlu0 %1477, %v1429
        %v1479 = vpop.permute.xlu0 %1478
        %1480 = vset.pattern.permute.xlu0 0
        %1481 = vperm.xlu0 %1480, %v1431
        %v1482 = vpop.permute.xlu0 %1481
        %1483 = vset.pattern.permute.xlu0 0
        %1484 = vperm.xlu0 %1483, %v1433
        %v1485 = vpop.permute.xlu0 %1484
        %1486 = vset.pattern.permute.xlu0 0
        %1487 = vperm.xlu0 %1486, %v1435
        %v1488 = vpop.permute.xlu0 %1487
        %1489 = vset.pattern.permute.xlu0 0
        %1490 = vperm.xlu0 %1489, %v1437
        %v1491 = vpop.permute.xlu0 %1490
        %1492 = vset.pattern.permute.xlu0 0
        %1493 = vperm.xlu0 %1492, %v1439
        %v1494 = vpop.permute.xlu0 %1493
        %1495 = vset.pattern.permute.xlu0 0
        %1496 = vperm.xlu0 %1495, %v1441
        %v1497 = vpop.permute.xlu0 %1496
        %1498 = vset.pattern.permute.xlu0 0
        %1499 = vperm.xlu0 %1498, %v1443
        %v1500 = vpop.permute.xlu0 %1499
        %1501 = vset.pattern.permute.xlu0 0
        %1502 = vperm.xlu0 %1501, %v1445
        %v1503 = vpop.permute.xlu0 %1502
        %1504 = vset.pattern.permute.xlu0 0
        %1505 = vperm.xlu0 %1504, %v1447
        %v1506 = vpop.permute.xlu0 %1505
        %1507 = vset.pattern.permute.xlu0 0
        %1508 = vperm.xlu0 %1507, %v1449
        %v1509 = vpop.permute.xlu0 %1508
        %1510 = vset.pattern.permute.xlu0 0
        %1511 = vperm.xlu0 %1510, %v1451
        %v1512 = vpop.permute.xlu0 %1511
        %1513 = vset.pattern.permute.xlu0 0
        %1514 = vperm.xlu0 %1513, %v1453
        %v1515 = vpop.permute.xlu0 %1514
        %1516 = vset.pattern.permute.xlu0 0
        %1517 = vperm.xlu0 %1516, %v1455
        %v1518 = vpop.permute.xlu0 %1517
        %1519 = vset.pattern.permute.xlu0 0
        %1520 = vperm.xlu0 %1519, %v1457
        %v1521 = vpop.permute.xlu0 %1520
        %v1522 = vperm.slane %v1476, %v1350
        %v1523 = vperm.slane %v1479, %v1352
        %v1524 = vsel %vm1354, %v1523, %v1522
        %v1525 = vperm.slane %v1482, %v1350
        %v1526 = vperm.slane %v1485, %v1352
        %v1527 = vsel %vm1354, %v1526, %v1525
        %v1528 = vperm.slane %v1488, %v1350
        %v1529 = vperm.slane %v1491, %v1352
        %v1530 = vsel %vm1354, %v1529, %v1528
        %v1531 = vperm.slane %v1494, %v1350
        %v1532 = vperm.slane %v1497, %v1352
        %v1533 = vsel %vm1354, %v1532, %v1531
        %v1534 = vperm.slane %v1500, %v1350
        %v1535 = vperm.slane %v1503, %v1352
        %v1536 = vsel %vm1354, %v1535, %v1534
        %v1537 = vperm.slane %v1506, %v1350
        %v1538 = vperm.slane %v1509, %v1352
        %v1539 = vsel %vm1354, %v1538, %v1537
        %v1540 = vperm.slane %v1512, %v1350
        %v1541 = vperm.slane %v1515, %v1352
        %v1542 = vsel %vm1354, %v1541, %v1540
        %v1543 = vperm.slane %v1518, %v1350
        %v1544 = vperm.slane %v1521, %v1352
        %v1545 = vsel %vm1354, %v1544, %v1543
        %v1546 = vsel %vm952, %v1527, %v1524
        %v1547 = vsel %vm956, %v1530, %v1546
        %v1548 = vsel %vm960, %v1533, %v1547
        %v1549 = vsel %vm1380, %v1536, %v1548
        %v1550 = vsel %vm1382, %v1539, %v1549
        %v1551 = vsel %vm1384, %v1542, %v1550
        %v1552 = vsel %vm1386, %v1545, %v1551
        %v1554 = vsel %vm1389, %v1552, 0.0
        %1555 = vadd.xlane.f32.xlu0 %v1554
        %v1556 = vpop.xlane.xlu0 %1555
        %v1557 = vrcp.pop %v1556
        %v1559 = vperm.slane %v1557, 0
        %v1560 = vperm.slane %v1557, 1
        %v1561 = vperm.slane %v1557, 2
        %v1562 = vperm.slane %v1557, 3
        %v1563 = vperm.slane %v1557, 4
        %v1564 = vperm.slane %v1557, 5
        %v1565 = vperm.slane %v1557, 6
        %v1566 = vperm.slane %v1557, 7
        %v1575 = vmul.f32 %v1427, %v1559
        %v1576 = vmul.f32 %v1429, %v1559
        %v1577 = vmul.f32 %v1431, %v1560
        %v1578 = vmul.f32 %v1433, %v1560
        %v1579 = vmul.f32 %v1435, %v1561
        %v1580 = vmul.f32 %v1437, %v1561
        %v1581 = vmul.f32 %v1439, %v1562
        %v1582 = vmul.f32 %v1441, %v1562
        %v1583 = vmul.f32 %v1443, %v1563
        %v1584 = vmul.f32 %v1445, %v1563
        %v1585 = vmul.f32 %v1447, %v1564
        %v1586 = vmul.f32 %v1449, %v1564
        %v1587 = vmul.f32 %v1451, %v1565
        %v1588 = vmul.f32 %v1453, %v1565
        %v1589 = vmul.f32 %v1455, %v1566
        %v1590 = vmul.f32 %v1457, %v1566
        %v1591 = vpack.c.bf16 %v1575, %v1575
        %v1592 = vpack.c.bf16 %v1576, %v1576
        %v1593 = vpack.c.bf16 %v1577, %v1577
        %v1594 = vpack.c.bf16 %v1578, %v1578
        %v1595 = vpack.c.bf16 %v1579, %v1579
        %v1596 = vpack.c.bf16 %v1580, %v1580
        %v1597 = vpack.c.bf16 %v1581, %v1581
        %v1598 = vpack.c.bf16 %v1582, %v1582
        %v1599 = vpack.c.bf16 %v1583, %v1583
        %v1600 = vpack.c.bf16 %v1584, %v1584
        %v1601 = vpack.c.bf16 %v1585, %v1585
        %v1602 = vpack.c.bf16 %v1586, %v1586
        %v1603 = vpack.c.bf16 %v1587, %v1587
        %v1604 = vpack.c.bf16 %v1588, %v1588
        %v1605 = vpack.c.bf16 %v1589, %v1589
        %v1606 = vpack.c.bf16 %v1590, %v1590
        %v1609 = vunpack.c.l.b16 %v1591
        %v1610 = vunpack.c.l.b16 %v1592
        %v1611 = vpack.c.b16 %v1610, %v1609
        %v1612 = vunpack.c.l.b16 %v1611
        %v1613 = vunpack.c.h.b16 %v1611
        %1614 = vset.pattern.permute.xlu0 0
        %1615 = vperm.xlu0 %1614, %v1612
        %v1616 = vpop.permute.xlu0 %1615
        %1617 = vset.pattern.permute.xlu0 0
        %1618 = vperm.xlu0 %1617, %v1613
        %v1619 = vpop.permute.xlu0 %1618
        %v1620 = vperm.slane %v1616, %v1350
        %v1621 = vperm.slane %v1619, %v1352
        %v1622 = vsel %vm1354, %v1621, %v1620
        %v1623 = vpack.c.b16 %v1622, %v1622
        %v1626 = vunpack.c.l.b16 %v532
        %v1627 = vunpack.c.l.b16 %v533
        %v1628 = vpack.c.b16 %v1627, %v1626
        %v1631 = vsel %vm1389, %v1623, 0
        %1633 = vmatpush.bf16.msra.mxu0 0
        %1634 = vmatpush.bf16.msra.mxu0 0
        %1635 = vmatpush.bf16.msra.mxu0 0
        %1636 = vmatpush.bf16.msra.mxu0 0
        %1637 = vmatpush.bf16.msra.mxu0 0
        %1638 = vmatpush.bf16.msra.mxu0 0
        %1639 = vmatpush.bf16.msra.mxu0 0
        %1640 = vmatpush.bf16.msra.mxu0 %v1628
        %1641 = vmatmul.bf16.gmra.mxu0 %v1631
        %v1642 = vpop.f32.mrf.mxu0
        %v1643 = vadd.f32 0.0, %v1642
        %v1644 = vpop.f32.mrf.mxu0
        %1645 = vdwg.mxu0
        %v1648 = vunpack.c.l.b16 %v1593
        %v1649 = vunpack.c.l.b16 %v1594
        %v1650 = vpack.c.b16 %v1649, %v1648
        %v1651 = vunpack.c.l.b16 %v1650
        %v1652 = vunpack.c.h.b16 %v1650
        %1653 = vset.pattern.permute.xlu0 0
        %1654 = vperm.xlu0 %1653, %v1651
        %v1655 = vpop.permute.xlu0 %1654
        %1656 = vset.pattern.permute.xlu0 0
        %1657 = vperm.xlu0 %1656, %v1652
        %v1658 = vpop.permute.xlu0 %1657
        %v1659 = vperm.slane %v1655, %v1350
        %v1660 = vperm.slane %v1658, %v1352
        %v1661 = vsel %vm1354, %v1660, %v1659
        %v1662 = vpack.c.b16 %v1661, %v1661
        %v1665 = vunpack.c.l.b16 %v534
        %v1666 = vunpack.c.l.b16 %v535
        %v1667 = vpack.c.b16 %v1666, %v1665
        %v1670 = vsel %vm1389, %v1662, 0
        %1672 = vmatpush.bf16.msra.mxu0 0
        %1673 = vmatpush.bf16.msra.mxu0 0
        %1674 = vmatpush.bf16.msra.mxu0 0
        %1675 = vmatpush.bf16.msra.mxu0 0
        %1676 = vmatpush.bf16.msra.mxu0 0
        %1677 = vmatpush.bf16.msra.mxu0 0
        %1678 = vmatpush.bf16.msra.mxu0 0
        %1679 = vmatpush.bf16.msra.mxu0 %v1667
        %1680 = vmatmul.bf16.gmra.mxu0 %v1670
        %v1681 = vpop.f32.mrf.mxu0
        %v1682 = vadd.f32 0.0, %v1681
        %v1683 = vpop.f32.mrf.mxu0
        %1684 = vdwg.mxu0
        %v1687 = vunpack.c.l.b16 %v1595
        %v1688 = vunpack.c.l.b16 %v1596
        %v1689 = vpack.c.b16 %v1688, %v1687
        %v1690 = vunpack.c.l.b16 %v1689
        %v1691 = vunpack.c.h.b16 %v1689
        %1692 = vset.pattern.permute.xlu0 0
        %1693 = vperm.xlu0 %1692, %v1690
        %v1694 = vpop.permute.xlu0 %1693
        %1695 = vset.pattern.permute.xlu0 0
        %1696 = vperm.xlu0 %1695, %v1691
        %v1697 = vpop.permute.xlu0 %1696
        %v1698 = vperm.slane %v1694, %v1350
        %v1699 = vperm.slane %v1697, %v1352
        %v1700 = vsel %vm1354, %v1699, %v1698
        %v1701 = vpack.c.b16 %v1700, %v1700
        %v1704 = vunpack.c.l.b16 %v536
        %v1705 = vunpack.c.l.b16 %v537
        %v1706 = vpack.c.b16 %v1705, %v1704
        %v1709 = vsel %vm1389, %v1701, 0
        %1711 = vmatpush.bf16.msra.mxu0 0
        %1712 = vmatpush.bf16.msra.mxu0 0
        %1713 = vmatpush.bf16.msra.mxu0 0
        %1714 = vmatpush.bf16.msra.mxu0 0
        %1715 = vmatpush.bf16.msra.mxu0 0
        %1716 = vmatpush.bf16.msra.mxu0 0
        %1717 = vmatpush.bf16.msra.mxu0 0
        %1718 = vmatpush.bf16.msra.mxu0 %v1706
        %1719 = vmatmul.bf16.gmra.mxu0 %v1709
        %v1720 = vpop.f32.mrf.mxu0
        %v1721 = vadd.f32 0.0, %v1720
        %v1722 = vpop.f32.mrf.mxu0
        %1723 = vdwg.mxu0
        %v1726 = vunpack.c.l.b16 %v1597
        %v1727 = vunpack.c.l.b16 %v1598
        %v1728 = vpack.c.b16 %v1727, %v1726
        %v1729 = vunpack.c.l.b16 %v1728
        %v1730 = vunpack.c.h.b16 %v1728
        %1731 = vset.pattern.permute.xlu0 0
        %1732 = vperm.xlu0 %1731, %v1729
        %v1733 = vpop.permute.xlu0 %1732
        %1734 = vset.pattern.permute.xlu0 0
        %1735 = vperm.xlu0 %1734, %v1730
        %v1736 = vpop.permute.xlu0 %1735
        %v1737 = vperm.slane %v1733, %v1350
        %v1738 = vperm.slane %v1736, %v1352
        %v1739 = vsel %vm1354, %v1738, %v1737
        %v1740 = vpack.c.b16 %v1739, %v1739
        %v1743 = vunpack.c.l.b16 %v538
        %v1744 = vunpack.c.l.b16 %v539
        %v1745 = vpack.c.b16 %v1744, %v1743
        %v1748 = vsel %vm1389, %v1740, 0
        %1750 = vmatpush.bf16.msra.mxu0 0
        %1751 = vmatpush.bf16.msra.mxu0 0
        %1752 = vmatpush.bf16.msra.mxu0 0
        %1753 = vmatpush.bf16.msra.mxu0 0
        %1754 = vmatpush.bf16.msra.mxu0 0
        %1755 = vmatpush.bf16.msra.mxu0 0
        %1756 = vmatpush.bf16.msra.mxu0 0
        %1757 = vmatpush.bf16.msra.mxu0 %v1745
        %1758 = vmatmul.bf16.gmra.mxu0 %v1748
        %v1759 = vpop.f32.mrf.mxu0
        %v1760 = vadd.f32 0.0, %v1759
        %v1761 = vpop.f32.mrf.mxu0
        %1762 = vdwg.mxu0
        %v1765 = vunpack.c.l.b16 %v1599
        %v1766 = vunpack.c.l.b16 %v1600
        %v1767 = vpack.c.b16 %v1766, %v1765
        %v1768 = vunpack.c.l.b16 %v1767
        %v1769 = vunpack.c.h.b16 %v1767
        %1770 = vset.pattern.permute.xlu0 0
        %1771 = vperm.xlu0 %1770, %v1768
        %v1772 = vpop.permute.xlu0 %1771
        %1773 = vset.pattern.permute.xlu0 0
        %1774 = vperm.xlu0 %1773, %v1769
        %v1775 = vpop.permute.xlu0 %1774
        %v1776 = vperm.slane %v1772, %v1350
        %v1777 = vperm.slane %v1775, %v1352
        %v1778 = vsel %vm1354, %v1777, %v1776
        %v1779 = vpack.c.b16 %v1778, %v1778
        %v1782 = vunpack.c.l.b16 %v540
        %v1783 = vunpack.c.l.b16 %v541
        %v1784 = vpack.c.b16 %v1783, %v1782
        %v1787 = vsel %vm1389, %v1779, 0
        %1789 = vmatpush.bf16.msra.mxu0 0
        %1790 = vmatpush.bf16.msra.mxu0 0
        %1791 = vmatpush.bf16.msra.mxu0 0
        %1792 = vmatpush.bf16.msra.mxu0 0
        %1793 = vmatpush.bf16.msra.mxu0 0
        %1794 = vmatpush.bf16.msra.mxu0 0
        %1795 = vmatpush.bf16.msra.mxu0 0
        %1796 = vmatpush.bf16.msra.mxu0 %v1784
        %1797 = vmatmul.bf16.gmra.mxu0 %v1787
        %v1798 = vpop.f32.mrf.mxu0
        %v1799 = vadd.f32 0.0, %v1798
        %v1800 = vpop.f32.mrf.mxu0
        %1801 = vdwg.mxu0
        %v1804 = vunpack.c.l.b16 %v1601
        %v1805 = vunpack.c.l.b16 %v1602
        %v1806 = vpack.c.b16 %v1805, %v1804
        %v1807 = vunpack.c.l.b16 %v1806
        %v1808 = vunpack.c.h.b16 %v1806
        %1809 = vset.pattern.permute.xlu0 0
        %1810 = vperm.xlu0 %1809, %v1807
        %v1811 = vpop.permute.xlu0 %1810
        %1812 = vset.pattern.permute.xlu0 0
        %1813 = vperm.xlu0 %1812, %v1808
        %v1814 = vpop.permute.xlu0 %1813
        %v1815 = vperm.slane %v1811, %v1350
        %v1816 = vperm.slane %v1814, %v1352
        %v1817 = vsel %vm1354, %v1816, %v1815
        %v1818 = vpack.c.b16 %v1817, %v1817
        %v1821 = vunpack.c.l.b16 %v542
        %v1822 = vunpack.c.l.b16 %v543
        %v1823 = vpack.c.b16 %v1822, %v1821
        %v1826 = vsel %vm1389, %v1818, 0
        %1828 = vmatpush.bf16.msra.mxu0 0
        %1829 = vmatpush.bf16.msra.mxu0 0
        %1830 = vmatpush.bf16.msra.mxu0 0
        %1831 = vmatpush.bf16.msra.mxu0 0
        %1832 = vmatpush.bf16.msra.mxu0 0
        %1833 = vmatpush.bf16.msra.mxu0 0
        %1834 = vmatpush.bf16.msra.mxu0 0
        %1835 = vmatpush.bf16.msra.mxu0 %v1823
        %1836 = vmatmul.bf16.gmra.mxu0 %v1826
        %v1837 = vpop.f32.mrf.mxu0
        %v1838 = vadd.f32 0.0, %v1837
        %v1839 = vpop.f32.mrf.mxu0
        %1840 = vdwg.mxu0
        %v1843 = vunpack.c.l.b16 %v1603
        %v1844 = vunpack.c.l.b16 %v1604
        %v1845 = vpack.c.b16 %v1844, %v1843
        %v1846 = vunpack.c.l.b16 %v1845
        %v1847 = vunpack.c.h.b16 %v1845
        %1848 = vset.pattern.permute.xlu0 0
        %1849 = vperm.xlu0 %1848, %v1846
        %v1850 = vpop.permute.xlu0 %1849
        %1851 = vset.pattern.permute.xlu0 0
        %1852 = vperm.xlu0 %1851, %v1847
        %v1853 = vpop.permute.xlu0 %1852
        %v1854 = vperm.slane %v1850, %v1350
        %v1855 = vperm.slane %v1853, %v1352
        %v1856 = vsel %vm1354, %v1855, %v1854
        %v1857 = vpack.c.b16 %v1856, %v1856
        %v1860 = vunpack.c.l.b16 %v544
        %v1861 = vunpack.c.l.b16 %v545
        %v1862 = vpack.c.b16 %v1861, %v1860
        %v1865 = vsel %vm1389, %v1857, 0
        %1867 = vmatpush.bf16.msra.mxu0 0
        %1868 = vmatpush.bf16.msra.mxu0 0
        %1869 = vmatpush.bf16.msra.mxu0 0
        %1870 = vmatpush.bf16.msra.mxu0 0
        %1871 = vmatpush.bf16.msra.mxu0 0
        %1872 = vmatpush.bf16.msra.mxu0 0
        %1873 = vmatpush.bf16.msra.mxu0 0
        %1874 = vmatpush.bf16.msra.mxu0 %v1862
        %1875 = vmatmul.bf16.gmra.mxu0 %v1865
        %v1876 = vpop.f32.mrf.mxu0
        %v1877 = vadd.f32 0.0, %v1876
        %v1878 = vpop.f32.mrf.mxu0
        %1879 = vdwg.mxu0
        %v1882 = vunpack.c.l.b16 %v1605
        %v1883 = vunpack.c.l.b16 %v1606
        %v1884 = vpack.c.b16 %v1883, %v1882
        %v1885 = vunpack.c.l.b16 %v1884
        %v1886 = vunpack.c.h.b16 %v1884
        %1887 = vset.pattern.permute.xlu0 0
        %1888 = vperm.xlu0 %1887, %v1885
        %v1889 = vpop.permute.xlu0 %1888
        %1890 = vset.pattern.permute.xlu0 0
        %1891 = vperm.xlu0 %1890, %v1886
        %v1892 = vpop.permute.xlu0 %1891
        %v1893 = vperm.slane %v1889, %v1350
        %v1894 = vperm.slane %v1892, %v1352
        %v1895 = vsel %vm1354, %v1894, %v1893
        %v1896 = vpack.c.b16 %v1895, %v1895
        %v1899 = vunpack.c.l.b16 %v546
        %v1900 = vunpack.c.l.b16 %v547
        %v1901 = vpack.c.b16 %v1900, %v1899
        %v1904 = vsel %vm1389, %v1896, 0
        %1906 = vmatpush.bf16.msra.mxu0 0
        %1907 = vmatpush.bf16.msra.mxu0 0
        %1908 = vmatpush.bf16.msra.mxu0 0
        %1909 = vmatpush.bf16.msra.mxu0 0
        %1910 = vmatpush.bf16.msra.mxu0 0
        %1911 = vmatpush.bf16.msra.mxu0 0
        %1912 = vmatpush.bf16.msra.mxu0 0
        %1913 = vmatpush.bf16.msra.mxu0 %v1901
        %1914 = vmatmul.bf16.gmra.mxu0 %v1904
        %v1915 = vpop.f32.mrf.mxu0
        %v1916 = vadd.f32 0.0, %v1915
        %v1917 = vpop.f32.mrf.mxu0
        %1918 = vdwg.mxu0
        %v1919 = vxor.u32 %v873, 2147483648
        %v1920 = vmul.f32 %v1919, 1.442695
        %v1921 = vpow.pop %v1920
        %v1922 = vadd.f32 %v1921, 1.0
        %v1923 = vrcp.pop %v1922
        %v1924 = vmul.f32 %v1922, %v1923
        %v1925 = vsub.f32 1.0, %v1924
        %v1926 = vmul.f32 %v1923, %v1925
        %v1927 = vadd.f32 %v1923, %v1926
        %vm1928 = vweird.f32 %v1922
        %vm1929 = vweird.f32 %v1923
        %vm1930 = vmor %vm1928, %vm1929
        %v1931 = vsel %vm1930, %v1923, %v1927
        %v1932 = vand.u32 2147483647, %v1922
        %vm1933 = vcmp.eq.f32.partialorder %v1932, 8.507059e+37
        %v1934 = vand.u32 %v1922, 2147483648
        %v1935 = vor.u32 1.1754944e-38, %v1934
        %v1936 = vsel %vm1933, %v1935, %v1931
        %v1937 = vmul.f32 1.0, %v1936
        %v1946 = vrot.slane %v1682, 7
        %v1947 = vsel %vm952, %v1946, %v1643
        %v1948 = vrot.slane %v1721, 6
        %v1949 = vsel %vm956, %v1948, %v1947
        %v1950 = vrot.slane %v1760, 5
        %v1951 = vsel %vm960, %v1950, %v1949
        %v1952 = vrot.slane %v1799, 4
        %v1953 = vsel %vm1380, %v1952, %v1951
        %v1954 = vrot.slane %v1838, 3
        %v1955 = vsel %vm1382, %v1954, %v1953
        %v1956 = vrot.slane %v1877, 2
        %v1957 = vsel %vm1384, %v1956, %v1955
        %v1958 = vrot.slane %v1916, 1
        %v1959 = vsel %vm1386, %v1958, %v1957
        %v1961 = vmul.f32 %v1937, %v1959
        %v1962 = vld [vmem:[%s447] sm:$0xff]
        %v1963 = vld [vmem:[%s447 + $0x8] sm:$0xff]
        %v1964 = vunpack.c.l.bf16 %v1962
        %v1965 = vunpack.c.h.bf16 %v1962
        %v1966 = vunpack.c.l.bf16 %v1963
        %v1967 = vunpack.c.h.bf16 %v1963
        %v1968 = vpack.c.bf16 %v1961, %v1961
        %v1969 = vld [vmem:[#allocation12] sm:$0xff]
        %v1970 = vld [vmem:[#allocation12 + $0x8] sm:$0xff]
        %v1971 = vld [vmem:[#allocation12 + $0x10] sm:$0xff]
        %v1972 = vld [vmem:[#allocation12 + $0x18] sm:$0xff]
        %v1973 = vld [vmem:[#allocation12 + $0x20] sm:$0xff]
        %v1974 = vld [vmem:[#allocation12 + $0x28] sm:$0xff]
        %v1975 = vld [vmem:[#allocation12 + $0x30] sm:$0xff]
        %v1976 = vld [vmem:[#allocation12 + $0x38] sm:$0xff]
        %v1977 = vld [vmem:[#allocation12 + $0x40] sm:$0xff]
        %v1978 = vld [vmem:[#allocation12 + $0x48] sm:$0xff]
        %v1979 = vld [vmem:[#allocation12 + $0x50] sm:$0xff]
        %v1980 = vld [vmem:[#allocation12 + $0x58] sm:$0xff]
        %v1981 = vld [vmem:[#allocation12 + $0x60] sm:$0xff]
        %v1982 = vld [vmem:[#allocation12 + $0x68] sm:$0xff]
        %v1983 = vld [vmem:[#allocation12 + $0x70] sm:$0xff]
        %v1984 = vld [vmem:[#allocation12 + $0x78] sm:$0xff]
        %v1985 = vld [vmem:[#allocation12 + $0x80] sm:$0xff]
        %v1986 = vld [vmem:[#allocation12 + $0x88] sm:$0xff]
        %v1987 = vld [vmem:[#allocation12 + $0x90] sm:$0xff]
        %v1988 = vld [vmem:[#allocation12 + $0x98] sm:$0xff]
        %v1989 = vld [vmem:[#allocation12 + $0xa0] sm:$0xff]
        %v1990 = vld [vmem:[#allocation12 + $0xa8] sm:$0xff]
        %v1991 = vld [vmem:[#allocation12 + $0xb0] sm:$0xff]
        %v1992 = vld [vmem:[#allocation12 + $0xb8] sm:$0xff]
        %v1993 = vld [vmem:[#allocation12 + $0xc0] sm:$0xff]
        %v1994 = vld [vmem:[#allocation12 + $0xc8] sm:$0xff]
        %v1995 = vld [vmem:[#allocation12 + $0xd0] sm:$0xff]
        %v1996 = vld [vmem:[#allocation12 + $0xd8] sm:$0xff]
        %v1997 = vld [vmem:[#allocation12 + $0xe0] sm:$0xff]
        %v1998 = vld [vmem:[#allocation12 + $0xe8] sm:$0xff]
        %v1999 = vld [vmem:[#allocation12 + $0xf0] sm:$0xff]
        %v2000 = vld [vmem:[#allocation12 + $0xf8] sm:$0xff]
        %v2033 = vunpack.c.l.b16 %v1969
        %v2034 = vunpack.c.h.b16 %v1969
        %v2035 = vunpack.c.l.b16 %v1970
        %v2036 = vunpack.c.h.b16 %v1970
        %v2037 = vunpack.c.l.b16 %v1971
        %v2038 = vunpack.c.h.b16 %v1971
        %v2039 = vunpack.c.l.b16 %v1972
        %v2040 = vunpack.c.h.b16 %v1972
        %v2041 = vunpack.c.l.b16 %v1973
        %v2042 = vunpack.c.h.b16 %v1973
        %v2043 = vunpack.c.l.b16 %v1974
        %v2044 = vunpack.c.h.b16 %v1974
        %v2045 = vunpack.c.l.b16 %v1975
        %v2046 = vunpack.c.h.b16 %v1975
        %v2047 = vunpack.c.l.b16 %v1976
        %v2048 = vunpack.c.h.b16 %v1976
        %v2049 = vunpack.c.l.b16 %v1977
        %v2050 = vunpack.c.h.b16 %v1977
        %v2051 = vunpack.c.l.b16 %v1978
        %v2052 = vunpack.c.h.b16 %v1978
        %v2053 = vunpack.c.l.b16 %v1979
        %v2054 = vunpack.c.h.b16 %v1979
        %v2055 = vunpack.c.l.b16 %v1980
        %v2056 = vunpack.c.h.b16 %v1980
        %v2057 = vunpack.c.l.b16 %v1981
        %v2058 = vunpack.c.h.b16 %v1981
        %v2059 = vunpack.c.l.b16 %v1982
        %v2060 = vunpack.c.h.b16 %v1982
        %v2061 = vunpack.c.l.b16 %v1983
        %v2062 = vunpack.c.h.b16 %v1983
        %v2063 = vunpack.c.l.b16 %v1984
        %v2064 = vunpack.c.h.b16 %v1984
        %v2065 = vunpack.c.l.b16 %v1985
        %v2066 = vunpack.c.h.b16 %v1985
        %v2067 = vunpack.c.l.b16 %v1986
        %v2068 = vunpack.c.h.b16 %v1986
        %v2069 = vunpack.c.l.b16 %v1987
        %v2070 = vunpack.c.h.b16 %v1987
        %v2071 = vunpack.c.l.b16 %v1988
        %v2072 = vunpack.c.h.b16 %v1988
        %v2073 = vunpack.c.l.b16 %v1989
        %v2074 = vunpack.c.h.b16 %v1989
        %v2075 = vunpack.c.l.b16 %v1990
        %v2076 = vunpack.c.h.b16 %v1990
        %v2077 = vunpack.c.l.b16 %v1991
        %v2078 = vunpack.c.h.b16 %v1991
        %v2079 = vunpack.c.l.b16 %v1992
        %v2080 = vunpack.c.h.b16 %v1992
        %v2081 = vunpack.c.l.b16 %v1993
        %v2082 = vunpack.c.h.b16 %v1993
        %v2083 = vunpack.c.l.b16 %v1994
        %v2084 = vunpack.c.h.b16 %v1994
        %v2085 = vunpack.c.l.b16 %v1995
        %v2086 = vunpack.c.h.b16 %v1995
        %v2087 = vunpack.c.l.b16 %v1996
        %v2088 = vunpack.c.h.b16 %v1996
        %v2089 = vunpack.c.l.b16 %v1997
        %v2090 = vunpack.c.h.b16 %v1997
        %v2091 = vunpack.c.l.b16 %v1998
        %v2092 = vunpack.c.h.b16 %v1998
        %v2093 = vunpack.c.l.b16 %v1999
        %v2094 = vunpack.c.h.b16 %v1999
        %v2095 = vunpack.c.l.b16 %v2000
        %v2096 = vunpack.c.h.b16 %v2000
        %v2097 = vpack.c.b16 %v2037, %v2033
        %v2098 = vpack.c.b16 %v2038, %v2034
        %v2099 = vpack.c.b16 %v2039, %v2035
        %v2100 = vpack.c.b16 %v2040, %v2036
        %v2101 = vpack.c.b16 %v2045, %v2041
        %v2102 = vpack.c.b16 %v2046, %v2042
        %v2103 = vpack.c.b16 %v2047, %v2043
        %v2104 = vpack.c.b16 %v2048, %v2044
        %v2105 = vpack.c.b16 %v2053, %v2049
        %v2106 = vpack.c.b16 %v2054, %v2050
        %v2107 = vpack.c.b16 %v2055, %v2051
        %v2108 = vpack.c.b16 %v2056, %v2052
        %v2109 = vpack.c.b16 %v2061, %v2057
        %v2110 = vpack.c.b16 %v2062, %v2058
        %v2111 = vpack.c.b16 %v2063, %v2059
        %v2112 = vpack.c.b16 %v2064, %v2060
        %v2113 = vpack.c.b16 %v2069, %v2065
        %v2114 = vpack.c.b16 %v2070, %v2066
        %v2115 = vpack.c.b16 %v2071, %v2067
        %v2116 = vpack.c.b16 %v2072, %v2068
        %v2117 = vpack.c.b16 %v2077, %v2073
        %v2118 = vpack.c.b16 %v2078, %v2074
        %v2119 = vpack.c.b16 %v2079, %v2075
        %v2120 = vpack.c.b16 %v2080, %v2076
        %v2121 = vpack.c.b16 %v2085, %v2081
        %v2122 = vpack.c.b16 %v2086, %v2082
        %v2123 = vpack.c.b16 %v2087, %v2083
        %v2124 = vpack.c.b16 %v2088, %v2084
        %v2125 = vpack.c.b16 %v2093, %v2089
        %v2126 = vpack.c.b16 %v2094, %v2090
        %v2127 = vpack.c.b16 %v2095, %v2091
        %v2128 = vpack.c.b16 %v2096, %v2092
        %2161 = vmatpush.bf16.msra.mxu0 %v2125
        %2162 = vmatpush.bf16.msra.mxu0 %v2121
        %2163 = vmatpush.bf16.msra.mxu0 %v2117
        %2164 = vmatpush.bf16.msra.mxu0 %v2113
        %2165 = vmatpush.bf16.msra.mxu0 %v2109
        %2166 = vmatpush.bf16.msra.mxu0 %v2105
        %2167 = vmatpush.bf16.msra.mxu0 %v2101
        %2168 = vmatpush.bf16.msra.mxu0 %v2097
        %2169 = vmatmul.bf16.gmra.mxu0 %v1968
        %v2170 = vpop.f32.mrf.mxu0
        %v2171 = vadd.f32 0.0, %v2170
        %v2172 = vpop.f32.mrf.mxu0
        %2173 = vdwg.mxu0
        %2174 = vmatpush.bf16.msra.mxu0 %v2126
        %2175 = vmatpush.bf16.msra.mxu0 %v2122
        %2176 = vmatpush.bf16.msra.mxu0 %v2118
        %2177 = vmatpush.bf16.msra.mxu0 %v2114
        %2178 = vmatpush.bf16.msra.mxu0 %v2110
        %2179 = vmatpush.bf16.msra.mxu0 %v2106
        %2180 = vmatpush.bf16.msra.mxu0 %v2102
        %2181 = vmatpush.bf16.msra.mxu0 %v2098
        %2182 = vmatmul.bf16.gmra.mxu0 %v1968
        %v2183 = vpop.f32.mrf.mxu0
        %v2184 = vadd.f32 0.0, %v2183
        %v2185 = vpop.f32.mrf.mxu0
        %2186 = vdwg.mxu0
        %2187 = vmatpush.bf16.msra.mxu0 %v2127
        %2188 = vmatpush.bf16.msra.mxu0 %v2123
        %2189 = vmatpush.bf16.msra.mxu0 %v2119
        %2190 = vmatpush.bf16.msra.mxu0 %v2115
        %2191 = vmatpush.bf16.msra.mxu0 %v2111
        %2192 = vmatpush.bf16.msra.mxu0 %v2107
        %2193 = vmatpush.bf16.msra.mxu0 %v2103
        %2194 = vmatpush.bf16.msra.mxu0 %v2099
        %2195 = vmatmul.bf16.gmra.mxu0 %v1968
        %v2196 = vpop.f32.mrf.mxu0
        %v2197 = vadd.f32 0.0, %v2196
        %v2198 = vpop.f32.mrf.mxu0
        %2199 = vdwg.mxu0
        %2200 = vmatpush.bf16.msra.mxu0 %v2128
        %2201 = vmatpush.bf16.msra.mxu0 %v2124
        %2202 = vmatpush.bf16.msra.mxu0 %v2120
        %2203 = vmatpush.bf16.msra.mxu0 %v2116
        %2204 = vmatpush.bf16.msra.mxu0 %v2112
        %2205 = vmatpush.bf16.msra.mxu0 %v2108
        %2206 = vmatpush.bf16.msra.mxu0 %v2104
        %2207 = vmatpush.bf16.msra.mxu0 %v2100
        %2208 = vmatmul.bf16.gmra.mxu0 %v1968
        %v2209 = vpop.f32.mrf.mxu0
        %v2210 = vadd.f32 0.0, %v2209
        %v2211 = vpop.f32.mrf.mxu0
        %2212 = vdwg.mxu0
        %v2213 = vadd.f32 %v1964, %v2171
        %v2214 = vadd.f32 %v1965, %v2184
        %v2215 = vadd.f32 %v1966, %v2197
        %v2216 = vadd.f32 %v1967, %v2210
        %v2217 = vadd.f32 %v2213, %v886
        %v2218 = vadd.f32 %v2214, %v899
        %v2219 = vadd.f32 %v2215, %v912
        %v2220 = vadd.f32 %v2216, %v925
        %v2221 = vxor.u32 %v2217, 2147483648
        %v2222 = vmul.f32 %v2221, 1.442695
        %v2223 = vpow.pop %v2222
        %v2224 = vadd.f32 %v2223, 1.0
        %v2225 = vrcp.pop %v2224
        %v2226 = vmul.f32 %v2224, %v2225
        %v2227 = vsub.f32 1.0, %v2226
        %v2228 = vmul.f32 %v2225, %v2227
        %v2229 = vadd.f32 %v2225, %v2228
        %vm2230 = vweird.f32 %v2224
        %vm2231 = vweird.f32 %v2225
        %vm2232 = vmor %vm2230, %vm2231
        %v2233 = vsel %vm2232, %v2225, %v2229
        %v2234 = vand.u32 2147483647, %v2224
        %vm2235 = vcmp.eq.f32.partialorder %v2234, 8.507059e+37
        %v2236 = vand.u32 %v2224, 2147483648
        %v2237 = vor.u32 1.1754944e-38, %v2236
        %v2238 = vsel %vm2235, %v2237, %v2233
        %v2239 = vmul.f32 1.0, %v2238
        %v2240 = vxor.u32 %v2218, 2147483648
        %v2241 = vmul.f32 %v2240, 1.442695
        %v2242 = vpow.pop %v2241
        %v2243 = vadd.f32 %v2242, 1.0
        %v2244 = vrcp.pop %v2243
        %v2245 = vmul.f32 %v2243, %v2244
        %v2246 = vsub.f32 1.0, %v2245
        %v2247 = vmul.f32 %v2244, %v2246
        %v2248 = vadd.f32 %v2244, %v2247
        %vm2249 = vweird.f32 %v2243
        %vm2250 = vweird.f32 %v2244
        %vm2251 = vmor %vm2249, %vm2250
        %v2252 = vsel %vm2251, %v2244, %v2248
        %v2253 = vand.u32 2147483647, %v2243
        %vm2254 = vcmp.eq.f32.partialorder %v2253, 8.507059e+37
        %v2255 = vand.u32 %v2243, 2147483648
        %v2256 = vor.u32 1.1754944e-38, %v2255
        %v2257 = vsel %vm2254, %v2256, %v2252
        %v2258 = vmul.f32 1.0, %v2257
        %v2259 = vtanh.pop %v2219
        %v2260 = vxor.u32 %v2220, 2147483648
        %v2261 = vmul.f32 %v2260, 1.442695
        %v2262 = vpow.pop %v2261
        %v2263 = vadd.f32 %v2262, 1.0
        %v2264 = vrcp.pop %v2263
        %v2265 = vmul.f32 %v2263, %v2264
        %v2266 = vsub.f32 1.0, %v2265
        %v2267 = vmul.f32 %v2264, %v2266
        %v2268 = vadd.f32 %v2264, %v2267
        %vm2269 = vweird.f32 %v2263
        %vm2270 = vweird.f32 %v2264
        %vm2271 = vmor %vm2269, %vm2270
        %v2272 = vsel %vm2271, %v2264, %v2268
        %v2273 = vand.u32 2147483647, %v2263
        %vm2274 = vcmp.eq.f32.partialorder %v2273, 8.507059e+37
        %v2275 = vand.u32 %v2263, 2147483648
        %v2276 = vor.u32 1.1754944e-38, %v2275
        %v2277 = vsel %vm2274, %v2276, %v2272
        %v2278 = vmul.f32 1.0, %v2277
        %v2279 = vmul.f32 %v2258, %v531
        %v2280 = vmul.f32 %v2239, %v2259
        %v2281 = vadd.f32 %v2279, %v2280
        %v2282 = vtanh.pop %v2281
        %v2283 = vmul.f32 %v2278, %v2282
        %v2284 = vpack.c.bf16 %v2283, %v2283
        %2285 = vst [vmem:[#allocation3] sm:$0xff] %v2281
        %2286 = vst [vmem:[#allocation2] sm:$0xf] %v2284
        %2287 = vst [vmem:[%s510] sm:$0xf] %v2284
        %s2288 = sand.u32 %s268, 1
        %s2289 = scalar_lea.sflag [#allocation6], %s2288
        %s2290 = sand.u32 %s268, 1
        %s2291 = smul.addr %s2290, 4
        %s2292 = scalar_lea.vmem [#allocation13], %s2291
        // Predicated region
        $region81: #{tpu_custom_call.1} parent=55 // pred_check
          %p2293 = pneg %p278
        $region82: #{tpu_custom_call.1} parent=55 // pred_check_branch
          %2295 = sbr.rel (%p2293) target = $region84
        $region83: #{tpu_custom_call.1} parent=55 // pred_region
          %2297 = vsyncadd %s2289, 0
          %s2298 = smul.addr %s35, 2
          %s2299 = sadd.s32 %s34, %s2298
          %s2300 = smul.addr %s2299, 4
          %s2301 = scalar_lea.hbm %s9, %s2300
          %s2303 = sshll.u32 %s2292, 4
          %s2304 = int_to_ptr.vmem [resolvable:$true] %s2303
          %s2305 = sshll.u32 %s2301, 4
          %s2306 = int_to_ptr.hbm [resolvable:$true] %s2305
          %2308 = dma.vmem_to_hbm [thread:$0]  %s2304, 64, %s2306, %s2289
        $region84: #{tpu_custom_call.1} parent=55 // pred_fallthru
          _
      $region56: #{tpu_custom_call.1} parent=5 // pred_fallthru
        _
      %p2309 = scmp.le.s32.totalorder 2, %s25
      // Predicated region
      $region85: #{tpu_custom_call.1} parent=5 // pred_check
        %p2310 = pneg %p2309
      $region86: #{tpu_custom_call.1} parent=5 // pred_check_branch
        %2312 = sbr.rel (%p2310) target = $region88
      $region87: #{tpu_custom_call.1} parent=5 // pred_region
        %s2313 = ssub.s32 %s25, 2
        // Predicated region
        $region89: #{tpu_custom_call.1} parent=87 // pred_check
          %p2314 = pneg %p284
        $region90: #{tpu_custom_call.1} parent=87 // pred_check_branch
          %2316 = sbr.rel (%p2314) target = $region92
        $region91: #{tpu_custom_call.1} parent=87 // pred_region
          %s2317 = sand.u32 %s269, 1
          %s2318 = scalar_lea.sflag [#allocation6], %s2317
          %s2319 = sand.u32 %s269, 1
          %s2320 = smul.addr %s2319, 4
          %s2321 = scalar_lea.vmem [#allocation13], %s2320
          %2323 = dma.done %s2318, 64
        $region92: #{tpu_custom_call.1} parent=87 // pred_fallthru
          _
      $region88: #{tpu_custom_call.1} parent=5 // pred_fallthru
        _
    $region6: #{tpu_custom_call.1} parent=1 // loop_footer
      %s29 = sadd.s32 1, %s25
    $region7: #{tpu_custom_call.1} parent=1 // loop_footer_branch
      %24 = sbr.rel target = $region3
    $region8: #{tpu_custom_call.1} parent=1 // loop_exit
      _
    %2324 = vsyncpa [#allocation5], 1
    %s2325 = scalar_lea.sflag [#allocation5], 1
    %2326 = vsyncpa %s2325, 1
    %2327 = vsyncpa [#allocation8], 1
    %s2328 = scalar_lea.sflag [#allocation8], 1
    %2329 = vsyncpa %s2328, 1
    %2330 = vsyncpa [#allocation11], 1
    %2331 = vsyncpa [#allocation6], 1
    %s2332 = scalar_lea.sflag [#allocation6], 1
    %2333 = vsyncpa %s2332, 1

// kernel: tpu_custom_call.1
$region0: #{tpu_custom_call.1}
  #allocation0 [shape = 'u32[]', space=smem, size = 0x4, offset = 0x4, fixed_abs, tag = 'smem constant byte address 0x4 - core index']
  #allocation1 [shape = 'u32[72,128]{1,0:T(1,128)}', space=vmem, size = 0x9000, scoped, tag = 'internal scratch']
  #allocation2 [shape = 'bf16[8,128]{1,0:T(8,128)(2,1)}', space=vmem, size = 0x800, scoped, tag = 'scratch operand']
  #allocation3 [shape = 'f32[8,128]{1,0:T(8,128)}', space=vmem, size = 0x1000, scoped, tag = 'scratch operand']
  %s0 = inlined_call_operand.hbm [shape: bf16[16,16,128], index: 0, kind: input, shape index: {}]
  %s1 = inlined_call_operand.hbm [shape: bf16[16,16,128], index: 1, kind: input, shape index: {}]
  %s2 = inlined_call_operand.hbm [shape: bf16[16,128], index: 2, kind: input, shape index: {}]
  %s3 = inlined_call_operand.hbm [shape: f32[16,128], index: 3, kind: input, shape index: {}]
  %s4 = inlined_call_operand.hbm [shape: bf16[7,16,512], index: 4, kind: input, shape index: {}]
  %s5 = inlined_call_operand.hbm [shape: bf16[128,768], index: 5, kind: input, shape index: {}]
  %s6 = inlined_call_operand.hbm [shape: f32[1,768], index: 6, kind: input, shape index: {}]
  %s7 = inlined_call_operand.vmem [shape: f32[1,128], index: 7, kind: input, shape index: {}]
  %s8 = inlined_call_operand.hbm [shape: bf16[128,512], index: 8, kind: input, shape index: {}]
  %s9 = inlined_call_operand.hbm [shape: bf16[7,16,128], index: 9, kind: output, shape index: {}]
  %s10 = sld [smem:[#allocation0]]
  $region105: #{tpu_custom_call.1} parent=0
    _
  %s12 = ssub.s32 1, %s10
  %s13 = scalar_select 0, %s12, %s10
  $region1: #{tpu_custom_call.1} parent=0
    #allocation4 [shape = 'u8[65536]{0}', space=vmem, size = 0x10000, scoped, tag = 'input window, operand 0']
    #allocation5 [shape = 's32[2]{0}', space=sflag, size = 0x8, scoped, tag = 'scoped memory for tpu_custom_call.1']
    #allocation6 [shape = 's32[2]{0}', space=sflag, size = 0x8, scoped, tag = 'scoped memory for tpu_custom_call.1']
    #allocation7 [shape = 'u8[65536]{0}', space=vmem, size = 0x10000, scoped, tag = 'input window, operand 1']
    #allocation8 [shape = 's32[2]{0}', space=sflag, size = 0x8, scoped, tag = 'scoped memory for tpu_custom_call.1']
    #allocation9 [shape = 'u8[4096]{0}', space=vmem, size = 0x1000, scoped, tag = 'input window, operand 2']
    #allocation10 [shape = 'u8[8192]{0}', space=vmem, size = 0x2000, scoped, tag = 'input window, operand 3']
    #allocation11 [shape = 's32[2]{0}', space=sflag, size = 0x8, scoped, tag = 'scoped memory for tpu_custom_call.1']
    #allocation12 [shape = 'u8[16384]{0}', space=vmem, size = 0x4000, scoped, tag = 'input window, operand 4']
    #allocation13 [shape = 'u8[196608]{0}', space=vmem, size = 0x30000, scoped, tag = 'input window, operand 5, single buffered']
    #allocation14 [shape = 's32[1]{0}', space=sflag, size = 0x4, scoped, tag = 'scoped memory for tpu_custom_call.1']
    #allocation15 [shape = 'u8[3072]{0}', space=vmem, size = 0xc00, scoped, tag = 'input window, operand 6, single buffered']
    #allocation16 [shape = 'u8[131072]{0}', space=vmem, size = 0x20000, scoped, tag = 'input window, operand 8, single buffered']
    #allocation17 [shape = 's32[1]{0}', space=sflag, size = 0x4, scoped, tag = 'scoped memory for tpu_custom_call.1']
    #allocation18 [shape = 'u8[4096]{0}', space=vmem, size = 0x1000, scoped, tag = 'output window, operand 0']
    %14 = vsyncpa [#allocation5], 0
    %s15 = scalar_lea.sflag [#allocation5], 1
    %16 = vsyncpa %s15, 0
    %17 = vsyncpa [#allocation8], 0
    %s18 = scalar_lea.sflag [#allocation8], 1
    %19 = vsyncpa %s18, 0
    %20 = vsyncpa [#allocation11], 0
    %s21 = scalar_lea.sflag [#allocation11], 1
    %22 = vsyncpa %s21, 0
    %23 = vsyncpa [#allocation14], 0
    %24 = vsyncpa [#allocation17], 0
    %25 = vsyncpa [#allocation6], 0
    %s26 = scalar_lea.sflag [#allocation6], 1
    %27 = vsyncpa %s26, 0
    loop: start=0, step=1, limit=16
    $region2: #{tpu_custom_call.1} parent=1 // loop_pre_header
      _
    $region3: #{tpu_custom_call.1} parent=1 // loop_header
      %s29 = sphi 0, %s33
      %p30 = scmp.ge.s32.totalorder %s29, 16
      %s36 = sphi 0, %s48
      %s37 = sphi 0, %s44
      %s38 = sphi 0, %s36
      %s39 = sphi 0, %s37
      %s40 = sphi 0, %s38
      %s41 = sphi 0, %s39
      %s51 = sphi 0, %s53
      %s54 = sphi 0, %s51
      %s55 = sphi 0, %s54
      %s71 = sphi 0, %s55
      %s77 = sphi 0, %s79
      %s80 = sphi 0, %s77
      %s81 = sphi 0, %s80
      %s97 = sphi 0, %s81
      %s103 = sphi 0, %s105
      %s106 = sphi 0, %s103
      %s107 = sphi 0, %s106
      %s123 = sphi 0, %s107
      %s129 = sphi 0, %s131
      %s132 = sphi 0, %s129
      %s133 = sphi 0, %s132
      %s149 = sphi 0, %s133
      %s157 = sphi 0, %s159
      %s160 = sphi 0, %s157
      %s161 = sphi 0, %s160
      %s177 = sphi 0, %s161
      %s181 = sphi 0, %s181
      %s183 = sphi 0, %s181
      %s184 = sphi 0, %s183
      %s198 = sphi 0, %s184
      %s202 = sphi 0, %s202
      %s204 = sphi 0, %s202
      %s205 = sphi 0, %s204
      %s219 = sphi 0, %s205
      %s223 = sphi 0, %s223
      %s225 = sphi 0, %s223
      %s226 = sphi 0, %s225
      %s240 = sphi 0, %s226
      %s244 = sphi 0, %s244
      %s246 = sphi 0, %s244
      %s247 = sphi 0, %s246
      %s261 = sphi 0, %s247
      %s269 = sphi 0, %s271
      %s272 = sphi 0, %s269
      %s273 = sphi 0, %s272
      %s289 = sphi 0, %s273
    $region4: #{tpu_custom_call.1} parent=1 // loop_header_branch
      %32 = sbr.rel (%p30) target = $region8
    $region5: #{tpu_custom_call.1} parent=1 // loop_body
      %s34 = ssub.s32 %s29, 1
      %s35 = ssub.s32 %s29, 2
      %s42 = sadd.s32 1, %s37
      %p43 = scmp.ge.s32.totalorder %s42, 7
      %s44 = scalar_select %p43, 0, %s42
      %s45 = sadd.s32 1, %s36
      %s46 = scalar_select %p43, %s45, %s36
      %p47 = scmp.ge.s32.totalorder %s46, 2
      %s48 = scalar_select %p47, 0, %s46
      %s49 = ssub.s32 %s36, %s48
      %p50 = scmp.eq.s32.totalorder %s49, 0
      %s52 = sadd.s32 %s51, 1
      %s53 = scalar_select %p50, %s51, %s52
      %p56 = pneg %p50
      %p57 = scmp.eq.s32.totalorder %s29, 13
      %p58 = por %p56, %p57
      %p59 = scmp.ne.s32.totalorder %s51, %s54
      %p60 = scmp.eq.s32.totalorder %s29, 0
      %p61 = por %p59, %p60
      %p62 = scmp.ne.s32.totalorder %s51, %s54
      %p63 = scmp.eq.s32.totalorder %s34, 13
      %p64 = por %p62, %p63
      %p65 = scmp.ne.s32.totalorder %s54, %s55
      %p66 = scmp.eq.s32.totalorder %s34, 0
      %p67 = por %p65, %p66
      %p68 = scmp.ne.s32.totalorder %s54, %s55
      %p69 = scmp.eq.s32.totalorder %s35, 13
      %p70 = por %p68, %p69
      %p72 = scmp.ne.s32.totalorder %s55, %s71
      %p73 = scmp.eq.s32.totalorder %s35, 0
      %p74 = por %p72, %p73
      %s75 = ssub.s32 %s36, %s48
      %p76 = scmp.eq.s32.totalorder %s75, 0
      %s78 = sadd.s32 %s77, 1
      %s79 = scalar_select %p76, %s77, %s78
      %p82 = pneg %p76
      %p83 = scmp.eq.s32.totalorder %s29, 13
      %p84 = por %p82, %p83
      %p85 = scmp.ne.s32.totalorder %s77, %s80
      %p86 = scmp.eq.s32.totalorder %s29, 0
      %p87 = por %p85, %p86
      %p88 = scmp.ne.s32.totalorder %s77, %s80
      %p89 = scmp.eq.s32.totalorder %s34, 13
      %p90 = por %p88, %p89
      %p91 = scmp.ne.s32.totalorder %s80, %s81
      %p92 = scmp.eq.s32.totalorder %s34, 0
      %p93 = por %p91, %p92
      %p94 = scmp.ne.s32.totalorder %s80, %s81
      %p95 = scmp.eq.s32.totalorder %s35, 13
      %p96 = por %p94, %p95
      %p98 = scmp.ne.s32.totalorder %s81, %s97
      %p99 = scmp.eq.s32.totalorder %s35, 0
      %p100 = por %p98, %p99
      %s101 = ssub.s32 %s36, %s48
      %p102 = scmp.eq.s32.totalorder %s101, 0
      %s104 = sadd.s32 %s103, 1
      %s105 = scalar_select %p102, %s103, %s104
      %p108 = pneg %p102
      %p109 = scmp.eq.s32.totalorder %s29, 13
      %p110 = por %p108, %p109
      %p111 = scmp.ne.s32.totalorder %s103, %s106
      %p112 = scmp.eq.s32.totalorder %s29, 0
      %p113 = por %p111, %p112
      %p114 = scmp.ne.s32.totalorder %s103, %s106
      %p115 = scmp.eq.s32.totalorder %s34, 13
      %p116 = por %p114, %p115
      %p117 = scmp.ne.s32.totalorder %s106, %s107
      %p118 = scmp.eq.s32.totalorder %s34, 0
      %p119 = por %p117, %p118
      %p120 = scmp.ne.s32.totalorder %s106, %s107
      %p121 = scmp.eq.s32.totalorder %s35, 13
      %p122 = por %p120, %p121
      %p124 = scmp.ne.s32.totalorder %s107, %s123
      %p125 = scmp.eq.s32.totalorder %s35, 0
      %p126 = por %p124, %p125
      %s127 = ssub.s32 %s36, %s48
      %p128 = scmp.eq.s32.totalorder %s127, 0
      %s130 = sadd.s32 %s129, 1
      %s131 = scalar_select %p128, %s129, %s130
      %p134 = pneg %p128
      %p135 = scmp.eq.s32.totalorder %s29, 13
      %p136 = por %p134, %p135
      %p137 = scmp.ne.s32.totalorder %s129, %s132
      %p138 = scmp.eq.s32.totalorder %s29, 0
      %p139 = por %p137, %p138
      %p140 = scmp.ne.s32.totalorder %s129, %s132
      %p141 = scmp.eq.s32.totalorder %s34, 13
      %p142 = por %p140, %p141
      %p143 = scmp.ne.s32.totalorder %s132, %s133
      %p144 = scmp.eq.s32.totalorder %s34, 0
      %p145 = por %p143, %p144
      %p146 = scmp.ne.s32.totalorder %s132, %s133
      %p147 = scmp.eq.s32.totalorder %s35, 13
      %p148 = por %p146, %p147
      %p150 = scmp.ne.s32.totalorder %s133, %s149
      %p151 = scmp.eq.s32.totalorder %s35, 0
      %p152 = por %p150, %p151
      %s153 = ssub.s32 %s37, %s44
      %s154 = ssub.s32 %s36, %s48
      %s155 = sor.u32 %s153, %s154
      %p156 = scmp.eq.s32.totalorder %s155, 0
      %s158 = sadd.s32 %s157, 1
      %s159 = scalar_select %p156, %s157, %s158
      %p162 = pneg %p156
      %p163 = scmp.eq.s32.totalorder %s29, 13
      %p164 = por %p162, %p163
      %p165 = scmp.ne.s32.totalorder %s157, %s160
      %p166 = scmp.eq.s32.totalorder %s29, 0
      %p167 = por %p165, %p166
      %p168 = scmp.ne.s32.totalorder %s157, %s160
      %p169 = scmp.eq.s32.totalorder %s34, 13
      %p170 = por %p168, %p169
      %p171 = scmp.ne.s32.totalorder %s160, %s161
      %p172 = scmp.eq.s32.totalorder %s34, 0
      %p173 = por %p171, %p172
      %p174 = scmp.ne.s32.totalorder %s160, %s161
      %p175 = scmp.eq.s32.totalorder %s35, 13
      %p176 = por %p174, %p175
      %p178 = scmp.ne.s32.totalorder %s161, %s177
      %p179 = scmp.eq.s32.totalorder %s35, 0
      %p180 = por %p178, %p179
      %s182 = sadd.s32 %s181, 1
      %p185 = scmp.eq.s32.totalorder %s29, 13
      %p186 = scmp.ne.s32.totalorder %s181, %s183
      %p187 = scmp.eq.s32.totalorder %s29, 0
      %p188 = por %p186, %p187
      %p189 = scmp.ne.s32.totalorder %s181, %s183
      %p190 = scmp.eq.s32.totalorder %s34, 13
      %p191 = por %p189, %p190
      %p192 = scmp.ne.s32.totalorder %s183, %s184
      %p193 = scmp.eq.s32.totalorder %s34, 0
      %p194 = por %p192, %p193
      %p195 = scmp.ne.s32.totalorder %s183, %s184
      %p196 = scmp.eq.s32.totalorder %s35, 13
      %p197 = por %p195, %p196
      %p199 = scmp.ne.s32.totalorder %s184, %s198
      %p200 = scmp.eq.s32.totalorder %s35, 0
      %p201 = por %p199, %p200
      %s203 = sadd.s32 %s202, 1
      %p206 = scmp.eq.s32.totalorder %s29, 13
      %p207 = scmp.ne.s32.totalorder %s202, %s204
      %p208 = scmp.eq.s32.totalorder %s29, 0
      %p209 = por %p207, %p208
      %p210 = scmp.ne.s32.totalorder %s202, %s204
      %p211 = scmp.eq.s32.totalorder %s34, 13
      %p212 = por %p210, %p211
      %p213 = scmp.ne.s32.totalorder %s204, %s205
      %p214 = scmp.eq.s32.totalorder %s34, 0
      %p215 = por %p213, %p214
      %p216 = scmp.ne.s32.totalorder %s204, %s205
      %p217 = scmp.eq.s32.totalorder %s35, 13
      %p218 = por %p216, %p217
      %p220 = scmp.ne.s32.totalorder %s205, %s219
      %p221 = scmp.eq.s32.totalorder %s35, 0
      %p222 = por %p220, %p221
      %s224 = sadd.s32 %s223, 1
      %p227 = scmp.eq.s32.totalorder %s29, 13
      %p228 = scmp.ne.s32.totalorder %s223, %s225
      %p229 = scmp.eq.s32.totalorder %s29, 0
      %p230 = por %p228, %p229
      %p231 = scmp.ne.s32.totalorder %s223, %s225
      %p232 = scmp.eq.s32.totalorder %s34, 13
      %p233 = por %p231, %p232
      %p234 = scmp.ne.s32.totalorder %s225, %s226
      %p235 = scmp.eq.s32.totalorder %s34, 0
      %p236 = por %p234, %p235
      %p237 = scmp.ne.s32.totalorder %s225, %s226
      %p238 = scmp.eq.s32.totalorder %s35, 13
      %p239 = por %p237, %p238
      %p241 = scmp.ne.s32.totalorder %s226, %s240
      %p242 = scmp.eq.s32.totalorder %s35, 0
      %p243 = por %p241, %p242
      %s245 = sadd.s32 %s244, 1
      %p248 = scmp.eq.s32.totalorder %s29, 13
      %p249 = scmp.ne.s32.totalorder %s244, %s246
      %p250 = scmp.eq.s32.totalorder %s29, 0
      %p251 = por %p249, %p250
      %p252 = scmp.ne.s32.totalorder %s244, %s246
      %p253 = scmp.eq.s32.totalorder %s34, 13
      %p254 = por %p252, %p253
      %p255 = scmp.ne.s32.totalorder %s246, %s247
      %p256 = scmp.eq.s32.totalorder %s34, 0
      %p257 = por %p255, %p256
      %p258 = scmp.ne.s32.totalorder %s246, %s247
      %p259 = scmp.eq.s32.totalorder %s35, 13
      %p260 = por %p258, %p259
      %p262 = scmp.ne.s32.totalorder %s247, %s261
      %p263 = scmp.eq.s32.totalorder %s35, 0
      %p264 = por %p262, %p263
      %s265 = ssub.s32 %s37, %s44
      %s266 = ssub.s32 %s36, %s48
      %s267 = sor.u32 %s265, %s266
      %p268 = scmp.eq.s32.totalorder %s267, 0
      %s270 = sadd.s32 %s269, 1
      %s271 = scalar_select %p268, %s269, %s270
      %p274 = pneg %p268
      %p275 = scmp.eq.s32.totalorder %s29, 13
      %p276 = por %p274, %p275
      %p277 = scmp.ne.s32.totalorder %s269, %s272
      %p278 = scmp.eq.s32.totalorder %s29, 0
      %p279 = por %p277, %p278
      %p280 = scmp.ne.s32.totalorder %s269, %s272
      %p281 = scmp.eq.s32.totalorder %s34, 13
      %p282 = por %p280, %p281
      %p283 = scmp.ne.s32.totalorder %s272, %s273
      %p284 = scmp.eq.s32.totalorder %s34, 0
      %p285 = por %p283, %p284
      %p286 = scmp.ne.s32.totalorder %s272, %s273
      %p287 = scmp.eq.s32.totalorder %s35, 13
      %p288 = por %p286, %p287
      %p290 = scmp.ne.s32.totalorder %s273, %s289
      %p291 = scmp.eq.s32.totalorder %s35, 0
      %p292 = por %p290, %p291
      %p293 = scmp.le.s32.totalorder 1, %s29
      %p294 = scmp.lt.s32.totalorder %s29, 15
      %p295 = pnand %p293, %p294
      %p296 = pneg %p295
      // Predicated region
      $region9: #{tpu_custom_call.1} parent=5 // pred_check
        _
      $region10: #{tpu_custom_call.1} parent=5 // pred_check_branch
        %298 = sbr.rel (%p295) target = $region12
      $region11: #{tpu_custom_call.1} parent=5 // pred_region
        %s299 = ssub.s32 %s29, 1
        // Predicated region
        $region13: #{tpu_custom_call.1} parent=11 // pred_check
          %p300 = pneg %p194
        $region14: #{tpu_custom_call.1} parent=11 // pred_check_branch
          %302 = sbr.rel (%p300) target = $region16
        $region15: #{tpu_custom_call.1} parent=11 // pred_region
          %304 = vsyncadd [#allocation14], 0
          %s305 = sshll.u32 %s5, 4
          %s306 = int_to_ptr.hbm [resolvable:$true] %s305
          %s307 = sshll.u32 [#allocation13], 4
          %s308 = int_to_ptr.vmem [resolvable:$true] %s307
          %313 = dma.hbm_to_vmem [thread:$0]  %s306, 6144, %s308, [#allocation14], 384, 384, 24
        $region16: #{tpu_custom_call.1} parent=11 // pred_fallthru
          _
        // Predicated region
        $region17: #{tpu_custom_call.1} parent=11 // pred_check
          %p314 = pneg %p215
        $region18: #{tpu_custom_call.1} parent=11 // pred_check_branch
          %316 = sbr.rel (%p314) target = $region20
        $region19: #{tpu_custom_call.1} parent=11 // pred_region
          %318 = vsyncadd [#allocation14], 0
          %s320 = sshll.u32 %s6, 4
          %s321 = int_to_ptr.hbm [resolvable:$true] %s320
          %s322 = sshll.u32 [#allocation15], 4
          %s323 = int_to_ptr.vmem [resolvable:$true] %s322
          %325 = dma.hbm_to_vmem [thread:$0]  %s321, 96, %s323, [#allocation14]
        $region20: #{tpu_custom_call.1} parent=11 // pred_fallthru
          _
        // Predicated region
        $region21: #{tpu_custom_call.1} parent=11 // pred_check
          %p326 = pneg %p236
        $region22: #{tpu_custom_call.1} parent=11 // pred_check_branch
          %328 = sbr.rel (%p326) target = $region24
        $region23: #{tpu_custom_call.1} parent=11 // pred_region
          _
        $region24: #{tpu_custom_call.1} parent=11 // pred_fallthru
          _
        // Predicated region
        $region25: #{tpu_custom_call.1} parent=11 // pred_check
          %p329 = pneg %p257
        $region26: #{tpu_custom_call.1} parent=11 // pred_check_branch
          %331 = sbr.rel (%p329) target = $region28
        $region27: #{tpu_custom_call.1} parent=11 // pred_region
          %333 = vsyncadd [#allocation17], 0
          %s334 = sshll.u32 %s8, 4
          %s335 = int_to_ptr.hbm [resolvable:$true] %s334
          %s336 = sshll.u32 [#allocation16], 4
          %s337 = int_to_ptr.vmem [resolvable:$true] %s336
          %342 = dma.hbm_to_vmem [thread:$0]  %s335, 4096, %s337, [#allocation17], 256, 256, 16
        $region28: #{tpu_custom_call.1} parent=11 // pred_fallthru
          _
      $region12: #{tpu_custom_call.1} parent=5 // pred_fallthru
        _
      %p343 = scmp.lt.s32.totalorder %s29, 14
      // Predicated region
      $region29: #{tpu_custom_call.1} parent=5 // pred_check
        %p344 = pneg %p343
      $region30: #{tpu_custom_call.1} parent=5 // pred_check_branch
        %346 = sbr.rel (%p344) target = $region32
      $region31: #{tpu_custom_call.1} parent=5 // pred_region
        // Predicated region
        $region33: #{tpu_custom_call.1} parent=31 // pred_check
          %p347 = pneg %p61
        $region34: #{tpu_custom_call.1} parent=31 // pred_check_branch
          %349 = sbr.rel (%p347) target = $region36
        $region35: #{tpu_custom_call.1} parent=31 // pred_region
          %s350 = sand.u32 %s51, 1
          %s351 = scalar_lea.sflag [#allocation5], %s350
          %s352 = sand.u32 %s51, 1
          %s353 = smul.addr %s352, 64
          %s354 = scalar_lea.vmem [#allocation4], %s353
          %s355 = smul.u32 8, %s36
          %357 = vsyncadd %s351, 0
          %s358 = smul.addr %s355, 2
          %s359 = smul.addr %s358, 4
          %s360 = scalar_lea.hbm %s0, %s359
          %s361 = sshll.u32 %s360, 4
          %s362 = int_to_ptr.hbm [resolvable:$true] %s361
          %s363 = sshll.u32 %s354, 4
          %s364 = int_to_ptr.vmem [resolvable:$true] %s363
          %369 = dma.hbm_to_vmem [thread:$0]  %s362, 1024, %s364, %s351, 64, 64, 4
        $region36: #{tpu_custom_call.1} parent=31 // pred_fallthru
          _
        // Predicated region
        $region37: #{tpu_custom_call.1} parent=31 // pred_check
          %p370 = pneg %p87
        $region38: #{tpu_custom_call.1} parent=31 // pred_check_branch
          %372 = sbr.rel (%p370) target = $region40
        $region39: #{tpu_custom_call.1} parent=31 // pred_region
          %s373 = sand.u32 %s29, 1
          %s374 = scalar_lea.sflag [#allocation8], %s373
          %s375 = sand.u32 %s77, 1
          %s376 = smul.addr %s375, 64
          %s377 = scalar_lea.vmem [#allocation7], %s376
          %s378 = smul.u32 8, %s36
          %380 = vsyncadd %s374, 0
          %s381 = smul.addr %s378, 2
          %s382 = smul.addr %s381, 4
          %s383 = scalar_lea.hbm %s1, %s382
          %s384 = sshll.u32 %s383, 4
          %s385 = int_to_ptr.hbm [resolvable:$true] %s384
          %s386 = sshll.u32 %s377, 4
          %s387 = int_to_ptr.vmem [resolvable:$true] %s386
          %392 = dma.hbm_to_vmem [thread:$0]  %s385, 1024, %s387, %s374, 64, 64, 4
        $region40: #{tpu_custom_call.1} parent=31 // pred_fallthru
          _
        // Predicated region
        $region41: #{tpu_custom_call.1} parent=31 // pred_check
          %p393 = pneg %p113
        $region42: #{tpu_custom_call.1} parent=31 // pred_check_branch
          %395 = sbr.rel (%p393) target = $region44
        $region43: #{tpu_custom_call.1} parent=31 // pred_region
          %s396 = sand.u32 %s29, 1
          %s397 = scalar_lea.sflag [#allocation8], %s396
          %s398 = sand.u32 %s103, 1
          %s399 = smul.addr %s398, 4
          %s400 = scalar_lea.vmem [#allocation9], %s399
          %402 = vsyncadd %s397, 0
          %s403 = smul.addr %s36, 4
          %s404 = scalar_lea.hbm %s2, %s403
          %s406 = sshll.u32 %s404, 4
          %s407 = int_to_ptr.hbm [resolvable:$true] %s406
          %s408 = sshll.u32 %s400, 4
          %s409 = int_to_ptr.vmem [resolvable:$true] %s408
          %411 = dma.hbm_to_vmem [thread:$0]  %s407, 64, %s409, %s397
        $region44: #{tpu_custom_call.1} parent=31 // pred_fallthru
          _
        // Predicated region
        $region45: #{tpu_custom_call.1} parent=31 // pred_check
          %p412 = pneg %p139
        $region46: #{tpu_custom_call.1} parent=31 // pred_check_branch
          %414 = sbr.rel (%p412) target = $region48
        $region47: #{tpu_custom_call.1} parent=31 // pred_region
          %s415 = sand.u32 %s29, 1
          %s416 = scalar_lea.sflag [#allocation11], %s415
          %s417 = sand.u32 %s129, 1
          %s418 = smul.addr %s417, 8
          %s419 = scalar_lea.vmem [#allocation10], %s418
          %421 = vsyncadd %s416, 0
          %s422 = smul.addr %s36, 8
          %s423 = scalar_lea.hbm %s3, %s422
          %s425 = sshll.u32 %s423, 4
          %s426 = int_to_ptr.hbm [resolvable:$true] %s425
          %s427 = sshll.u32 %s419, 4
          %s428 = int_to_ptr.vmem [resolvable:$true] %s427
          %430 = dma.hbm_to_vmem [thread:$0]  %s426, 128, %s428, %s416
        $region48: #{tpu_custom_call.1} parent=31 // pred_fallthru
          _
        // Predicated region
        $region49: #{tpu_custom_call.1} parent=31 // pred_check
          %p431 = pneg %p167
        $region50: #{tpu_custom_call.1} parent=31 // pred_check_branch
          %433 = sbr.rel (%p431) target = $region52
        $region51: #{tpu_custom_call.1} parent=31 // pred_region
          %s434 = sand.u32 %s29, 1
          %s435 = scalar_lea.sflag [#allocation11], %s434
          %s436 = sand.u32 %s157, 1
          %s437 = smul.addr %s436, 16
          %s438 = scalar_lea.vmem [#allocation12], %s437
          %440 = vsyncadd %s435, 0
          %s441 = smul.addr %s36, 4
          %s442 = smul.addr %s37, 8
          %s443 = sadd.s32 %s441, %s442
          %s444 = smul.addr %s443, 4
          %s445 = scalar_lea.hbm %s4, %s444
          %s447 = sshll.u32 %s445, 4
          %s448 = int_to_ptr.hbm [resolvable:$true] %s447
          %s449 = sshll.u32 %s438, 4
          %s450 = int_to_ptr.vmem [resolvable:$true] %s449
          %452 = dma.hbm_to_vmem [thread:$0]  %s448, 256, %s450, %s435
        $region52: #{tpu_custom_call.1} parent=31 // pred_fallthru
          _
      $region32: #{tpu_custom_call.1} parent=5 // pred_fallthru
        _
      %p453 = scmp.le.s32.totalorder 1, %s29
      %p454 = scmp.lt.s32.totalorder %s29, 15
      %p455 = pnand %p453, %p454
      %p456 = pneg %p455
      // Predicated region
      $region53: #{tpu_custom_call.1} parent=5 // pred_check
        _
      $region54: #{tpu_custom_call.1} parent=5 // pred_check_branch
        %458 = sbr.rel (%p455) target = $region56
      $region55: #{tpu_custom_call.1} parent=5 // pred_region
        %s459 = ssub.s32 %s29, 1
        %s460 = sand.u32 %s54, 1
        %s461 = scalar_lea.sflag [#allocation5], %s460
        %s462 = sand.u32 %s54, 1
        %s463 = smul.addr %s462, 64
        %s464 = scalar_lea.vmem [#allocation4], %s463
        // Predicated region
        $region57: #{tpu_custom_call.1} parent=55 // pred_check
          %p465 = pneg %p67
        $region58: #{tpu_custom_call.1} parent=55 // pred_check_branch
          %467 = sbr.rel (%p465) target = $region60
        $region59: #{tpu_custom_call.1} parent=55 // pred_region
          %469 = dma.done %s461, 1024
        $region60: #{tpu_custom_call.1} parent=55 // pred_fallthru
          _
        %s470 = sand.u32 %s34, 1
        %s471 = scalar_lea.sflag [#allocation8], %s470
        %s472 = sand.u32 %s80, 1
        %s473 = smul.addr %s472, 64
        %s474 = scalar_lea.vmem [#allocation7], %s473
        // Predicated region
        $region61: #{tpu_custom_call.1} parent=55 // pred_check
          %p475 = pneg %p93
        $region62: #{tpu_custom_call.1} parent=55 // pred_check_branch
          %477 = sbr.rel (%p475) target = $region64
        $region63: #{tpu_custom_call.1} parent=55 // pred_region
          %479 = dma.done %s471, 1024
        $region64: #{tpu_custom_call.1} parent=55 // pred_fallthru
          _
        %s480 = sand.u32 %s34, 1
        %s481 = scalar_lea.sflag [#allocation8], %s480
        %s482 = sand.u32 %s106, 1
        %s483 = smul.addr %s482, 4
        %s484 = scalar_lea.vmem [#allocation9], %s483
        // Predicated region
        $region65: #{tpu_custom_call.1} parent=55 // pred_check
          %p485 = pneg %p119
        $region66: #{tpu_custom_call.1} parent=55 // pred_check_branch
          %487 = sbr.rel (%p485) target = $region68
        $region67: #{tpu_custom_call.1} parent=55 // pred_region
          %489 = dma.done %s481, 64
        $region68: #{tpu_custom_call.1} parent=55 // pred_fallthru
          _
        %s490 = sand.u32 %s34, 1
        %s491 = scalar_lea.sflag [#allocation11], %s490
        %s492 = sand.u32 %s132, 1
        %s493 = smul.addr %s492, 8
        %s494 = scalar_lea.vmem [#allocation10], %s493
        // Predicated region
        $region69: #{tpu_custom_call.1} parent=55 // pred_check
          %p495 = pneg %p145
        $region70: #{tpu_custom_call.1} parent=55 // pred_check_branch
          %497 = sbr.rel (%p495) target = $region72
        $region71: #{tpu_custom_call.1} parent=55 // pred_region
          %499 = dma.done %s491, 128
        $region72: #{tpu_custom_call.1} parent=55 // pred_fallthru
          _
        %s500 = sand.u32 %s34, 1
        %s501 = scalar_lea.sflag [#allocation11], %s500
        %s502 = sand.u32 %s160, 1
        %s503 = smul.addr %s502, 16
        %s504 = scalar_lea.vmem [#allocation12], %s503
        // Predicated region
        $region73: #{tpu_custom_call.1} parent=55 // pred_check
          %p505 = pneg %p173
        $region74: #{tpu_custom_call.1} parent=55 // pred_check_branch
          %507 = sbr.rel (%p505) target = $region76
        $region75: #{tpu_custom_call.1} parent=55 // pred_region
          %509 = dma.done %s501, 256
        $region76: #{tpu_custom_call.1} parent=55 // pred_fallthru
          _
        // Predicated region
        $region77: #{tpu_custom_call.1} parent=55 // pred_check
          %p510 = pneg %p194
        $region78: #{tpu_custom_call.1} parent=55 // pred_check_branch
          %512 = sbr.rel (%p510) target = $region80
        $region79: #{tpu_custom_call.1} parent=55 // pred_region
          %514 = dma.done [#allocation14], 6144
        $region80: #{tpu_custom_call.1} parent=55 // pred_fallthru
          _
        // Predicated region
        $region81: #{tpu_custom_call.1} parent=55 // pred_check
          %p515 = pneg %p215
        $region82: #{tpu_custom_call.1} parent=55 // pred_check_branch
          %517 = sbr.rel (%p515) target = $region84
        $region83: #{tpu_custom_call.1} parent=55 // pred_region
          %519 = dma.done [#allocation14], 96
        $region84: #{tpu_custom_call.1} parent=55 // pred_fallthru
          _
        // Predicated region
        $region85: #{tpu_custom_call.1} parent=55 // pred_check
          %p520 = pneg %p257
        $region86: #{tpu_custom_call.1} parent=55 // pred_check_branch
          %522 = sbr.rel (%p520) target = $region88
        $region87: #{tpu_custom_call.1} parent=55 // pred_region
          %524 = dma.done [#allocation17], 4096
        $region88: #{tpu_custom_call.1} parent=55 // pred_fallthru
          _
        %s525 = sand.u32 %s54, 1
        %s526 = scalar_lea.sflag [#allocation5], %s525
        %s527 = sand.u32 %s54, 1
        %s528 = smul.addr %s527, 64
        %s529 = scalar_lea.vmem [#allocation4], %s528
        %p530 = pneg %p67
        %p531 = pneg %p64
        %s532 = sand.u32 %s34, 1
        %s533 = scalar_lea.sflag [#allocation8], %s532
        %s534 = sand.u32 %s80, 1
        %s535 = smul.addr %s534, 64
        %s536 = scalar_lea.vmem [#allocation7], %s535
        %p537 = pneg %p93
        %p538 = pneg %p90
        %s539 = sand.u32 %s34, 1
        %s540 = scalar_lea.sflag [#allocation8], %s539
        %s541 = sand.u32 %s106, 1
        %s542 = smul.addr %s541, 4
        %s543 = scalar_lea.vmem [#allocation9], %s542
        %p544 = pneg %p119
        %p545 = pneg %p116
        %s546 = sand.u32 %s34, 1
        %s547 = scalar_lea.sflag [#allocation11], %s546
        %s548 = sand.u32 %s132, 1
        %s549 = smul.addr %s548, 8
        %s550 = scalar_lea.vmem [#allocation10], %s549
        %p551 = pneg %p145
        %p552 = pneg %p142
        %s553 = sand.u32 %s34, 1
        %s554 = scalar_lea.sflag [#allocation11], %s553
        %s555 = sand.u32 %s160, 1
        %s556 = smul.addr %s555, 16
        %s557 = scalar_lea.vmem [#allocation12], %s556
        %p558 = pneg %p173
        %p559 = pneg %p170
        %p560 = pneg %p194
        %p561 = pneg %p191
        %p562 = pneg %p215
        %p563 = pneg %p212
        %p564 = pneg %p236
        %p565 = pneg %p233
        %p566 = pneg %p257
        %p567 = pneg %p254
        %p568 = pneg %p285
        %p569 = pneg %p282
        %s570 = sand.u32 %s272, 1
        %s571 = scalar_lea.sflag [#allocation6], %s570
        %s572 = sand.u32 %s272, 1
        %s573 = smul.addr %s572, 4
        %s574 = scalar_lea.vmem [#allocation18], %s573
        %s575 = smul.u32 8, %s38
        %s576 = smul.u32 8, %s38
        %p578 = scmp.eq.s32.totalorder %s39, 0
        // Predicated region
        $region89: #{tpu_custom_call.1} parent=55 // pred_check
          %p579 = pneg %p578
        $region90: #{tpu_custom_call.1} parent=55 // pred_check_branch
          %581 = sbr.rel (%p579) target = $region92
        $region91: #{tpu_custom_call.1} parent=55 // pred_region
          %v582 = vld [vmem:[%s484] sm:$0xf]
          %583 = vst [vmem:[#allocation2] sm:$0xf] %v582
          %v584 = vld [vmem:[%s494] sm:$0xff]
          %585 = vst [vmem:[#allocation3] sm:$0xff] %v584
        $region92: #{tpu_custom_call.1} parent=55 // pred_fallthru
          _
        %v586 = vld [vmem:[#allocation2] sm:$0xf]
        %v587 = vld [vmem:[#allocation3] sm:$0xff]
        %v588 = vld [vmem:[%s464] sm:$0xf]
        %v589 = vld [vmem:[%s464 + $0x4] sm:$0xf]
        %v590 = vld [vmem:[%s464 + $0x8] sm:$0xf]
        %v591 = vld [vmem:[%s464 + $0xc] sm:$0xf]
        %v592 = vld [vmem:[%s464 + $0x10] sm:$0xf]
        %v593 = vld [vmem:[%s464 + $0x14] sm:$0xf]
        %v594 = vld [vmem:[%s464 + $0x18] sm:$0xf]
        %v595 = vld [vmem:[%s464 + $0x1c] sm:$0xf]
        %v596 = vld [vmem:[%s464 + $0x20] sm:$0xf]
        %v597 = vld [vmem:[%s464 + $0x24] sm:$0xf]
        %v598 = vld [vmem:[%s464 + $0x28] sm:$0xf]
        %v599 = vld [vmem:[%s464 + $0x2c] sm:$0xf]
        %v600 = vld [vmem:[%s464 + $0x30] sm:$0xf]
        %v601 = vld [vmem:[%s464 + $0x34] sm:$0xf]
        %v602 = vld [vmem:[%s464 + $0x38] sm:$0xf]
        %v603 = vld [vmem:[%s464 + $0x3c] sm:$0xf]
        %v604 = vld [vmem:[#allocation13] sm:$0xff]
        %v605 = vld [vmem:[#allocation13 + $0x8] sm:$0xff]
        %v606 = vld [vmem:[#allocation13 + $0x10] sm:$0xff]
        %v607 = vld [vmem:[#allocation13 + $0x18] sm:$0xff]
        %v608 = vld [vmem:[#allocation13 + $0x20] sm:$0xff]
        %v609 = vld [vmem:[#allocation13 + $0x28] sm:$0xff]
        %v610 = vld [vmem:[#allocation13 + $0x30] sm:$0xff]
        %v611 = vld [vmem:[#allocation13 + $0x38] sm:$0xff]
        %v612 = vld [vmem:[#allocation13 + $0x40] sm:$0xff]
        %v613 = vld [vmem:[#allocation13 + $0x48] sm:$0xff]
        %v614 = vld [vmem:[#allocation13 + $0x50] sm:$0xff]
        %v615 = vld [vmem:[#allocation13 + $0x58] sm:$0xff]
        %v616 = vld [vmem:[#allocation13 + $0x60] sm:$0xff]
        %v617 = vld [vmem:[#allocation13 + $0x68] sm:$0xff]
        %v618 = vld [vmem:[#allocation13 + $0x70] sm:$0xff]
        %v619 = vld [vmem:[#allocation13 + $0x78] sm:$0xff]
        %v620 = vld [vmem:[#allocation13 + $0x80] sm:$0xff]
        %v621 = vld [vmem:[#allocation13 + $0x88] sm:$0xff]
        %v622 = vld [vmem:[#allocation13 + $0x90] sm:$0xff]
        %v623 = vld [vmem:[#allocation13 + $0x98] sm:$0xff]
        %v624 = vld [vmem:[#allocation13 + $0xa0] sm:$0xff]
        %v625 = vld [vmem:[#allocation13 + $0xa8] sm:$0xff]
        %v626 = vld [vmem:[#allocation13 + $0xb0] sm:$0xff]
        %v627 = vld [vmem:[#allocation13 + $0xb8] sm:$0xff]
        %v628 = vld [vmem:[#allocation13 + $0xc0] sm:$0xff]
        %v629 = vld [vmem:[#allocation13 + $0xc8] sm:$0xff]
        %v630 = vld [vmem:[#allocation13 + $0xd0] sm:$0xff]
        %v631 = vld [vmem:[#allocation13 + $0xd8] sm:$0xff]
        %v632 = vld [vmem:[#allocation13 + $0xe0] sm:$0xff]
        %v633 = vld [vmem:[#allocation13 + $0xe8] sm:$0xff]
        %v634 = vld [vmem:[#allocation13 + $0xf0] sm:$0xff]
        %v635 = vld [vmem:[#allocation13 + $0xf8] sm:$0xff]
        %v636 = vld [vmem:[#allocation13 + $0x100] sm:$0xff]
        %v637 = vld [vmem:[#allocation13 + $0x108] sm:$0xff]
        %v638 = vld [vmem:[#allocation13 + $0x110] sm:$0xff]
        %v639 = vld [vmem:[#allocation13 + $0x118] sm:$0xff]
        %v640 = vld [vmem:[#allocation13 + $0x120] sm:$0xff]
        %v641 = vld [vmem:[#allocation13 + $0x128] sm:$0xff]
        %v642 = vld [vmem:[#allocation13 + $0x130] sm:$0xff]
        %v643 = vld [vmem:[#allocation13 + $0x138] sm:$0xff]
        %v644 = vld [vmem:[#allocation13 + $0x140] sm:$0xff]
        %v645 = vld [vmem:[#allocation13 + $0x148] sm:$0xff]
        %v646 = vld [vmem:[#allocation13 + $0x150] sm:$0xff]
        %v647 = vld [vmem:[#allocation13 + $0x158] sm:$0xff]
        %v648 = vld [vmem:[#allocation13 + $0x160] sm:$0xff]
        %v649 = vld [vmem:[#allocation13 + $0x168] sm:$0xff]
        %v650 = vld [vmem:[#allocation13 + $0x170] sm:$0xff]
        %v651 = vld [vmem:[#allocation13 + $0x178] sm:$0xff]
        %v652 = vld [vmem:[#allocation15] sm:$0x3f]
        %v654 = vperm.slane %v652, 0
        %v655 = vperm.slane %v652, 1
        %v656 = vperm.slane %v652, 2
        %v657 = vperm.slane %v652, 3
        %v658 = vperm.slane %v652, 4
        %v659 = vperm.slane %v652, 5
        %v714 = vunpack.c.l.b16 %v604
        %v715 = vunpack.c.h.b16 %v604
        %v716 = vunpack.c.l.b16 %v605
        %v717 = vunpack.c.h.b16 %v605
        %v718 = vunpack.c.l.b16 %v606
        %v719 = vunpack.c.h.b16 %v606
        %v720 = vunpack.c.l.b16 %v607
        %v721 = vunpack.c.h.b16 %v607
        %v722 = vunpack.c.l.b16 %v608
        %v723 = vunpack.c.h.b16 %v608
        %v724 = vunpack.c.l.b16 %v609
        %v725 = vunpack.c.h.b16 %v609
        %v726 = vunpack.c.l.b16 %v610
        %v727 = vunpack.c.h.b16 %v610
        %v728 = vunpack.c.l.b16 %v611
        %v729 = vunpack.c.h.b16 %v611
        %v730 = vunpack.c.l.b16 %v612
        %v731 = vunpack.c.h.b16 %v612
        %v732 = vunpack.c.l.b16 %v613
        %v733 = vunpack.c.h.b16 %v613
        %v734 = vunpack.c.l.b16 %v614
        %v735 = vunpack.c.h.b16 %v614
        %v736 = vunpack.c.l.b16 %v615
        %v737 = vunpack.c.h.b16 %v615
        %v738 = vunpack.c.l.b16 %v616
        %v739 = vunpack.c.h.b16 %v616
        %v740 = vunpack.c.l.b16 %v617
        %v741 = vunpack.c.h.b16 %v617
        %v742 = vunpack.c.l.b16 %v618
        %v743 = vunpack.c.h.b16 %v618
        %v744 = vunpack.c.l.b16 %v619
        %v745 = vunpack.c.h.b16 %v619
        %v746 = vunpack.c.l.b16 %v620
        %v747 = vunpack.c.h.b16 %v620
        %v748 = vunpack.c.l.b16 %v621
        %v749 = vunpack.c.h.b16 %v621
        %v750 = vunpack.c.l.b16 %v622
        %v751 = vunpack.c.h.b16 %v622
        %v752 = vunpack.c.l.b16 %v623
        %v753 = vunpack.c.h.b16 %v623
        %v754 = vunpack.c.l.b16 %v624
        %v755 = vunpack.c.h.b16 %v624
        %v756 = vunpack.c.l.b16 %v625
        %v757 = vunpack.c.h.b16 %v625
        %v758 = vunpack.c.l.b16 %v626
        %v759 = vunpack.c.h.b16 %v626
        %v760 = vunpack.c.l.b16 %v627
        %v761 = vunpack.c.h.b16 %v627
        %v762 = vunpack.c.l.b16 %v628
        %v763 = vunpack.c.h.b16 %v628
        %v764 = vunpack.c.l.b16 %v629
        %v765 = vunpack.c.h.b16 %v629
        %v766 = vunpack.c.l.b16 %v630
        %v767 = vunpack.c.h.b16 %v630
        %v768 = vunpack.c.l.b16 %v631
        %v769 = vunpack.c.h.b16 %v631
        %v770 = vunpack.c.l.b16 %v632
        %v771 = vunpack.c.h.b16 %v632
        %v772 = vunpack.c.l.b16 %v633
        %v773 = vunpack.c.h.b16 %v633
        %v774 = vunpack.c.l.b16 %v634
        %v775 = vunpack.c.h.b16 %v634
        %v776 = vunpack.c.l.b16 %v635
        %v777 = vunpack.c.h.b16 %v635
        %v778 = vunpack.c.l.b16 %v636
        %v779 = vunpack.c.h.b16 %v636
        %v780 = vunpack.c.l.b16 %v637
        %v781 = vunpack.c.h.b16 %v637
        %v782 = vunpack.c.l.b16 %v638
        %v783 = vunpack.c.h.b16 %v638
        %v784 = vunpack.c.l.b16 %v639
        %v785 = vunpack.c.h.b16 %v639
        %v786 = vunpack.c.l.b16 %v640
        %v787 = vunpack.c.h.b16 %v640
        %v788 = vunpack.c.l.b16 %v641
        %v789 = vunpack.c.h.b16 %v641
        %v790 = vunpack.c.l.b16 %v642
        %v791 = vunpack.c.h.b16 %v642
        %v792 = vunpack.c.l.b16 %v643
        %v793 = vunpack.c.h.b16 %v643
        %v794 = vunpack.c.l.b16 %v644
        %v795 = vunpack.c.h.b16 %v644
        %v796 = vunpack.c.l.b16 %v645
        %v797 = vunpack.c.h.b16 %v645
        %v798 = vunpack.c.l.b16 %v646
        %v799 = vunpack.c.h.b16 %v646
        %v800 = vunpack.c.l.b16 %v647
        %v801 = vunpack.c.h.b16 %v647
        %v802 = vunpack.c.l.b16 %v648
        %v803 = vunpack.c.h.b16 %v648
        %v804 = vunpack.c.l.b16 %v649
        %v805 = vunpack.c.h.b16 %v649
        %v806 = vunpack.c.l.b16 %v650
        %v807 = vunpack.c.h.b16 %v650
        %v808 = vunpack.c.l.b16 %v651
        %v809 = vunpack.c.h.b16 %v651
        %v810 = vpack.c.b16 %v720, %v714
        %v811 = vpack.c.b16 %v721, %v715
        %v812 = vpack.c.b16 %v722, %v716
        %v813 = vpack.c.b16 %v723, %v717
        %v814 = vpack.c.b16 %v724, %v718
        %v815 = vpack.c.b16 %v725, %v719
        %v816 = vpack.c.b16 %v732, %v726
        %v817 = vpack.c.b16 %v733, %v727
        %v818 = vpack.c.b16 %v734, %v728
        %v819 = vpack.c.b16 %v735, %v729
        %v820 = vpack.c.b16 %v736, %v730
        %v821 = vpack.c.b16 %v737, %v731
        %v822 = vpack.c.b16 %v744, %v738
        %v823 = vpack.c.b16 %v745, %v739
        %v824 = vpack.c.b16 %v746, %v740
        %v825 = vpack.c.b16 %v747, %v741
        %v826 = vpack.c.b16 %v748, %v742
        %v827 = vpack.c.b16 %v749, %v743
        %v828 = vpack.c.b16 %v756, %v750
        %v829 = vpack.c.b16 %v757, %v751
        %v830 = vpack.c.b16 %v758, %v752
        %v831 = vpack.c.b16 %v759, %v753
        %v832 = vpack.c.b16 %v760, %v754
        %v833 = vpack.c.b16 %v761, %v755
        %v834 = vpack.c.b16 %v768, %v762
        %v835 = vpack.c.b16 %v769, %v763
        %v836 = vpack.c.b16 %v770, %v764
        %v837 = vpack.c.b16 %v771, %v765
        %v838 = vpack.c.b16 %v772, %v766
        %v839 = vpack.c.b16 %v773, %v767
        %v840 = vpack.c.b16 %v780, %v774
        %v841 = vpack.c.b16 %v781, %v775
        %v842 = vpack.c.b16 %v782, %v776
        %v843 = vpack.c.b16 %v783, %v777
        %v844 = vpack.c.b16 %v784, %v778
        %v845 = vpack.c.b16 %v785, %v779
        %v846 = vpack.c.b16 %v792, %v786
        %v847 = vpack.c.b16 %v793, %v787
        %v848 = vpack.c.b16 %v794, %v788
        %v849 = vpack.c.b16 %v795, %v789
        %v850 = vpack.c.b16 %v796, %v790
        %v851 = vpack.c.b16 %v797, %v791
        %v852 = vpack.c.b16 %v804, %v798
        %v853 = vpack.c.b16 %v805, %v799
        %v854 = vpack.c.b16 %v806, %v800
        %v855 = vpack.c.b16 %v807, %v801
        %v856 = vpack.c.b16 %v808, %v802
        %v857 = vpack.c.b16 %v809, %v803
        %906 = vmatpush.bf16.msra.mxu0 %v852
        %907 = vmatpush.bf16.msra.mxu0 %v846
        %908 = vmatpush.bf16.msra.mxu0 %v840
        %909 = vmatpush.bf16.msra.mxu0 %v834
        %910 = vmatpush.bf16.msra.mxu0 %v828
        %911 = vmatpush.bf16.msra.mxu0 %v822
        %912 = vmatpush.bf16.msra.mxu0 %v816
        %913 = vmatpush.bf16.msra.mxu0 %v810
        %914 = vmatmul.bf16.gmra.mxu0 %v586
        %v915 = vpop.f32.mrf.mxu0
        %v916 = vadd.f32 %v654, %v915
        %v917 = vpop.f32.mrf.mxu0
        %918 = vdwg.mxu0
        %919 = vmatpush.bf16.msra.mxu0 %v853
        %920 = vmatpush.bf16.msra.mxu0 %v847
        %921 = vmatpush.bf16.msra.mxu0 %v841
        %922 = vmatpush.bf16.msra.mxu0 %v835
        %923 = vmatpush.bf16.msra.mxu0 %v829
        %924 = vmatpush.bf16.msra.mxu0 %v823
        %925 = vmatpush.bf16.msra.mxu0 %v817
        %926 = vmatpush.bf16.msra.mxu0 %v811
        %927 = vmatmul.bf16.gmra.mxu0 %v586
        %v928 = vpop.f32.mrf.mxu0
        %v929 = vadd.f32 %v655, %v928
        %v930 = vpop.f32.mrf.mxu0
        %931 = vdwg.mxu0
        %932 = vmatpush.bf16.msra.mxu0 %v854
        %933 = vmatpush.bf16.msra.mxu0 %v848
        %934 = vmatpush.bf16.msra.mxu0 %v842
        %935 = vmatpush.bf16.msra.mxu0 %v836
        %936 = vmatpush.bf16.msra.mxu0 %v830
        %937 = vmatpush.bf16.msra.mxu0 %v824
        %938 = vmatpush.bf16.msra.mxu0 %v818
        %939 = vmatpush.bf16.msra.mxu0 %v812
        %940 = vmatmul.bf16.gmra.mxu0 %v586
        %v941 = vpop.f32.mrf.mxu0
        %v942 = vadd.f32 %v656, %v941
        %v943 = vpop.f32.mrf.mxu0
        %944 = vdwg.mxu0
        %945 = vmatpush.bf16.msra.mxu0 %v855
        %946 = vmatpush.bf16.msra.mxu0 %v849
        %947 = vmatpush.bf16.msra.mxu0 %v843
        %948 = vmatpush.bf16.msra.mxu0 %v837
        %949 = vmatpush.bf16.msra.mxu0 %v831
        %950 = vmatpush.bf16.msra.mxu0 %v825
        %951 = vmatpush.bf16.msra.mxu0 %v819
        %952 = vmatpush.bf16.msra.mxu0 %v813
        %953 = vmatmul.bf16.gmra.mxu0 %v586
        %v954 = vpop.f32.mrf.mxu0
        %v955 = vadd.f32 %v657, %v954
        %v956 = vpop.f32.mrf.mxu0
        %957 = vdwg.mxu0
        %958 = vmatpush.bf16.msra.mxu0 %v856
        %959 = vmatpush.bf16.msra.mxu0 %v850
        %960 = vmatpush.bf16.msra.mxu0 %v844
        %961 = vmatpush.bf16.msra.mxu0 %v838
        %962 = vmatpush.bf16.msra.mxu0 %v832
        %963 = vmatpush.bf16.msra.mxu0 %v826
        %964 = vmatpush.bf16.msra.mxu0 %v820
        %965 = vmatpush.bf16.msra.mxu0 %v814
        %966 = vmatmul.bf16.gmra.mxu0 %v586
        %v967 = vpop.f32.mrf.mxu0
        %v968 = vadd.f32 %v658, %v967
        %v969 = vpop.f32.mrf.mxu0
        %970 = vdwg.mxu0
        %971 = vmatpush.bf16.msra.mxu0 %v857
        %972 = vmatpush.bf16.msra.mxu0 %v851
        %973 = vmatpush.bf16.msra.mxu0 %v845
        %974 = vmatpush.bf16.msra.mxu0 %v839
        %975 = vmatpush.bf16.msra.mxu0 %v833
        %976 = vmatpush.bf16.msra.mxu0 %v827
        %977 = vmatpush.bf16.msra.mxu0 %v821
        %978 = vmatpush.bf16.msra.mxu0 %v815
        %979 = vmatmul.bf16.gmra.mxu0 %v586
        %v980 = vpop.f32.mrf.mxu0
        %v981 = vadd.f32 %v659, %v980
        %v982 = vpop.f32.mrf.mxu0
        %983 = vdwg.mxu0
        %v984 = vld [vmem:[%s474] sm:$0xf]
        %v985 = vld [vmem:[%s474 + $0x4] sm:$0xf]
        %v986 = vld [vmem:[%s474 + $0x8] sm:$0xf]
        %v987 = vld [vmem:[%s474 + $0xc] sm:$0xf]
        %v988 = vld [vmem:[%s474 + $0x10] sm:$0xf]
        %v989 = vld [vmem:[%s474 + $0x14] sm:$0xf]
        %v990 = vld [vmem:[%s474 + $0x18] sm:$0xf]
        %v991 = vld [vmem:[%s474 + $0x1c] sm:$0xf]
        %v992 = vld [vmem:[%s474 + $0x20] sm:$0xf]
        %v993 = vld [vmem:[%s474 + $0x24] sm:$0xf]
        %v994 = vld [vmem:[%s474 + $0x28] sm:$0xf]
        %v995 = vld [vmem:[%s474 + $0x2c] sm:$0xf]
        %v996 = vld [vmem:[%s474 + $0x30] sm:$0xf]
        %v997 = vld [vmem:[%s474 + $0x34] sm:$0xf]
        %v998 = vld [vmem:[%s474 + $0x38] sm:$0xf]
        %v999 = vld [vmem:[%s474 + $0x3c] sm:$0xf]
        %v1000 = vunpack.c.l.bf16 %v984
        %v1001 = vunpack.c.l.bf16 %v985
        %v1002 = vunpack.c.l.bf16 %v986
        %v1003 = vunpack.c.l.bf16 %v987
        %v1004 = vunpack.c.l.bf16 %v988
        %v1005 = vunpack.c.l.bf16 %v989
        %v1006 = vunpack.c.l.bf16 %v990
        %v1007 = vunpack.c.l.bf16 %v991
        %v1008 = vunpack.c.l.bf16 %v992
        %v1009 = vunpack.c.l.bf16 %v993
        %v1010 = vunpack.c.l.bf16 %v994
        %v1011 = vunpack.c.l.bf16 %v995
        %v1012 = vunpack.c.l.bf16 %v996
        %v1013 = vunpack.c.l.bf16 %v997
        %v1014 = vunpack.c.l.bf16 %v998
        %v1015 = vunpack.c.l.bf16 %v999
        %v1017 = vrot.slane %v916, 1
        %v1018 = vrot.slane %v916, 2
        %v1019 = vrot.slane %v916, 3
        %v1020 = vrot.slane %v916, 4
        %v1021 = vrot.slane %v916, 5
        %v1022 = vrot.slane %v916, 6
        %v1023 = vrot.slane %v916, 7
        %v1024 = vperm.slane %v916, 0
        %v1025 = vperm.slane %v1017, 0
        %v1026 = vperm.slane %v1018, 0
        %v1027 = vperm.slane %v1019, 0
        %v1028 = vperm.slane %v1020, 0
        %v1029 = vperm.slane %v1021, 0
        %v1030 = vperm.slane %v1022, 0
        %v1031 = vperm.slane %v1023, 0
        %v1040 = vadd.f32 %v1000, %v1024
        %v1041 = vadd.f32 %v1001, %v1024
        %v1042 = vadd.f32 %v1002, %v1025
        %v1043 = vadd.f32 %v1003, %v1025
        %v1044 = vadd.f32 %v1004, %v1026
        %v1045 = vadd.f32 %v1005, %v1026
        %v1046 = vadd.f32 %v1006, %v1027
        %v1047 = vadd.f32 %v1007, %v1027
        %v1048 = vadd.f32 %v1008, %v1028
        %v1049 = vadd.f32 %v1009, %v1028
        %v1050 = vadd.f32 %v1010, %v1029
        %v1051 = vadd.f32 %v1011, %v1029
        %v1052 = vadd.f32 %v1012, %v1030
        %v1053 = vadd.f32 %v1013, %v1030
        %v1054 = vadd.f32 %v1014, %v1031
        %v1055 = vadd.f32 %v1015, %v1031
        %v1056 = vmax.f32 %v1040, 0.0
        %v1057 = vmax.f32 %v1041, 0.0
        %v1058 = vmax.f32 %v1042, 0.0
        %v1059 = vmax.f32 %v1043, 0.0
        %v1060 = vmax.f32 %v1044, 0.0
        %v1061 = vmax.f32 %v1045, 0.0
        %v1062 = vmax.f32 %v1046, 0.0
        %v1063 = vmax.f32 %v1047, 0.0
        %v1064 = vmax.f32 %v1048, 0.0
        %v1065 = vmax.f32 %v1049, 0.0
        %v1066 = vmax.f32 %v1050, 0.0
        %v1067 = vmax.f32 %v1051, 0.0
        %v1068 = vmax.f32 %v1052, 0.0
        %v1069 = vmax.f32 %v1053, 0.0
        %v1070 = vmax.f32 %v1054, 0.0
        %v1071 = vmax.f32 %v1055, 0.0
        %v1072 = vld [vmem:[%s7] sm:$0x1]
        %v1074 = vperm.slane %v1072, 0
        %v1076 = vmul.f32 %v1056, %v1074
        %v1077 = vmul.f32 %v1057, %v1074
        %v1078 = vmul.f32 %v1058, %v1074
        %v1079 = vmul.f32 %v1059, %v1074
        %v1080 = vmul.f32 %v1060, %v1074
        %v1081 = vmul.f32 %v1061, %v1074
        %v1082 = vmul.f32 %v1062, %v1074
        %v1083 = vmul.f32 %v1063, %v1074
        %v1084 = vmul.f32 %v1064, %v1074
        %v1085 = vmul.f32 %v1065, %v1074
        %v1086 = vmul.f32 %v1066, %v1074
        %v1087 = vmul.f32 %v1067, %v1074
        %v1088 = vmul.f32 %v1068, %v1074
        %v1089 = vmul.f32 %v1069, %v1074
        %v1090 = vmul.f32 %v1070, %v1074
        %v1091 = vmul.f32 %v1071, %v1074
        %1092 = vadd.xlane.f32.xlu0 %v1076
        %v1093 = vpop.xlane.xlu0 %1092
        %1094 = vadd.xlane.f32.xlu0 %v1077
        %v1095 = vpop.xlane.xlu0 %1094
        %1096 = vadd.xlane.f32.xlu0 %v1078
        %v1097 = vpop.xlane.xlu0 %1096
        %1098 = vadd.xlane.f32.xlu0 %v1079
        %v1099 = vpop.xlane.xlu0 %1098
        %1100 = vadd.xlane.f32.xlu0 %v1080
        %v1101 = vpop.xlane.xlu0 %1100
        %1102 = vadd.xlane.f32.xlu0 %v1081
        %v1103 = vpop.xlane.xlu0 %1102
        %1104 = vadd.xlane.f32.xlu0 %v1082
        %v1105 = vpop.xlane.xlu0 %1104
        %1106 = vadd.xlane.f32.xlu0 %v1083
        %v1107 = vpop.xlane.xlu0 %1106
        %1108 = vadd.xlane.f32.xlu0 %v1084
        %v1109 = vpop.xlane.xlu0 %1108
        %1110 = vadd.xlane.f32.xlu0 %v1085
        %v1111 = vpop.xlane.xlu0 %1110
        %1112 = vadd.xlane.f32.xlu0 %v1086
        %v1113 = vpop.xlane.xlu0 %1112
        %1114 = vadd.xlane.f32.xlu0 %v1087
        %v1115 = vpop.xlane.xlu0 %1114
        %1116 = vadd.xlane.f32.xlu0 %v1088
        %v1117 = vpop.xlane.xlu0 %1116
        %1118 = vadd.xlane.f32.xlu0 %v1089
        %v1119 = vpop.xlane.xlu0 %1118
        %1120 = vadd.xlane.f32.xlu0 %v1090
        %v1121 = vpop.xlane.xlu0 %1120
        %1122 = vadd.xlane.f32.xlu0 %v1091
        %v1123 = vpop.xlane.xlu0 %1122
        %v1140 = vlaneseq
        %v1141 = vand.u32 %v1140, 127
        %v1142 = vperm.slane %v1093, %v1141
        %v1143 = vadd.s32 %v1141, 4294967288
        %v1144 = vperm.slane %v1095, %v1143
        %vm1145 = vcmask 130112
        %v1146 = vsel %vm1145, %v1144, %v1142
        %v1147 = vperm.slane %v1097, %v1141
        %v1148 = vperm.slane %v1099, %v1143
        %v1149 = vsel %vm1145, %v1148, %v1147
        %v1150 = vperm.slane %v1101, %v1141
        %v1151 = vperm.slane %v1103, %v1143
        %v1152 = vsel %vm1145, %v1151, %v1150
        %v1153 = vperm.slane %v1105, %v1141
        %v1154 = vperm.slane %v1107, %v1143
        %v1155 = vsel %vm1145, %v1154, %v1153
        %v1156 = vperm.slane %v1109, %v1141
        %v1157 = vperm.slane %v1111, %v1143
        %v1158 = vsel %vm1145, %v1157, %v1156
        %v1159 = vperm.slane %v1113, %v1141
        %v1160 = vperm.slane %v1115, %v1143
        %v1161 = vsel %vm1145, %v1160, %v1159
        %v1162 = vperm.slane %v1117, %v1141
        %v1163 = vperm.slane %v1119, %v1143
        %v1164 = vsel %vm1145, %v1163, %v1162
        %v1165 = vperm.slane %v1121, %v1141
        %v1166 = vperm.slane %v1123, %v1143
        %v1167 = vsel %vm1145, %v1166, %v1165
        %vm1168 = vcmask 1041409
        %v1169 = vsel %vm1168, %v1149, %v1146
        %vm1170 = vcmask 1042434
        %v1171 = vsel %vm1170, %v1152, %v1169
        %vm1172 = vcmask 1043459
        %v1173 = vsel %vm1172, %v1155, %v1171
        %vm1174 = vcmask 1044484
        %v1175 = vsel %vm1174, %v1158, %v1173
        %vm1176 = vcmask 1045509
        %v1177 = vsel %vm1176, %v1161, %v1175
        %vm1178 = vcmask 1046534
        %v1179 = vsel %vm1178, %v1164, %v1177
        %vm1180 = vcmask 1047559
        %v1181 = vsel %vm1180, %v1167, %v1179
        %vm1183 = vcmask 130048
        %v1184 = vsel %vm1183, %v1181, -inf
        %1185 = vmax.xlane.f32.xlu0 %v1184
        %v1186 = vpop.xlane.xlu0 %1185
        %v1188 = vperm.slane %v1186, 0
        %v1189 = vperm.slane %v1186, 1
        %v1190 = vperm.slane %v1186, 2
        %v1191 = vperm.slane %v1186, 3
        %v1192 = vperm.slane %v1186, 4
        %v1193 = vperm.slane %v1186, 5
        %v1194 = vperm.slane %v1186, 6
        %v1195 = vperm.slane %v1186, 7
        %v1204 = vsub.f32 %v1093, %v1188
        %v1205 = vsub.f32 %v1095, %v1188
        %v1206 = vsub.f32 %v1097, %v1189
        %v1207 = vsub.f32 %v1099, %v1189
        %v1208 = vsub.f32 %v1101, %v1190
        %v1209 = vsub.f32 %v1103, %v1190
        %v1210 = vsub.f32 %v1105, %v1191
        %v1211 = vsub.f32 %v1107, %v1191
        %v1212 = vsub.f32 %v1109, %v1192
        %v1213 = vsub.f32 %v1111, %v1192
        %v1214 = vsub.f32 %v1113, %v1193
        %v1215 = vsub.f32 %v1115, %v1193
        %v1216 = vsub.f32 %v1117, %v1194
        %v1217 = vsub.f32 %v1119, %v1194
        %v1218 = vsub.f32 %v1121, %v1195
        %v1219 = vsub.f32 %v1123, %v1195
        %v1220 = vmul.f32 %v1204, 1.442695
        %v1221 = vpow.pop %v1220
        %v1222 = vmul.f32 %v1205, 1.442695
        %v1223 = vpow.pop %v1222
        %v1224 = vmul.f32 %v1206, 1.442695
        %v1225 = vpow.pop %v1224
        %v1226 = vmul.f32 %v1207, 1.442695
        %v1227 = vpow.pop %v1226
        %v1228 = vmul.f32 %v1208, 1.442695
        %v1229 = vpow.pop %v1228
        %v1230 = vmul.f32 %v1209, 1.442695
        %v1231 = vpow.pop %v1230
        %v1232 = vmul.f32 %v1210, 1.442695
        %v1233 = vpow.pop %v1232
        %v1234 = vmul.f32 %v1211, 1.442695
        %v1235 = vpow.pop %v1234
        %v1236 = vmul.f32 %v1212, 1.442695
        %v1237 = vpow.pop %v1236
        %v1238 = vmul.f32 %v1213, 1.442695
        %v1239 = vpow.pop %v1238
        %v1240 = vmul.f32 %v1214, 1.442695
        %v1241 = vpow.pop %v1240
        %v1242 = vmul.f32 %v1215, 1.442695
        %v1243 = vpow.pop %v1242
        %v1244 = vmul.f32 %v1216, 1.442695
        %v1245 = vpow.pop %v1244
        %v1246 = vmul.f32 %v1217, 1.442695
        %v1247 = vpow.pop %v1246
        %v1248 = vmul.f32 %v1218, 1.442695
        %v1249 = vpow.pop %v1248
        %v1250 = vmul.f32 %v1219, 1.442695
        %v1251 = vpow.pop %v1250
        %1268 = vset.pattern.permute.xlu0 0
        %1269 = vperm.xlu0 %1268, %v1221
        %v1270 = vpop.permute.xlu0 %1269
        %1271 = vset.pattern.permute.xlu0 0
        %1272 = vperm.xlu0 %1271, %v1223
        %v1273 = vpop.permute.xlu0 %1272
        %1274 = vset.pattern.permute.xlu0 0
        %1275 = vperm.xlu0 %1274, %v1225
        %v1276 = vpop.permute.xlu0 %1275
        %1277 = vset.pattern.permute.xlu0 0
        %1278 = vperm.xlu0 %1277, %v1227
        %v1279 = vpop.permute.xlu0 %1278
        %1280 = vset.pattern.permute.xlu0 0
        %1281 = vperm.xlu0 %1280, %v1229
        %v1282 = vpop.permute.xlu0 %1281
        %1283 = vset.pattern.permute.xlu0 0
        %1284 = vperm.xlu0 %1283, %v1231
        %v1285 = vpop.permute.xlu0 %1284
        %1286 = vset.pattern.permute.xlu0 0
        %1287 = vperm.xlu0 %1286, %v1233
        %v1288 = vpop.permute.xlu0 %1287
        %1289 = vset.pattern.permute.xlu0 0
        %1290 = vperm.xlu0 %1289, %v1235
        %v1291 = vpop.permute.xlu0 %1290
        %1292 = vset.pattern.permute.xlu0 0
        %1293 = vperm.xlu0 %1292, %v1237
        %v1294 = vpop.permute.xlu0 %1293
        %1295 = vset.pattern.permute.xlu0 0
        %1296 = vperm.xlu0 %1295, %v1239
        %v1297 = vpop.permute.xlu0 %1296
        %1298 = vset.pattern.permute.xlu0 0
        %1299 = vperm.xlu0 %1298, %v1241
        %v1300 = vpop.permute.xlu0 %1299
        %1301 = vset.pattern.permute.xlu0 0
        %1302 = vperm.xlu0 %1301, %v1243
        %v1303 = vpop.permute.xlu0 %1302
        %1304 = vset.pattern.permute.xlu0 0
        %1305 = vperm.xlu0 %1304, %v1245
        %v1306 = vpop.permute.xlu0 %1305
        %1307 = vset.pattern.permute.xlu0 0
        %1308 = vperm.xlu0 %1307, %v1247
        %v1309 = vpop.permute.xlu0 %1308
        %1310 = vset.pattern.permute.xlu0 0
        %1311 = vperm.xlu0 %1310, %v1249
        %v1312 = vpop.permute.xlu0 %1311
        %1313 = vset.pattern.permute.xlu0 0
        %1314 = vperm.xlu0 %1313, %v1251
        %v1315 = vpop.permute.xlu0 %1314
        %v1316 = vperm.slane %v1270, %v1141
        %v1317 = vperm.slane %v1273, %v1143
        %v1318 = vsel %vm1145, %v1317, %v1316
        %v1319 = vperm.slane %v1276, %v1141
        %v1320 = vperm.slane %v1279, %v1143
        %v1321 = vsel %vm1145, %v1320, %v1319
        %v1322 = vperm.slane %v1282, %v1141
        %v1323 = vperm.slane %v1285, %v1143
        %v1324 = vsel %vm1145, %v1323, %v1322
        %v1325 = vperm.slane %v1288, %v1141
        %v1326 = vperm.slane %v1291, %v1143
        %v1327 = vsel %vm1145, %v1326, %v1325
        %v1328 = vperm.slane %v1294, %v1141
        %v1329 = vperm.slane %v1297, %v1143
        %v1330 = vsel %vm1145, %v1329, %v1328
        %v1331 = vperm.slane %v1300, %v1141
        %v1332 = vperm.slane %v1303, %v1143
        %v1333 = vsel %vm1145, %v1332, %v1331
        %v1334 = vperm.slane %v1306, %v1141
        %v1335 = vperm.slane %v1309, %v1143
        %v1336 = vsel %vm1145, %v1335, %v1334
        %v1337 = vperm.slane %v1312, %v1141
        %v1338 = vperm.slane %v1315, %v1143
        %v1339 = vsel %vm1145, %v1338, %v1337
        %v1340 = vsel %vm1168, %v1321, %v1318
        %v1341 = vsel %vm1170, %v1324, %v1340
        %v1342 = vsel %vm1172, %v1327, %v1341
        %v1343 = vsel %vm1174, %v1330, %v1342
        %v1344 = vsel %vm1176, %v1333, %v1343
        %v1345 = vsel %vm1178, %v1336, %v1344
        %v1346 = vsel %vm1180, %v1339, %v1345
        %v1348 = vsel %vm1183, %v1346, 0.0
        %1349 = vadd.xlane.f32.xlu0 %v1348
        %v1350 = vpop.xlane.xlu0 %1349
        %v1351 = vrcp.pop %v1350
        %v1353 = vperm.slane %v1351, 0
        %v1354 = vperm.slane %v1351, 1
        %v1355 = vperm.slane %v1351, 2
        %v1356 = vperm.slane %v1351, 3
        %v1357 = vperm.slane %v1351, 4
        %v1358 = vperm.slane %v1351, 5
        %v1359 = vperm.slane %v1351, 6
        %v1360 = vperm.slane %v1351, 7
        %v1369 = vmul.f32 %v1221, %v1353
        %v1370 = vmul.f32 %v1223, %v1353
        %v1371 = vmul.f32 %v1225, %v1354
        %v1372 = vmul.f32 %v1227, %v1354
        %v1373 = vmul.f32 %v1229, %v1355
        %v1374 = vmul.f32 %v1231, %v1355
        %v1375 = vmul.f32 %v1233, %v1356
        %v1376 = vmul.f32 %v1235, %v1356
        %v1377 = vmul.f32 %v1237, %v1357
        %v1378 = vmul.f32 %v1239, %v1357
        %v1379 = vmul.f32 %v1241, %v1358
        %v1380 = vmul.f32 %v1243, %v1358
        %v1381 = vmul.f32 %v1245, %v1359
        %v1382 = vmul.f32 %v1247, %v1359
        %v1383 = vmul.f32 %v1249, %v1360
        %v1384 = vmul.f32 %v1251, %v1360
        %v1385 = vpack.c.bf16 %v1369, %v1369
        %v1386 = vpack.c.bf16 %v1370, %v1370
        %v1387 = vpack.c.bf16 %v1371, %v1371
        %v1388 = vpack.c.bf16 %v1372, %v1372
        %v1389 = vpack.c.bf16 %v1373, %v1373
        %v1390 = vpack.c.bf16 %v1374, %v1374
        %v1391 = vpack.c.bf16 %v1375, %v1375
        %v1392 = vpack.c.bf16 %v1376, %v1376
        %v1393 = vpack.c.bf16 %v1377, %v1377
        %v1394 = vpack.c.bf16 %v1378, %v1378
        %v1395 = vpack.c.bf16 %v1379, %v1379
        %v1396 = vpack.c.bf16 %v1380, %v1380
        %v1397 = vpack.c.bf16 %v1381, %v1381
        %v1398 = vpack.c.bf16 %v1382, %v1382
        %v1399 = vpack.c.bf16 %v1383, %v1383
        %v1400 = vpack.c.bf16 %v1384, %v1384
        %v1403 = vunpack.c.l.b16 %v1385
        %v1404 = vunpack.c.l.b16 %v1386
        %v1405 = vpack.c.b16 %v1404, %v1403
        %v1406 = vunpack.c.l.b16 %v1405
        %v1407 = vunpack.c.h.b16 %v1405
        %1408 = vset.pattern.permute.xlu0 0
        %1409 = vperm.xlu0 %1408, %v1406
        %v1410 = vpop.permute.xlu0 %1409
        %1411 = vset.pattern.permute.xlu0 0
        %1412 = vperm.xlu0 %1411, %v1407
        %v1413 = vpop.permute.xlu0 %1412
        %v1414 = vperm.slane %v1410, %v1141
        %v1415 = vperm.slane %v1413, %v1143
        %v1416 = vsel %vm1145, %v1415, %v1414
        %v1417 = vpack.c.b16 %v1416, %v1416
        %v1420 = vunpack.c.l.b16 %v588
        %v1421 = vunpack.c.l.b16 %v589
        %v1422 = vpack.c.b16 %v1421, %v1420
        %v1425 = vsel %vm1183, %v1417, 0
        %1427 = vmatpush.bf16.msra.mxu0 0
        %1428 = vmatpush.bf16.msra.mxu0 0
        %1429 = vmatpush.bf16.msra.mxu0 0
        %1430 = vmatpush.bf16.msra.mxu0 0
        %1431 = vmatpush.bf16.msra.mxu0 0
        %1432 = vmatpush.bf16.msra.mxu0 0
        %1433 = vmatpush.bf16.msra.mxu0 0
        %1434 = vmatpush.bf16.msra.mxu0 %v1422
        %1435 = vmatmul.bf16.gmra.mxu0 %v1425
        %v1436 = vpop.f32.mrf.mxu0
        %v1437 = vadd.f32 0.0, %v1436
        %v1438 = vpop.f32.mrf.mxu0
        %1439 = vdwg.mxu0
        %v1442 = vunpack.c.l.b16 %v1387
        %v1443 = vunpack.c.l.b16 %v1388
        %v1444 = vpack.c.b16 %v1443, %v1442
        %v1445 = vunpack.c.l.b16 %v1444
        %v1446 = vunpack.c.h.b16 %v1444
        %1447 = vset.pattern.permute.xlu0 0
        %1448 = vperm.xlu0 %1447, %v1445
        %v1449 = vpop.permute.xlu0 %1448
        %1450 = vset.pattern.permute.xlu0 0
        %1451 = vperm.xlu0 %1450, %v1446
        %v1452 = vpop.permute.xlu0 %1451
        %v1453 = vperm.slane %v1449, %v1141
        %v1454 = vperm.slane %v1452, %v1143
        %v1455 = vsel %vm1145, %v1454, %v1453
        %v1456 = vpack.c.b16 %v1455, %v1455
        %v1459 = vunpack.c.l.b16 %v590
        %v1460 = vunpack.c.l.b16 %v591
        %v1461 = vpack.c.b16 %v1460, %v1459
        %v1464 = vsel %vm1183, %v1456, 0
        %1466 = vmatpush.bf16.msra.mxu0 0
        %1467 = vmatpush.bf16.msra.mxu0 0
        %1468 = vmatpush.bf16.msra.mxu0 0
        %1469 = vmatpush.bf16.msra.mxu0 0
        %1470 = vmatpush.bf16.msra.mxu0 0
        %1471 = vmatpush.bf16.msra.mxu0 0
        %1472 = vmatpush.bf16.msra.mxu0 0
        %1473 = vmatpush.bf16.msra.mxu0 %v1461
        %1474 = vmatmul.bf16.gmra.mxu0 %v1464
        %v1475 = vpop.f32.mrf.mxu0
        %v1476 = vadd.f32 0.0, %v1475
        %v1477 = vpop.f32.mrf.mxu0
        %1478 = vdwg.mxu0
        %v1481 = vunpack.c.l.b16 %v1389
        %v1482 = vunpack.c.l.b16 %v1390
        %v1483 = vpack.c.b16 %v1482, %v1481
        %v1484 = vunpack.c.l.b16 %v1483
        %v1485 = vunpack.c.h.b16 %v1483
        %1486 = vset.pattern.permute.xlu0 0
        %1487 = vperm.xlu0 %1486, %v1484
        %v1488 = vpop.permute.xlu0 %1487
        %1489 = vset.pattern.permute.xlu0 0
        %1490 = vperm.xlu0 %1489, %v1485
        %v1491 = vpop.permute.xlu0 %1490
        %v1492 = vperm.slane %v1488, %v1141
        %v1493 = vperm.slane %v1491, %v1143
        %v1494 = vsel %vm1145, %v1493, %v1492
        %v1495 = vpack.c.b16 %v1494, %v1494
        %v1498 = vunpack.c.l.b16 %v592
        %v1499 = vunpack.c.l.b16 %v593
        %v1500 = vpack.c.b16 %v1499, %v1498
        %v1503 = vsel %vm1183, %v1495, 0
        %1505 = vmatpush.bf16.msra.mxu0 0
        %1506 = vmatpush.bf16.msra.mxu0 0
        %1507 = vmatpush.bf16.msra.mxu0 0
        %1508 = vmatpush.bf16.msra.mxu0 0
        %1509 = vmatpush.bf16.msra.mxu0 0
        %1510 = vmatpush.bf16.msra.mxu0 0
        %1511 = vmatpush.bf16.msra.mxu0 0
        %1512 = vmatpush.bf16.msra.mxu0 %v1500
        %1513 = vmatmul.bf16.gmra.mxu0 %v1503
        %v1514 = vpop.f32.mrf.mxu0
        %v1515 = vadd.f32 0.0, %v1514
        %v1516 = vpop.f32.mrf.mxu0
        %1517 = vdwg.mxu0
        %v1520 = vunpack.c.l.b16 %v1391
        %v1521 = vunpack.c.l.b16 %v1392
        %v1522 = vpack.c.b16 %v1521, %v1520
        %v1523 = vunpack.c.l.b16 %v1522
        %v1524 = vunpack.c.h.b16 %v1522
        %1525 = vset.pattern.permute.xlu0 0
        %1526 = vperm.xlu0 %1525, %v1523
        %v1527 = vpop.permute.xlu0 %1526
        %1528 = vset.pattern.permute.xlu0 0
        %1529 = vperm.xlu0 %1528, %v1524
        %v1530 = vpop.permute.xlu0 %1529
        %v1531 = vperm.slane %v1527, %v1141
        %v1532 = vperm.slane %v1530, %v1143
        %v1533 = vsel %vm1145, %v1532, %v1531
        %v1534 = vpack.c.b16 %v1533, %v1533
        %v1537 = vunpack.c.l.b16 %v594
        %v1538 = vunpack.c.l.b16 %v595
        %v1539 = vpack.c.b16 %v1538, %v1537
        %v1542 = vsel %vm1183, %v1534, 0
        %1544 = vmatpush.bf16.msra.mxu0 0
        %1545 = vmatpush.bf16.msra.mxu0 0
        %1546 = vmatpush.bf16.msra.mxu0 0
        %1547 = vmatpush.bf16.msra.mxu0 0
        %1548 = vmatpush.bf16.msra.mxu0 0
        %1549 = vmatpush.bf16.msra.mxu0 0
        %1550 = vmatpush.bf16.msra.mxu0 0
        %1551 = vmatpush.bf16.msra.mxu0 %v1539
        %1552 = vmatmul.bf16.gmra.mxu0 %v1542
        %v1553 = vpop.f32.mrf.mxu0
        %v1554 = vadd.f32 0.0, %v1553
        %v1555 = vpop.f32.mrf.mxu0
        %1556 = vdwg.mxu0
        %v1559 = vunpack.c.l.b16 %v1393
        %v1560 = vunpack.c.l.b16 %v1394
        %v1561 = vpack.c.b16 %v1560, %v1559
        %v1562 = vunpack.c.l.b16 %v1561
        %v1563 = vunpack.c.h.b16 %v1561
        %1564 = vset.pattern.permute.xlu0 0
        %1565 = vperm.xlu0 %1564, %v1562
        %v1566 = vpop.permute.xlu0 %1565
        %1567 = vset.pattern.permute.xlu0 0
        %1568 = vperm.xlu0 %1567, %v1563
        %v1569 = vpop.permute.xlu0 %1568
        %v1570 = vperm.slane %v1566, %v1141
        %v1571 = vperm.slane %v1569, %v1143
        %v1572 = vsel %vm1145, %v1571, %v1570
        %v1573 = vpack.c.b16 %v1572, %v1572
        %v1576 = vunpack.c.l.b16 %v596
        %v1577 = vunpack.c.l.b16 %v597
        %v1578 = vpack.c.b16 %v1577, %v1576
        %v1581 = vsel %vm1183, %v1573, 0
        %1583 = vmatpush.bf16.msra.mxu0 0
        %1584 = vmatpush.bf16.msra.mxu0 0
        %1585 = vmatpush.bf16.msra.mxu0 0
        %1586 = vmatpush.bf16.msra.mxu0 0
        %1587 = vmatpush.bf16.msra.mxu0 0
        %1588 = vmatpush.bf16.msra.mxu0 0
        %1589 = vmatpush.bf16.msra.mxu0 0
        %1590 = vmatpush.bf16.msra.mxu0 %v1578
        %1591 = vmatmul.bf16.gmra.mxu0 %v1581
        %v1592 = vpop.f32.mrf.mxu0
        %v1593 = vadd.f32 0.0, %v1592
        %v1594 = vpop.f32.mrf.mxu0
        %1595 = vdwg.mxu0
        %v1598 = vunpack.c.l.b16 %v1395
        %v1599 = vunpack.c.l.b16 %v1396
        %v1600 = vpack.c.b16 %v1599, %v1598
        %v1601 = vunpack.c.l.b16 %v1600
        %v1602 = vunpack.c.h.b16 %v1600
        %1603 = vset.pattern.permute.xlu0 0
        %1604 = vperm.xlu0 %1603, %v1601
        %v1605 = vpop.permute.xlu0 %1604
        %1606 = vset.pattern.permute.xlu0 0
        %1607 = vperm.xlu0 %1606, %v1602
        %v1608 = vpop.permute.xlu0 %1607
        %v1609 = vperm.slane %v1605, %v1141
        %v1610 = vperm.slane %v1608, %v1143
        %v1611 = vsel %vm1145, %v1610, %v1609
        %v1612 = vpack.c.b16 %v1611, %v1611
        %v1615 = vunpack.c.l.b16 %v598
        %v1616 = vunpack.c.l.b16 %v599
        %v1617 = vpack.c.b16 %v1616, %v1615
        %v1620 = vsel %vm1183, %v1612, 0
        %1622 = vmatpush.bf16.msra.mxu0 0
        %1623 = vmatpush.bf16.msra.mxu0 0
        %1624 = vmatpush.bf16.msra.mxu0 0
        %1625 = vmatpush.bf16.msra.mxu0 0
        %1626 = vmatpush.bf16.msra.mxu0 0
        %1627 = vmatpush.bf16.msra.mxu0 0
        %1628 = vmatpush.bf16.msra.mxu0 0
        %1629 = vmatpush.bf16.msra.mxu0 %v1617
        %1630 = vmatmul.bf16.gmra.mxu0 %v1620
        %v1631 = vpop.f32.mrf.mxu0
        %v1632 = vadd.f32 0.0, %v1631
        %v1633 = vpop.f32.mrf.mxu0
        %1634 = vdwg.mxu0
        %v1637 = vunpack.c.l.b16 %v1397
        %v1638 = vunpack.c.l.b16 %v1398
        %v1639 = vpack.c.b16 %v1638, %v1637
        %v1640 = vunpack.c.l.b16 %v1639
        %v1641 = vunpack.c.h.b16 %v1639
        %1642 = vset.pattern.permute.xlu0 0
        %1643 = vperm.xlu0 %1642, %v1640
        %v1644 = vpop.permute.xlu0 %1643
        %1645 = vset.pattern.permute.xlu0 0
        %1646 = vperm.xlu0 %1645, %v1641
        %v1647 = vpop.permute.xlu0 %1646
        %v1648 = vperm.slane %v1644, %v1141
        %v1649 = vperm.slane %v1647, %v1143
        %v1650 = vsel %vm1145, %v1649, %v1648
        %v1651 = vpack.c.b16 %v1650, %v1650
        %v1654 = vunpack.c.l.b16 %v600
        %v1655 = vunpack.c.l.b16 %v601
        %v1656 = vpack.c.b16 %v1655, %v1654
        %v1659 = vsel %vm1183, %v1651, 0
        %1661 = vmatpush.bf16.msra.mxu0 0
        %1662 = vmatpush.bf16.msra.mxu0 0
        %1663 = vmatpush.bf16.msra.mxu0 0
        %1664 = vmatpush.bf16.msra.mxu0 0
        %1665 = vmatpush.bf16.msra.mxu0 0
        %1666 = vmatpush.bf16.msra.mxu0 0
        %1667 = vmatpush.bf16.msra.mxu0 0
        %1668 = vmatpush.bf16.msra.mxu0 %v1656
        %1669 = vmatmul.bf16.gmra.mxu0 %v1659
        %v1670 = vpop.f32.mrf.mxu0
        %v1671 = vadd.f32 0.0, %v1670
        %v1672 = vpop.f32.mrf.mxu0
        %1673 = vdwg.mxu0
        %v1676 = vunpack.c.l.b16 %v1399
        %v1677 = vunpack.c.l.b16 %v1400
        %v1678 = vpack.c.b16 %v1677, %v1676
        %v1679 = vunpack.c.l.b16 %v1678
        %v1680 = vunpack.c.h.b16 %v1678
        %1681 = vset.pattern.permute.xlu0 0
        %1682 = vperm.xlu0 %1681, %v1679
        %v1683 = vpop.permute.xlu0 %1682
        %1684 = vset.pattern.permute.xlu0 0
        %1685 = vperm.xlu0 %1684, %v1680
        %v1686 = vpop.permute.xlu0 %1685
        %v1687 = vperm.slane %v1683, %v1141
        %v1688 = vperm.slane %v1686, %v1143
        %v1689 = vsel %vm1145, %v1688, %v1687
        %v1690 = vpack.c.b16 %v1689, %v1689
        %v1693 = vunpack.c.l.b16 %v602
        %v1694 = vunpack.c.l.b16 %v603
        %v1695 = vpack.c.b16 %v1694, %v1693
        %v1698 = vsel %vm1183, %v1690, 0
        %1700 = vmatpush.bf16.msra.mxu0 0
        %1701 = vmatpush.bf16.msra.mxu0 0
        %1702 = vmatpush.bf16.msra.mxu0 0
        %1703 = vmatpush.bf16.msra.mxu0 0
        %1704 = vmatpush.bf16.msra.mxu0 0
        %1705 = vmatpush.bf16.msra.mxu0 0
        %1706 = vmatpush.bf16.msra.mxu0 0
        %1707 = vmatpush.bf16.msra.mxu0 %v1695
        %1708 = vmatmul.bf16.gmra.mxu0 %v1698
        %v1709 = vpop.f32.mrf.mxu0
        %v1710 = vadd.f32 0.0, %v1709
        %v1711 = vpop.f32.mrf.mxu0
        %1712 = vdwg.mxu0
        %v1713 = vxor.u32 %v929, 2147483648
        %v1714 = vmul.f32 %v1713, 1.442695
        %v1715 = vpow.pop %v1714
        %v1716 = vadd.f32 %v1715, 1.0
        %v1717 = vrcp.pop %v1716
        %v1718 = vmul.f32 %v1716, %v1717
        %v1719 = vsub.f32 1.0, %v1718
        %v1720 = vmul.f32 %v1717, %v1719
        %v1721 = vadd.f32 %v1717, %v1720
        %vm1722 = vweird.f32 %v1716
        %vm1723 = vweird.f32 %v1717
        %vm1724 = vmor %vm1722, %vm1723
        %v1725 = vsel %vm1724, %v1717, %v1721
        %v1726 = vand.u32 2147483647, %v1716
        %vm1727 = vcmp.eq.f32.partialorder %v1726, 8.507059e+37
        %v1728 = vand.u32 %v1716, 2147483648
        %v1729 = vor.u32 1.1754944e-38, %v1728
        %v1730 = vsel %vm1727, %v1729, %v1725
        %v1731 = vmul.f32 1.0, %v1730
        %v1740 = vrot.slane %v1476, 7
        %v1741 = vsel %vm1168, %v1740, %v1437
        %v1742 = vrot.slane %v1515, 6
        %v1743 = vsel %vm1170, %v1742, %v1741
        %v1744 = vrot.slane %v1554, 5
        %v1745 = vsel %vm1172, %v1744, %v1743
        %v1746 = vrot.slane %v1593, 4
        %v1747 = vsel %vm1174, %v1746, %v1745
        %v1748 = vrot.slane %v1632, 3
        %v1749 = vsel %vm1176, %v1748, %v1747
        %v1750 = vrot.slane %v1671, 2
        %v1751 = vsel %vm1178, %v1750, %v1749
        %v1752 = vrot.slane %v1710, 1
        %v1753 = vsel %vm1180, %v1752, %v1751
        %v1755 = vmul.f32 %v1731, %v1753
        %v1756 = vld [vmem:[%s504] sm:$0xff]
        %v1757 = vld [vmem:[%s504 + $0x8] sm:$0xff]
        %v1758 = vunpack.c.l.bf16 %v1756
        %v1759 = vunpack.c.h.bf16 %v1756
        %v1760 = vunpack.c.l.bf16 %v1757
        %v1761 = vunpack.c.h.bf16 %v1757
        %v1762 = vpack.c.bf16 %v1755, %v1755
        %v1763 = vld [vmem:[#allocation16] sm:$0xff]
        %v1764 = vld [vmem:[#allocation16 + $0x8] sm:$0xff]
        %v1765 = vld [vmem:[#allocation16 + $0x10] sm:$0xff]
        %v1766 = vld [vmem:[#allocation16 + $0x18] sm:$0xff]
        %v1767 = vld [vmem:[#allocation16 + $0x20] sm:$0xff]
        %v1768 = vld [vmem:[#allocation16 + $0x28] sm:$0xff]
        %v1769 = vld [vmem:[#allocation16 + $0x30] sm:$0xff]
        %v1770 = vld [vmem:[#allocation16 + $0x38] sm:$0xff]
        %v1771 = vld [vmem:[#allocation16 + $0x40] sm:$0xff]
        %v1772 = vld [vmem:[#allocation16 + $0x48] sm:$0xff]
        %v1773 = vld [vmem:[#allocation16 + $0x50] sm:$0xff]
        %v1774 = vld [vmem:[#allocation16 + $0x58] sm:$0xff]
        %v1775 = vld [vmem:[#allocation16 + $0x60] sm:$0xff]
        %v1776 = vld [vmem:[#allocation16 + $0x68] sm:$0xff]
        %v1777 = vld [vmem:[#allocation16 + $0x70] sm:$0xff]
        %v1778 = vld [vmem:[#allocation16 + $0x78] sm:$0xff]
        %v1779 = vld [vmem:[#allocation16 + $0x80] sm:$0xff]
        %v1780 = vld [vmem:[#allocation16 + $0x88] sm:$0xff]
        %v1781 = vld [vmem:[#allocation16 + $0x90] sm:$0xff]
        %v1782 = vld [vmem:[#allocation16 + $0x98] sm:$0xff]
        %v1783 = vld [vmem:[#allocation16 + $0xa0] sm:$0xff]
        %v1784 = vld [vmem:[#allocation16 + $0xa8] sm:$0xff]
        %v1785 = vld [vmem:[#allocation16 + $0xb0] sm:$0xff]
        %v1786 = vld [vmem:[#allocation16 + $0xb8] sm:$0xff]
        %v1787 = vld [vmem:[#allocation16 + $0xc0] sm:$0xff]
        %v1788 = vld [vmem:[#allocation16 + $0xc8] sm:$0xff]
        %v1789 = vld [vmem:[#allocation16 + $0xd0] sm:$0xff]
        %v1790 = vld [vmem:[#allocation16 + $0xd8] sm:$0xff]
        %v1791 = vld [vmem:[#allocation16 + $0xe0] sm:$0xff]
        %v1792 = vld [vmem:[#allocation16 + $0xe8] sm:$0xff]
        %v1793 = vld [vmem:[#allocation16 + $0xf0] sm:$0xff]
        %v1794 = vld [vmem:[#allocation16 + $0xf8] sm:$0xff]
        %v1827 = vunpack.c.l.b16 %v1763
        %v1828 = vunpack.c.h.b16 %v1763
        %v1829 = vunpack.c.l.b16 %v1764
        %v1830 = vunpack.c.h.b16 %v1764
        %v1831 = vunpack.c.l.b16 %v1765
        %v1832 = vunpack.c.h.b16 %v1765
        %v1833 = vunpack.c.l.b16 %v1766
        %v1834 = vunpack.c.h.b16 %v1766
        %v1835 = vunpack.c.l.b16 %v1767
        %v1836 = vunpack.c.h.b16 %v1767
        %v1837 = vunpack.c.l.b16 %v1768
        %v1838 = vunpack.c.h.b16 %v1768
        %v1839 = vunpack.c.l.b16 %v1769
        %v1840 = vunpack.c.h.b16 %v1769
        %v1841 = vunpack.c.l.b16 %v1770
        %v1842 = vunpack.c.h.b16 %v1770
        %v1843 = vunpack.c.l.b16 %v1771
        %v1844 = vunpack.c.h.b16 %v1771
        %v1845 = vunpack.c.l.b16 %v1772
        %v1846 = vunpack.c.h.b16 %v1772
        %v1847 = vunpack.c.l.b16 %v1773
        %v1848 = vunpack.c.h.b16 %v1773
        %v1849 = vunpack.c.l.b16 %v1774
        %v1850 = vunpack.c.h.b16 %v1774
        %v1851 = vunpack.c.l.b16 %v1775
        %v1852 = vunpack.c.h.b16 %v1775
        %v1853 = vunpack.c.l.b16 %v1776
        %v1854 = vunpack.c.h.b16 %v1776
        %v1855 = vunpack.c.l.b16 %v1777
        %v1856 = vunpack.c.h.b16 %v1777
        %v1857 = vunpack.c.l.b16 %v1778
        %v1858 = vunpack.c.h.b16 %v1778
        %v1859 = vunpack.c.l.b16 %v1779
        %v1860 = vunpack.c.h.b16 %v1779
        %v1861 = vunpack.c.l.b16 %v1780
        %v1862 = vunpack.c.h.b16 %v1780
        %v1863 = vunpack.c.l.b16 %v1781
        %v1864 = vunpack.c.h.b16 %v1781
        %v1865 = vunpack.c.l.b16 %v1782
        %v1866 = vunpack.c.h.b16 %v1782
        %v1867 = vunpack.c.l.b16 %v1783
        %v1868 = vunpack.c.h.b16 %v1783
        %v1869 = vunpack.c.l.b16 %v1784
        %v1870 = vunpack.c.h.b16 %v1784
        %v1871 = vunpack.c.l.b16 %v1785
        %v1872 = vunpack.c.h.b16 %v1785
        %v1873 = vunpack.c.l.b16 %v1786
        %v1874 = vunpack.c.h.b16 %v1786
        %v1875 = vunpack.c.l.b16 %v1787
        %v1876 = vunpack.c.h.b16 %v1787
        %v1877 = vunpack.c.l.b16 %v1788
        %v1878 = vunpack.c.h.b16 %v1788
        %v1879 = vunpack.c.l.b16 %v1789
        %v1880 = vunpack.c.h.b16 %v1789
        %v1881 = vunpack.c.l.b16 %v1790
        %v1882 = vunpack.c.h.b16 %v1790
        %v1883 = vunpack.c.l.b16 %v1791
        %v1884 = vunpack.c.h.b16 %v1791
        %v1885 = vunpack.c.l.b16 %v1792
        %v1886 = vunpack.c.h.b16 %v1792
        %v1887 = vunpack.c.l.b16 %v1793
        %v1888 = vunpack.c.h.b16 %v1793
        %v1889 = vunpack.c.l.b16 %v1794
        %v1890 = vunpack.c.h.b16 %v1794
        %v1891 = vpack.c.b16 %v1831, %v1827
        %v1892 = vpack.c.b16 %v1832, %v1828
        %v1893 = vpack.c.b16 %v1833, %v1829
        %v1894 = vpack.c.b16 %v1834, %v1830
        %v1895 = vpack.c.b16 %v1839, %v1835
        %v1896 = vpack.c.b16 %v1840, %v1836
        %v1897 = vpack.c.b16 %v1841, %v1837
        %v1898 = vpack.c.b16 %v1842, %v1838
        %v1899 = vpack.c.b16 %v1847, %v1843
        %v1900 = vpack.c.b16 %v1848, %v1844
        %v1901 = vpack.c.b16 %v1849, %v1845
        %v1902 = vpack.c.b16 %v1850, %v1846
        %v1903 = vpack.c.b16 %v1855, %v1851
        %v1904 = vpack.c.b16 %v1856, %v1852
        %v1905 = vpack.c.b16 %v1857, %v1853
        %v1906 = vpack.c.b16 %v1858, %v1854
        %v1907 = vpack.c.b16 %v1863, %v1859
        %v1908 = vpack.c.b16 %v1864, %v1860
        %v1909 = vpack.c.b16 %v1865, %v1861
        %v1910 = vpack.c.b16 %v1866, %v1862
        %v1911 = vpack.c.b16 %v1871, %v1867
        %v1912 = vpack.c.b16 %v1872, %v1868
        %v1913 = vpack.c.b16 %v1873, %v1869
        %v1914 = vpack.c.b16 %v1874, %v1870
        %v1915 = vpack.c.b16 %v1879, %v1875
        %v1916 = vpack.c.b16 %v1880, %v1876
        %v1917 = vpack.c.b16 %v1881, %v1877
        %v1918 = vpack.c.b16 %v1882, %v1878
        %v1919 = vpack.c.b16 %v1887, %v1883
        %v1920 = vpack.c.b16 %v1888, %v1884
        %v1921 = vpack.c.b16 %v1889, %v1885
        %v1922 = vpack.c.b16 %v1890, %v1886
        %1955 = vmatpush.bf16.msra.mxu0 %v1919
        %1956 = vmatpush.bf16.msra.mxu0 %v1915
        %1957 = vmatpush.bf16.msra.mxu0 %v1911
        %1958 = vmatpush.bf16.msra.mxu0 %v1907
        %1959 = vmatpush.bf16.msra.mxu0 %v1903
        %1960 = vmatpush.bf16.msra.mxu0 %v1899
        %1961 = vmatpush.bf16.msra.mxu0 %v1895
        %1962 = vmatpush.bf16.msra.mxu0 %v1891
        %1963 = vmatmul.bf16.gmra.mxu0 %v1762
        %v1964 = vpop.f32.mrf.mxu0
        %v1965 = vadd.f32 0.0, %v1964
        %v1966 = vpop.f32.mrf.mxu0
        %1967 = vdwg.mxu0
        %1968 = vmatpush.bf16.msra.mxu0 %v1920
        %1969 = vmatpush.bf16.msra.mxu0 %v1916
        %1970 = vmatpush.bf16.msra.mxu0 %v1912
        %1971 = vmatpush.bf16.msra.mxu0 %v1908
        %1972 = vmatpush.bf16.msra.mxu0 %v1904
        %1973 = vmatpush.bf16.msra.mxu0 %v1900
        %1974 = vmatpush.bf16.msra.mxu0 %v1896
        %1975 = vmatpush.bf16.msra.mxu0 %v1892
        %1976 = vmatmul.bf16.gmra.mxu0 %v1762
        %v1977 = vpop.f32.mrf.mxu0
        %v1978 = vadd.f32 0.0, %v1977
        %v1979 = vpop.f32.mrf.mxu0
        %1980 = vdwg.mxu0
        %1981 = vmatpush.bf16.msra.mxu0 %v1921
        %1982 = vmatpush.bf16.msra.mxu0 %v1917
        %1983 = vmatpush.bf16.msra.mxu0 %v1913
        %1984 = vmatpush.bf16.msra.mxu0 %v1909
        %1985 = vmatpush.bf16.msra.mxu0 %v1905
        %1986 = vmatpush.bf16.msra.mxu0 %v1901
        %1987 = vmatpush.bf16.msra.mxu0 %v1897
        %1988 = vmatpush.bf16.msra.mxu0 %v1893
        %1989 = vmatmul.bf16.gmra.mxu0 %v1762
        %v1990 = vpop.f32.mrf.mxu0
        %v1991 = vadd.f32 0.0, %v1990
        %v1992 = vpop.f32.mrf.mxu0
        %1993 = vdwg.mxu0
        %1994 = vmatpush.bf16.msra.mxu0 %v1922
        %1995 = vmatpush.bf16.msra.mxu0 %v1918
        %1996 = vmatpush.bf16.msra.mxu0 %v1914
        %1997 = vmatpush.bf16.msra.mxu0 %v1910
        %1998 = vmatpush.bf16.msra.mxu0 %v1906
        %1999 = vmatpush.bf16.msra.mxu0 %v1902
        %2000 = vmatpush.bf16.msra.mxu0 %v1898
        %2001 = vmatpush.bf16.msra.mxu0 %v1894
        %2002 = vmatmul.bf16.gmra.mxu0 %v1762
        %v2003 = vpop.f32.mrf.mxu0
        %v2004 = vadd.f32 0.0, %v2003
        %v2005 = vpop.f32.mrf.mxu0
        %2006 = vdwg.mxu0
        %v2007 = vadd.f32 %v1758, %v1965
        %v2008 = vadd.f32 %v1759, %v1978
        %v2009 = vadd.f32 %v1760, %v1991
        %v2010 = vadd.f32 %v1761, %v2004
        %v2011 = vadd.f32 %v2007, %v942
        %v2012 = vadd.f32 %v2008, %v955
        %v2013 = vadd.f32 %v2009, %v968
        %v2014 = vadd.f32 %v2010, %v981
        %v2015 = vxor.u32 %v2011, 2147483648
        %v2016 = vmul.f32 %v2015, 1.442695
        %v2017 = vpow.pop %v2016
        %v2018 = vadd.f32 %v2017, 1.0
        %v2019 = vrcp.pop %v2018
        %v2020 = vmul.f32 %v2018, %v2019
        %v2021 = vsub.f32 1.0, %v2020
        %v2022 = vmul.f32 %v2019, %v2021
        %v2023 = vadd.f32 %v2019, %v2022
        %vm2024 = vweird.f32 %v2018
        %vm2025 = vweird.f32 %v2019
        %vm2026 = vmor %vm2024, %vm2025
        %v2027 = vsel %vm2026, %v2019, %v2023
        %v2028 = vand.u32 2147483647, %v2018
        %vm2029 = vcmp.eq.f32.partialorder %v2028, 8.507059e+37
        %v2030 = vand.u32 %v2018, 2147483648
        %v2031 = vor.u32 1.1754944e-38, %v2030
        %v2032 = vsel %vm2029, %v2031, %v2027
        %v2033 = vmul.f32 1.0, %v2032
        %v2034 = vxor.u32 %v2012, 2147483648
        %v2035 = vmul.f32 %v2034, 1.442695
        %v2036 = vpow.pop %v2035
        %v2037 = vadd.f32 %v2036, 1.0
        %v2038 = vrcp.pop %v2037
        %v2039 = vmul.f32 %v2037, %v2038
        %v2040 = vsub.f32 1.0, %v2039
        %v2041 = vmul.f32 %v2038, %v2040
        %v2042 = vadd.f32 %v2038, %v2041
        %vm2043 = vweird.f32 %v2037
        %vm2044 = vweird.f32 %v2038
        %vm2045 = vmor %vm2043, %vm2044
        %v2046 = vsel %vm2045, %v2038, %v2042
        %v2047 = vand.u32 2147483647, %v2037
        %vm2048 = vcmp.eq.f32.partialorder %v2047, 8.507059e+37
        %v2049 = vand.u32 %v2037, 2147483648
        %v2050 = vor.u32 1.1754944e-38, %v2049
        %v2051 = vsel %vm2048, %v2050, %v2046
        %v2052 = vmul.f32 1.0, %v2051
        %v2053 = vtanh.pop %v2013
        %v2054 = vxor.u32 %v2014, 2147483648
        %v2055 = vmul.f32 %v2054, 1.442695
        %v2056 = vpow.pop %v2055
        %v2057 = vadd.f32 %v2056, 1.0
        %v2058 = vrcp.pop %v2057
        %v2059 = vmul.f32 %v2057, %v2058
        %v2060 = vsub.f32 1.0, %v2059
        %v2061 = vmul.f32 %v2058, %v2060
        %v2062 = vadd.f32 %v2058, %v2061
        %vm2063 = vweird.f32 %v2057
        %vm2064 = vweird.f32 %v2058
        %vm2065 = vmor %vm2063, %vm2064
        %v2066 = vsel %vm2065, %v2058, %v2062
        %v2067 = vand.u32 2147483647, %v2057
        %vm2068 = vcmp.eq.f32.partialorder %v2067, 8.507059e+37
        %v2069 = vand.u32 %v2057, 2147483648
        %v2070 = vor.u32 1.1754944e-38, %v2069
        %v2071 = vsel %vm2068, %v2070, %v2066
        %v2072 = vmul.f32 1.0, %v2071
        %v2073 = vmul.f32 %v2052, %v587
        %v2074 = vmul.f32 %v2033, %v2053
        %v2075 = vadd.f32 %v2073, %v2074
        %v2076 = vtanh.pop %v2075
        %v2077 = vmul.f32 %v2072, %v2076
        %v2078 = vpack.c.bf16 %v2077, %v2077
        %2079 = vst [vmem:[#allocation3] sm:$0xff] %v2075
        %2080 = vst [vmem:[#allocation2] sm:$0xf] %v2078
        %2081 = vst [vmem:[%s574] sm:$0xf] %v2078
        %s2082 = sand.u32 %s272, 1
        %s2083 = scalar_lea.sflag [#allocation6], %s2082
        %s2084 = sand.u32 %s272, 1
        %s2085 = smul.addr %s2084, 4
        %s2086 = scalar_lea.vmem [#allocation18], %s2085
        // Predicated region
        $region93: #{tpu_custom_call.1} parent=55 // pred_check
          %p2087 = pneg %p282
        $region94: #{tpu_custom_call.1} parent=55 // pred_check_branch
          %2089 = sbr.rel (%p2087) target = $region96
        $region95: #{tpu_custom_call.1} parent=55 // pred_region
          %2091 = vsyncadd %s2083, 0
          %s2092 = smul.addr %s39, 2
          %s2093 = sadd.s32 %s38, %s2092
          %s2094 = smul.addr %s2093, 4
          %s2095 = scalar_lea.hbm %s9, %s2094
          %s2097 = sshll.u32 %s2086, 4
          %s2098 = int_to_ptr.vmem [resolvable:$true] %s2097
          %s2099 = sshll.u32 %s2095, 4
          %s2100 = int_to_ptr.hbm [resolvable:$true] %s2099
          %2102 = dma.vmem_to_hbm [thread:$0]  %s2098, 64, %s2100, %s2083
        $region96: #{tpu_custom_call.1} parent=55 // pred_fallthru
          _
      $region56: #{tpu_custom_call.1} parent=5 // pred_fallthru
        _
      %p2103 = scmp.le.s32.totalorder 2, %s29
      // Predicated region
      $region97: #{tpu_custom_call.1} parent=5 // pred_check
        %p2104 = pneg %p2103
      $region98: #{tpu_custom_call.1} parent=5 // pred_check_branch
        %2106 = sbr.rel (%p2104) target = $region100
      $region99: #{tpu_custom_call.1} parent=5 // pred_region
        %s2107 = ssub.s32 %s29, 2
        // Predicated region
        $region101: #{tpu_custom_call.1} parent=99 // pred_check
          %p2108 = pneg %p288
        $region102: #{tpu_custom_call.1} parent=99 // pred_check_branch
          %2110 = sbr.rel (%p2108) target = $region104
        $region103: #{tpu_custom_call.1} parent=99 // pred_region
          %s2111 = sand.u32 %s273, 1
          %s2112 = scalar_lea.sflag [#allocation6], %s2111
          %s2113 = sand.u32 %s273, 1
          %s2114 = smul.addr %s2113, 4
          %s2115 = scalar_lea.vmem [#allocation18], %s2114
          %2117 = dma.done %s2112, 64
        $region104: #{tpu_custom_call.1} parent=99 // pred_fallthru
          _
      $region100: #{tpu_custom_call.1} parent=5 // pred_fallthru
        _
    $region6: #{tpu_custom_call.1} parent=1 // loop_footer
      %s33 = sadd.s32 1, %s29
    $region7: #{tpu_custom_call.1} parent=1 // loop_footer_branch
      %28 = sbr.rel target = $region3
    $region8: #{tpu_custom_call.1} parent=1 // loop_exit
      _
    %2118 = vsyncpa [#allocation5], 1
    %s2119 = scalar_lea.sflag [#allocation5], 1
    %2120 = vsyncpa %s2119, 1
    %2121 = vsyncpa [#allocation8], 1
    %s2122 = scalar_lea.sflag [#allocation8], 1
    %2123 = vsyncpa %s2122, 1
    %2124 = vsyncpa [#allocation11], 1
    %s2125 = scalar_lea.sflag [#allocation11], 1
    %2126 = vsyncpa %s2125, 1
    %2127 = vsyncpa [#allocation14], 1
    %2128 = vsyncpa [#allocation17], 1
    %2129 = vsyncpa [#allocation6], 1
    %s2130 = scalar_lea.sflag [#allocation6], 1
    %2131 = vsyncpa %s2130, 1

</llo_original>
